<compile_context>
chip_gen: v5e
topology: v5e:2x2
jax: 0.10.0
libtpu: 0.0.40
codegen_flags: <defaults>
</compile_context>

<pallas_src>
import jax
import jax.numpy as jnp
from jax.experimental import pallas as pl
from jax.experimental.pallas import tpu as pltpu


# --------------------------------------------------------------------------
# VMEM budgeting (generation aware: v5e/v6e 128 MiB, v7x 64 MiB physical)
# --------------------------------------------------------------------------
def _tpu_vmem_limit_bytes():
    try:
        info = pltpu.get_tpu_info()
        for name in ("vmem_capacity_bytes", "vmem_size_bytes", "vmem_bytes"):
            cap = getattr(info, name, None)
            if cap:
                return int(min(int(cap) * 3 // 4, 96 * 1024 * 1024))
    except Exception:
        pass
    return 48 * 1024 * 1024          # conservative fallback (fits v7x)


_VMEM_LIMIT_BYTES = _tpu_vmem_limit_bytes()
_TILE_VMEM_BUDGET = _VMEM_LIMIT_BYTES // 2
_TM_MAX = 2048                       # target rows per MXU tile (M dimension)


def _pick_row_tile(hout, wout, wp, k_eff, c1, tc2):
    """Largest row tile TR dividing Hout that fits the VMEM budget."""
    best = None
    for tr in range(1, hout + 1):
        if hout % tr:
            continue
        tm = tr * wout
        if tm > _TM_MAX and tr != 1:
            continue
        # (8,128) rule on the flattened output block: TM multiple of 8 or full.
        if (tm % 8) and tr != hout:
            continue
        est = (2 * ((tr + k_eff - 1) * wp * c1 * 2        # input tile (bf16, x2 buf)
                    + k_eff * k_eff * c1 * tc2 * 2        # weight tile (bf16, x2 buf)
                    + tm * tc2 * 2                        # output tile (bf16, x2 buf)
                    + 2 * tc2 * 4)                        # scale / bias
               + tm * tc2 * 4)                            # f32 accumulator scratch
        if est > _TILE_VMEM_BUDGET:
            continue
        if best is None or tr > best:
            best = tr
    return best if best is not None else hout


# --------------------------------------------------------------------------
# Fused Conv + BN + (residual) + LeakyReLU kernel
# --------------------------------------------------------------------------
def _make_conv_kernel(k_eff, tr, wout, act, neg_slope, with_residual):
    tm = tr * wout

    def _body(x_ref, w_ref, scale_ref, bias_ref, res_ref, o_ref, acc_ref):
        # x_ref:   (1, 1, TR+K-1, Wp, C1)   bf16 padded row tile (with halo)
        # w_ref:   (K*K, C1, TC2)           bf16 conv weights (tap-major)
        # scale_ref, bias_ref: (1, TC2)     f32 folded BatchNorm
        # res_ref: (1, TM, TC2)             optional bf16 residual
        # o_ref:   (1, TM, TC2)             output tile
        # acc_ref: (TM, TC2)                f32 VMEM accumulator
        c1 = x_ref.shape[-1]
        for t in range(k_eff * k_eff):
            kh, kw = divmod(t, k_eff)
            patch = x_ref[0, 0, pl.ds(kh, tr), pl.ds(kw, wout), :]   # (TR, Wout, C1)
            patch2 = patch.reshape(tm, c1)                           # 2-D MXU feed
            contrib = jnp.dot(patch2, w_ref[t],
                              preferred_element_type=jnp.float32)
            if t == 0:
                acc_ref[...] = contrib
            else:
                acc_ref[...] += contrib
        # f32 epilogue: folded BN, optional residual, LeakyReLU(0.1)
        y = acc_ref[...] * scale_ref[...] + bias_ref[...]
        if with_residual:
            y = y + res_ref[0].astype(jnp.float32)
        if act:
            y = jnp.where(y >= 0.0, y, neg_slope * y)
        o_ref[0] = y.astype(o_ref.dtype)

    if with_residual:
        def kernel(x_ref, w_ref, scale_ref, bias_ref, res_ref, o_ref, acc_ref):
            _body(x_ref, w_ref, scale_ref, bias_ref, res_ref, o_ref, acc_ref)
    else:
        def kernel(x_ref, w_ref, scale_ref, bias_ref, o_ref, acc_ref):
            _body(x_ref, w_ref, scale_ref, bias_ref, None, o_ref, acc_ref)
    return kernel


def _space_to_depth_weights(w):
    """(3,3,C1,C2) kernel -> equivalent (2,2,4*C1,C2) kernel on s2d input."""
    kk, _, c1, c2 = w.shape
    assert kk == 3
    w2 = jnp.zeros((2, 2, 4 * c1, c2), w.dtype)
    for kh2 in range(2):
        for r in range(2):
            kh = 2 * kh2 + r - 1
            if not 0 <= kh < 3:
                continue
            for kw2 in range(2):
                for c in range(2):
                    kw = 2 * kw2 + c - 1
                    if not 0 <= kw < 3:
                        continue
                    g = (2 * r + c) * c1
                    w2 = w2.at[kh2, kw2, g:g + c1, :].set(w[kh, kw])
    return w2


def conv_bn_act(x_nhwc, weight_oihw, gamma, beta, running_mean, running_var, *,
                k, s=1, p=0, eps=1e-5, act=True, neg_slope=0.1,
                residual=None, out_dtype=jnp.bfloat16):
    """Fused Conv2d(bias=False)+BN(eval)+(residual add)+LeakyReLU, NHWC in/out."""
    N, H, W, C1 = x_nhwc.shape
    C2 = weight_oihw.shape[0]

    # ---- fold BatchNorm running statistics into per-channel scale/bias -----
    inv_std = jax.lax.rsqrt(running_var.astype(jnp.float32) + eps)
    scale = (gamma.astype(jnp.float32) * inv_std).reshape(1, C2)
    bias = (beta.astype(jnp.float32)
            - running_mean.astype(jnp.float32) * gamma.astype(jnp.float32) * inv_std
            ).reshape(1, C2)

    # ---- bf16 MXU feeding: weights to (K,K,C1,C2), activations to bf16 -----
    w = jnp.transpose(weight_oihw, (2, 3, 1, 0)).astype(jnp.bfloat16)
    xb = x_nhwc.astype(jnp.bfloat16)

    if s == 1:
        k_eff = k
        pads = ((p, p), (p, p))
    elif s == 2 and k == 3 and p == 1 and H % 2 == 0 and W % 2 == 0:
        # Space-to-depth: every tap becomes a contiguous (un-strided) load.
        xb = (xb.reshape(N, H // 2, 2, W // 2, 2, C1)
                .transpose(0, 1, 3, 2, 4, 5)
                .reshape(N, H // 2, W // 2, 4 * C1))
        w = _space_to_depth_weights(w)
        C1, H, W = 4 * C1, H // 2, W // 2
        k_eff = 2
        pads = ((1, 0), (1, 0))
    else:
        # TODO(synk): only the conv configs used by CSPDarknet53 are supported.
        raise NotImplementedError(f"unsupported conv config k={k} s={s} p={p}")

    if any(v for pr in pads for v in pr):
        xb = jnp.pad(xb, ((0, 0), pads[0], pads[1], (0, 0)))
    Hp, Wp = xb.shape[1], xb.shape[2]
    Hout = Hp - k_eff + 1
    Wout = Wp - k_eff + 1

    wk = w.reshape(k_eff * k_eff, C1, C2)

    # ---- tiling -------------------------------------------------------------
    TC2 = 512 if (C2 > 512 and C2 % 512 == 0) else C2       # lane / C2 tile
    TR = _pick_row_tile(Hout, Wout, Wp, k_eff, C1, TC2)      # output row tile
    TM = TR * Wout
    n_rows = Hout // TR
    n_c2 = C2 // TC2
    TRin = TR + k_eff - 1

    # Overlapping row tiles (halo materialised once; pure reshape when K == 1).
    if k_eff == 1:
        xt = xb.reshape(N, n_rows, TR, Wp, C1)
    else:
        xt = jnp.stack([xb[:, r * TR: r * TR + TRin] for r in range(n_rows)],
                       axis=1)

    with_residual = residual is not None
    kernel = _make_conv_kernel(k_eff, TR, Wout, act, neg_slope, with_residual)

    in_specs = [
        pl.BlockSpec((1, 1, TRin, Wp, C1), lambda n, j, r: (n, r, 0, 0, 0)),
        # weight index_map ignores the (innermost) row axis -> stays resident
        pl.BlockSpec((k_eff * k_eff, C1, TC2), lambda n, j, r: (0, 0, j)),
        pl.BlockSpec((1, TC2), lambda n, j, r: (0, j)),
        pl.BlockSpec((1, TC2), lambda n, j, r: (0, j)),
    ]
    args = [xt, wk, scale, bias]
    if with_residual:
        assert residual.shape == (N, Hout, Wout, C2)
        res = residual.astype(jnp.bfloat16).reshape(N, Hout * Wout, C2)
        in_specs.append(pl.BlockSpec((1, TM, TC2), lambda n, j, r: (n, r, j)))
        args.append(res)

    out = pl.pallas_call(
        kernel,
        out_shape=jax.ShapeDtypeStruct((N, Hout * Wout, C2), out_dtype),
        grid_spec=pltpu.PrefetchScalarGridSpec(
            num_scalar_prefetch=0,
            grid=(N, n_c2, n_rows),          # rows innermost
            in_specs=in_specs,
            out_specs=pl.BlockSpec((1, TM, TC2), lambda n, j, r: (n, r, j)),
            scratch_shapes=[pltpu.VMEM((TM, TC2), jnp.float32)],
        ),
        compiler_params=pltpu.CompilerParams(
            dimension_semantics=("parallel", "parallel", "parallel"),
            vmem_limit_bytes=_VMEM_LIMIT_BYTES,
        ),
    )(*args)

    return out.reshape(N, Hout, Wout, C2)


# --------------------------------------------------------------------------
# Pure-JAX (lax) reference with the same bf16 rounding policy
# --------------------------------------------------------------------------
def _reference_conv(x_nhwc, w_oihw, gamma, beta, mean, var, *, k, s, p,
                    act, residual=None, eps=1e-5, neg_slope=0.1):
    xb = x_nhwc.astype(jnp.bfloat16).astype(jnp.float32)
    wb = w_oihw.astype(jnp.bfloat16).astype(jnp.float32)
    y = jax.lax.conv_general_dilated(
        xb, wb, window_strides=(s, s), padding=[(p, p), (p, p)],
        dimension_numbers=("NHWC", "OIHW", "NHWC"))
    inv = jax.lax.rsqrt(var.astype(jnp.float32) + eps)
    y = y * (gamma * inv) + (beta - mean * gamma * inv)
    if residual is not None:
        y = y + residual.astype(jnp.bfloat16).astype(jnp.float32)
    if act:
        y = jnp.where(y >= 0.0, y, neg_slope * y)
    return y.astype(jnp.bfloat16)


# --------------------------------------------------------------------------
# Modules mirroring the PyTorch backbone (parameters built deterministically)
# --------------------------------------------------------------------------
class PallasConv:
    """Conv2d(bias=False) + BatchNorm2d(eval) + optional LeakyReLU(0.1)."""

    def __init__(self, key, c1, c2, k, s=1, p=0, act=True):
        kw_, kg, kb, km, kv = jax.random.split(key, 5)
        fan_in = c1 * k * k
        self.w = jax.random.normal(kw_, (c2, c1, k, k), jnp.float32) * (1.5 / fan_in) ** 0.5
        self.gamma = 1.0 + 0.05 * jax.random.normal(kg, (c2,), jnp.float32)
        self.beta = 0.05 * jax.random.normal(kb, (c2,), jnp.float32)
        self.mean = 0.05 * jax.random.normal(km, (c2,), jnp.float32)
        self.var = 1.0 + 0.1 * jnp.abs(jax.random.normal(kv, (c2,), jnp.float32))
        self.k, self.s, self.p, self.act = k, s, p, act

    def __call__(self, x, residual=None, act=None, ref=False):
        act = self.act if act is None else act
        if ref:
            return _reference_conv(x, self.w, self.gamma, self.beta, self.mean,
                                   self.var, k=self.k, s=self.s, p=self.p,
                                   act=act, residual=residual)
        return conv_bn_act(x, self.w, self.gamma, self.beta, self.mean, self.var,
                           k=self.k, s=self.s, p=self.p, act=act,
                           residual=residual)


class PallasResidualBlock:
    def __init__(self, key, ch):
        k1, k2 = jax.random.split(key)
        self.conv1 = PallasConv(k1, ch, ch, k=1, act=True)
        self.conv2 = PallasConv(k2, ch, ch, k=3, p=1, act=False)

    def __call__(self, x, ref=False):
        h = self.conv1(x, ref=ref)
        # conv2 + BN + residual add + LeakyReLU fused into a single kernel call
        return self.conv2(h, residual=x, act=True, ref=ref)


class PallasCSPStage:
    def __init__(self, key, c1, n=1):
        c_ = c1 // 2
        ks = list(jax.random.split(key, 3 + n))
        self.cv1 = PallasConv(ks[0], c1, c_, k=1)
        self.cv2 = PallasConv(ks[1], c1, c_, k=1)
        self.blocks = [PallasResidualBlock(ks[2 + i], c_) for i in range(n)]
        self.cv3 = PallasConv(ks[2 + n], 2 * c_, c1, k=1)

    def __call__(self, x, ref=False):
        y1 = self.cv1(x, ref=ref)
        y2 = self.cv2(x, ref=ref)
        for blk in self.blocks:
            y2 = blk(y2, ref=ref)
        # torch.cat(dim=1) in NCHW == channel (last-axis) concat in NHWC
        return self.cv3(jnp.concatenate([y1, y2], axis=-1), ref=ref)


class PallasCSPDarknet53:
    def __init__(self, key, channels=(32, 64, 128, 256, 512, 1024),
                 depths=(1, 2, 8, 8, 4)):
        c0, c1, c2, c3, c4, c5 = channels
        ks = list(jax.random.split(key, 11))
        self.layer_1 = [PallasConv(ks[0], 3, c0, k=3, p=1),
                        PallasConv(ks[1], c0, c1, k=3, p=1, s=2),
                        PallasCSPStage(ks[2], c1, n=depths[0])]
        self.layer_2 = [PallasConv(ks[3], c1, c2, k=3, p=1, s=2),
                        PallasCSPStage(ks[4], c2, n=depths[1])]
        self.layer_3 = [PallasConv(ks[5], c2, c3, k=3, p=1, s=2),
                        PallasCSPStage(ks[6], c3, n=depths[2])]
        self.layer_4 = [PallasConv(ks[7], c3, c4, k=3, p=1, s=2),
                        PallasCSPStage(ks[8], c4, n=depths[3])]
        self.layer_5 = [PallasConv(ks[9], c4, c5, k=3, p=1, s=2),
                        PallasCSPStage(ks[10], c5, n=depths[4])]

    def __call__(self, x_nchw, ref=False):
        # Single NCHW->NHWC transpose at entry; the whole backbone stays NHWC.
        x = jnp.transpose(x_nchw, (0, 2, 3, 1))

        def run(mods, h):
            for m in mods:
                h = m(h, ref=ref)
            return h

        c1_ = run(self.layer_1, x)
        c2_ = run(self.layer_2, c1_)
        c3_ = run(self.layer_3, c2_)
        c4_ = run(self.layer_4, c3_)
        c5_ = run(self.layer_5, c4_)
        to_nchw = lambda t: jnp.transpose(t, (0, 3, 1, 2)).astype(jnp.float32)
        return to_nchw(c3_), to_nchw(c4_), to_nchw(c5_)


# --------------------------------------------------------------------------
# Self test
# --------------------------------------------------------------------------
if __name__ == "__main__":
    root = jax.random.PRNGKey(0)
    k_x, k_unit, k_model = jax.random.split(root, 3)

    # ---- per-kernel unit checks against the lax.conv reference --------------
    ku1, ku2, ku3, ku4 = jax.random.split(k_unit, 4)
    xt = jax.random.normal(ku4, (2, 16, 16, 8), jnp.float32)       # NHWC
    unit_cases = [
        (PallasConv(ku1, 8, 16, k=3, p=1), {}),          # 3x3 s1 (halo tiles)
        (PallasConv(ku2, 8, 16, k=3, p=1, s=2), {}),     # 3x3 s2 (space-to-depth)
        (PallasConv(ku3, 8, 8, k=1), {"residual": xt}),  # 1x1 + fused residual
    ]
    for conv, kwargs in unit_cases:
        got = jax.block_until_ready(conv(xt, **kwargs)).astype(jnp.float32)
        want = conv(xt, ref=True, **kwargs).astype(jnp.float32)
        assert got.shape == want.shape
        assert bool(jnp.max(jnp.abs(got - want)) < 5e-2)

    # ---- scaled-down CSPDarknet53 end-to-end ---------------------------------
    # Same topology as the torch module (stem + 5 CSP stages -> (c3, c4, c5));
    # channel widths / stage depths are reduced to keep the self-test small.
    model = PallasCSPDarknet53(k_model, channels=(4, 8, 16, 32, 64, 128),
                               depths=(1, 1, 2, 2, 1))
    x = jax.random.normal(k_x, (2, 3, 64, 64), jnp.float32)         # NCHW input

    c3, c4, c5 = jax.block_until_ready(jax.jit(model)(x))
    r3, r4, r5 = model(x, ref=True)

    for got, want, ch, hw in ((c3, r3, 32, 8), (c4, r4, 64, 4), (c5, r5, 128, 2)):
        assert got.shape == (2, ch, hw, hw)
        assert got.dtype == jnp.float32
        assert bool(jnp.all(jnp.isfinite(got)))
        diff = jnp.abs(got - want)
        assert bool(jnp.max(diff) < 0.3)
        assert bool(jnp.mean(diff) < 0.03)

    print("KERNEL_OK")
</pallas_src>

<mosaic_0001>
module attributes {stable_mosaic.version = 11 : i64} {
  func.func @kernel(%arg0: i32, %arg1: i32, %arg2: i32, %arg3: memref<1x1x18x18x8xbf16, #tpu.memory_space<vmem>>, %arg4: memref<9x8x16xbf16, #tpu.memory_space<vmem>>, %arg5: memref<1x16xf32, #tpu.memory_space<vmem>>, %arg6: memref<1x16xf32, #tpu.memory_space<vmem>>, %arg7: memref<1x256x16xbf16, #tpu.memory_space<vmem>>, %arg8: memref<256x16xf32, #tpu.memory_space<vmem>>) attributes {dimension_semantics = [#tpu.dimension_semantics<parallel>, #tpu.dimension_semantics<parallel>, #tpu.dimension_semantics<parallel>], iteration_bounds = array<i64: 2, 1, 1>, scalar_prefetch = 0 : i64, scratch_operands = 1 : i64, tpu.core_type = #tpu.core_type<tc>, window_params = [{transform_indices = @transform_0, window_bounds = array<i64: 1, 1, 18, 18, 8>}, {transform_indices = @transform_1, window_bounds = array<i64: 9, 8, 16>}, {transform_indices = @transform_2, window_bounds = array<i64: 1, 16>}, {transform_indices = @transform_3, window_bounds = array<i64: 1, 16>}, {transform_indices = @transform_4, window_bounds = array<i64: 1, 256, 16>}]} {
    %c0 = arith.constant 0 : index
    %c0_0 = arith.constant 0 : index
    %c0_1 = arith.constant 0 : index
    %c0_2 = arith.constant 0 : index
    %c0_3 = arith.constant 0 : index
    %0 = vector.load %arg3[%c0, %c0_0, %c0_1, %c0_2, %c0_3] : memref<1x1x18x18x8xbf16, #tpu.memory_space<vmem>>, vector<1x1x16x16x8xbf16>
    %1 = vector.shape_cast %0 : vector<1x1x16x16x8xbf16> to vector<16x16x8xbf16>
    %2 = vector.shape_cast %1 : vector<16x16x8xbf16> to vector<256x8xbf16>
    %c0_4 = arith.constant 0 : index
    %c0_5 = arith.constant 0 : index
    %c0_6 = arith.constant 0 : index
    %3 = vector.load %arg4[%c0_4, %c0_5, %c0_6] : memref<9x8x16xbf16, #tpu.memory_space<vmem>>, vector<1x8x16xbf16>
    %4 = vector.shape_cast %3 : vector<1x8x16xbf16> to vector<8x16xbf16>
    %cst = arith.constant dense<0.000000e+00> : vector<256x16xf32>
    %5 = tpu.matmul %2, %4, %cst {dimension_numbers = #tpu.dot_dimension_numbers<[1], [0], [0], [1], [0, 0, 1, 1], [], []>} : vector<256x8xbf16>, vector<8x16xbf16>, vector<256x16xf32> -> vector<256x16xf32>
    %c0_7 = arith.constant 0 : index
    %c0_8 = arith.constant 0 : index
    %6 = vector.load %arg8[%c0_7, %c0_8] : memref<256x16xf32, #tpu.memory_space<vmem>>, vector<256x16xf32>
    tpu.vector_store %arg8[%c0_7, %c0_8], %5 {strides = array<i32>} : memref<256x16xf32, #tpu.memory_space<vmem>>, vector<256x16xf32>,
    %c0_9 = arith.constant 0 : index
    %c0_10 = arith.constant 0 : index
    %c0_11 = arith.constant 0 : index
    %c1 = arith.constant 1 : index
    %c0_12 = arith.constant 0 : index
    %7 = vector.load %arg3[%c0_9, %c0_10, %c0_11, %c1, %c0_12] : memref<1x1x18x18x8xbf16, #tpu.memory_space<vmem>>, vector<1x1x16x16x8xbf16>
    %8 = vector.shape_cast %7 : vector<1x1x16x16x8xbf16> to vector<16x16x8xbf16>
    %9 = vector.shape_cast %8 : vector<16x16x8xbf16> to vector<256x8xbf16>
    %c1_13 = arith.constant 1 : index
    %c0_14 = arith.constant 0 : index
    %c0_15 = arith.constant 0 : index
    %10 = vector.load %arg4[%c1_13, %c0_14, %c0_15] : memref<9x8x16xbf16, #tpu.memory_space<vmem>>, vector<1x8x16xbf16>
    %11 = vector.shape_cast %10 : vector<1x8x16xbf16> to vector<8x16xbf16>
    %cst_16 = arith.constant dense<0.000000e+00> : vector<256x16xf32>
    %12 = tpu.matmul %9, %11, %cst_16 {dimension_numbers = #tpu.dot_dimension_numbers<[1], [0], [0], [1], [0, 0, 1, 1], [], []>} : vector<256x8xbf16>, vector<8x16xbf16>, vector<256x16xf32> -> vector<256x16xf32>
    %c0_17 = arith.constant 0 : index
    %c0_18 = arith.constant 0 : index
    %13 = vector.load %arg8[%c0_17, %c0_18] : memref<256x16xf32, #tpu.memory_space<vmem>>, vector<256x16xf32>
    %14 = arith.addf %13, %12 : vector<256x16xf32>
    %c0_19 = arith.constant 0 : index
    %c0_20 = arith.constant 0 : index
    %15 = vector.load %arg8[%c0_19, %c0_20] : memref<256x16xf32, #tpu.memory_space<vmem>>, vector<256x16xf32>
    tpu.vector_store %arg8[%c0_19, %c0_20], %14 {strides = array<i32>} : memref<256x16xf32, #tpu.memory_space<vmem>>, vector<256x16xf32>,
    %c0_21 = arith.constant 0 : index
    %c0_22 = arith.constant 0 : index
    %c0_23 = arith.constant 0 : index
    %c2 = arith.constant 2 : index
    %c0_24 = arith.constant 0 : index
    %16 = vector.load %arg3[%c0_21, %c0_22, %c0_23, %c2, %c0_24] : memref<1x1x18x18x8xbf16, #tpu.memory_space<vmem>>, vector<1x1x16x16x8xbf16>
    %17 = vector.shape_cast %16 : vector<1x1x16x16x8xbf16> to vector<16x16x8xbf16>
    %18 = vector.shape_cast %17 : vector<16x16x8xbf16> to vector<256x8xbf16>
    %c2_25 = arith.constant 2 : index
    %c0_26 = arith.constant 0 : index
    %c0_27 = arith.constant 0 : index
    %19 = vector.load %arg4[%c2_25, %c0_26, %c0_27] : memref<9x8x16xbf16, #tpu.memory_space<vmem>>, vector<1x8x16xbf16>
    %20 = vector.shape_cast %19 : vector<1x8x16xbf16> to vector<8x16xbf16>
    %cst_28 = arith.constant dense<0.000000e+00> : vector<256x16xf32>
    %21 = tpu.matmul %18, %20, %cst_28 {dimension_numbers = #tpu.dot_dimension_numbers<[1], [0], [0], [1], [0, 0, 1, 1], [], []>} : vector<256x8xbf16>, vector<8x16xbf16>, vector<256x16xf32> -> vector<256x16xf32>
    %c0_29 = arith.constant 0 : index
    %c0_30 = arith.constant 0 : index
    %22 = vector.load %arg8[%c0_29, %c0_30] : memref<256x16xf32, #tpu.memory_space<vmem>>, vector<256x16xf32>
    %23 = arith.addf %22, %21 : vector<256x16xf32>
    %c0_31 = arith.constant 0 : index
    %c0_32 = arith.constant 0 : index
    %24 = vector.load %arg8[%c0_31, %c0_32] : memref<256x16xf32, #tpu.memory_space<vmem>>, vector<256x16xf32>
    tpu.vector_store %arg8[%c0_31, %c0_32], %23 {strides = array<i32>} : memref<256x16xf32, #tpu.memory_space<vmem>>, vector<256x16xf32>,
    %c0_33 = arith.constant 0 : index
    %c0_34 = arith.constant 0 : index
    %c1_35 = arith.constant 1 : index
    %c0_36 = arith.constant 0 : index
    %c0_37 = arith.constant 0 : index
    %25 = vector.load %arg3[%c0_33, %c0_34, %c1_35, %c0_36, %c0_37] : memref<1x1x18x18x8xbf16, #tpu.memory_space<vmem>>, vector<1x1x16x16x8xbf16>
    %26 = vector.shape_cast %25 : vector<1x1x16x16x8xbf16> to vector<16x16x8xbf16>
    %27 = vector.shape_cast %26 : vector<16x16x8xbf16> to vector<256x8xbf16>
    %c3 = arith.constant 3 : index
    %c0_38 = arith.constant 0 : index
    %c0_39 = arith.constant 0 : index
    %28 = vector.load %arg4[%c3, %c0_38, %c0_39] : memref<9x8x16xbf16, #tpu.memory_space<vmem>>, vector<1x8x16xbf16>
    %29 = vector.shape_cast %28 : vector<1x8x16xbf16> to vector<8x16xbf16>
    %cst_40 = arith.constant dense<0.000000e+00> : vector<256x16xf32>
    %30 = tpu.matmul %27, %29, %cst_40 {dimension_numbers = #tpu.dot_dimension_numbers<[1], [0], [0], [1], [0, 0, 1, 1], [], []>} : vector<256x8xbf16>, vector<8x16xbf16>, vector<256x16xf32> -> vector<256x16xf32>
    %c0_41 = arith.constant 0 : index
    %c0_42 = arith.constant 0 : index
    %31 = vector.load %arg8[%c0_41, %c0_42] : memref<256x16xf32, #tpu.memory_space<vmem>>, vector<256x16xf32>
    %32 = arith.addf %31, %30 : vector<256x16xf32>
    %c0_43 = arith.constant 0 : index
    %c0_44 = arith.constant 0 : index
    %33 = vector.load %arg8[%c0_43, %c0_44] : memref<256x16xf32, #tpu.memory_space<vmem>>, vector<256x16xf32>
    tpu.vector_store %arg8[%c0_43, %c0_44], %32 {strides = array<i32>} : memref<256x16xf32, #tpu.memory_space<vmem>>, vector<256x16xf32>,
    %c0_45 = arith.constant 0 : index
    %c0_46 = arith.constant 0 : index
    %c1_47 = arith.constant 1 : index
    %c1_48 = arith.constant 1 : index
    %c0_49 = arith.constant 0 : index
    %34 = vector.load %arg3[%c0_45, %c0_46, %c1_47, %c1_48, %c0_49] : memref<1x1x18x18x8xbf16, #tpu.memory_space<vmem>>, vector<1x1x16x16x8xbf16>
    %35 = vector.shape_cast %34 : vector<1x1x16x16x8xbf16> to vector<16x16x8xbf16>
    %36 = vector.shape_cast %35 : vector<16x16x8xbf16> to vector<256x8xbf16>
    %c4 = arith.constant 4 : index
    %c0_50 = arith.constant 0 : index
    %c0_51 = arith.constant 0 : index
    %37 = vector.load %arg4[%c4, %c0_50, %c0_51] : memref<9x8x16xbf16, #tpu.memory_space<vmem>>, vector<1x8x16xbf16>
    %38 = vector.shape_cast %37 : vector<1x8x16xbf16> to vector<8x16xbf16>
    %cst_52 = arith.constant dense<0.000000e+00> : vector<256x16xf32>
    %39 = tpu.matmul %36, %38, %cst_52 {dimension_numbers = #tpu.dot_dimension_numbers<[1], [0], [0], [1], [0, 0, 1, 1], [], []>} : vector<256x8xbf16>, vector<8x16xbf16>, vector<256x16xf32> -> vector<256x16xf32>
    %c0_53 = arith.constant 0 : index
    %c0_54 = arith.constant 0 : index
    %40 = vector.load %arg8[%c0_53, %c0_54] : memref<256x16xf32, #tpu.memory_space<vmem>>, vector<256x16xf32>
    %41 = arith.addf %40, %39 : vector<256x16xf32>
    %c0_55 = arith.constant 0 : index
    %c0_56 = arith.constant 0 : index
    %42 = vector.load %arg8[%c0_55, %c0_56] : memref<256x16xf32, #tpu.memory_space<vmem>>, vector<256x16xf32>
    tpu.vector_store %arg8[%c0_55, %c0_56], %41 {strides = array<i32>} : memref<256x16xf32, #tpu.memory_space<vmem>>, vector<256x16xf32>,
    %c0_57 = arith.constant 0 : index
    %c0_58 = arith.constant 0 : index
    %c1_59 = arith.constant 1 : index
    %c2_60 = arith.constant 2 : index
    %c0_61 = arith.constant 0 : index
    %43 = vector.load %arg3[%c0_57, %c0_58, %c1_59, %c2_60, %c0_61] : memref<1x1x18x18x8xbf16, #tpu.memory_space<vmem>>, vector<1x1x16x16x8xbf16>
    %44 = vector.shape_cast %43 : vector<1x1x16x16x8xbf16> to vector<16x16x8xbf16>
    %45 = vector.shape_cast %44 : vector<16x16x8xbf16> to vector<256x8xbf16>
    %c5 = arith.constant 5 : index
    %c0_62 = arith.constant 0 : index
    %c0_63 = arith.constant 0 : index
    %46 = vector.load %arg4[%c5, %c0_62, %c0_63] : memref<9x8x16xbf16, #tpu.memory_space<vmem>>, vector<1x8x16xbf16>
    %47 = vector.shape_cast %46 : vector<1x8x16xbf16> to vector<8x16xbf16>
    %cst_64 = arith.constant dense<0.000000e+00> : vector<256x16xf32>
    %48 = tpu.matmul %45, %47, %cst_64 {dimension_numbers = #tpu.dot_dimension_numbers<[1], [0], [0], [1], [0, 0, 1, 1], [], []>} : vector<256x8xbf16>, vector<8x16xbf16>, vector<256x16xf32> -> vector<256x16xf32>
    %c0_65 = arith.constant 0 : index
    %c0_66 = arith.constant 0 : index
    %49 = vector.load %arg8[%c0_65, %c0_66] : memref<256x16xf32, #tpu.memory_space<vmem>>, vector<256x16xf32>
    %50 = arith.addf %49, %48 : vector<256x16xf32>
    %c0_67 = arith.constant 0 : index
    %c0_68 = arith.constant 0 : index
    %51 = vector.load %arg8[%c0_67, %c0_68] : memref<256x16xf32, #tpu.memory_space<vmem>>, vector<256x16xf32>
    tpu.vector_store %arg8[%c0_67, %c0_68], %50 {strides = array<i32>} : memref<256x16xf32, #tpu.memory_space<vmem>>, vector<256x16xf32>,
    %c0_69 = arith.constant 0 : index
    %c0_70 = arith.constant 0 : index
    %c2_71 = arith.constant 2 : index
    %c0_72 = arith.constant 0 : index
    %c0_73 = arith.constant 0 : index
    %52 = vector.load %arg3[%c0_69, %c0_70, %c2_71, %c0_72, %c0_73] : memref<1x1x18x18x8xbf16, #tpu.memory_space<vmem>>, vector<1x1x16x16x8xbf16>
    %53 = vector.shape_cast %52 : vector<1x1x16x16x8xbf16> to vector<16x16x8xbf16>
    %54 = vector.shape_cast %53 : vector<16x16x8xbf16> to vector<256x8xbf16>
    %c6 = arith.constant 6 : index
    %c0_74 = arith.constant 0 : index
    %c0_75 = arith.constant 0 : index
    %55 = vector.load %arg4[%c6, %c0_74, %c0_75] : memref<9x8x16xbf16, #tpu.memory_space<vmem>>, vector<1x8x16xbf16>
    %56 = vector.shape_cast %55 : vector<1x8x16xbf16> to vector<8x16xbf16>
    %cst_76 = arith.constant dense<0.000000e+00> : vector<256x16xf32>
    %57 = tpu.matmul %54, %56, %cst_76 {dimension_numbers = #tpu.dot_dimension_numbers<[1], [0], [0], [1], [0, 0, 1, 1], [], []>} : vector<256x8xbf16>, vector<8x16xbf16>, vector<256x16xf32> -> vector<256x16xf32>
    %c0_77 = arith.constant 0 : index
    %c0_78 = arith.constant 0 : index
    %58 = vector.load %arg8[%c0_77, %c0_78] : memref<256x16xf32, #tpu.memory_space<vmem>>, vector<256x16xf32>
    %59 = arith.addf %58, %57 : vector<256x16xf32>
    %c0_79 = arith.constant 0 : index
    %c0_80 = arith.constant 0 : index
    %60 = vector.load %arg8[%c0_79, %c0_80] : memref<256x16xf32, #tpu.memory_space<vmem>>, vector<256x16xf32>
    tpu.vector_store %arg8[%c0_79, %c0_80], %59 {strides = array<i32>} : memref<256x16xf32, #tpu.memory_space<vmem>>, vector<256x16xf32>,
    %c0_81 = arith.constant 0 : index
    %c0_82 = arith.constant 0 : index
    %c2_83 = arith.constant 2 : index
    %c1_84 = arith.constant 1 : index
    %c0_85 = arith.constant 0 : index
    %61 = vector.load %arg3[%c0_81, %c0_82, %c2_83, %c1_84, %c0_85] : memref<1x1x18x18x8xbf16, #tpu.memory_space<vmem>>, vector<1x1x16x16x8xbf16>
    %62 = vector.shape_cast %61 : vector<1x1x16x16x8xbf16> to vector<16x16x8xbf16>
    %63 = vector.shape_cast %62 : vector<16x16x8xbf16> to vector<256x8xbf16>
    %c7 = arith.constant 7 : index
    %c0_86 = arith.constant 0 : index
    %c0_87 = arith.constant 0 : index
    %64 = vector.load %arg4[%c7, %c0_86, %c0_87] : memref<9x8x16xbf16, #tpu.memory_space<vmem>>, vector<1x8x16xbf16>
    %65 = vector.shape_cast %64 : vector<1x8x16xbf16> to vector<8x16xbf16>
    %cst_88 = arith.constant dense<0.000000e+00> : vector<256x16xf32>
    %66 = tpu.matmul %63, %65, %cst_88 {dimension_numbers = #tpu.dot_dimension_numbers<[1], [0], [0], [1], [0, 0, 1, 1], [], []>} : vector<256x8xbf16>, vector<8x16xbf16>, vector<256x16xf32> -> vector<256x16xf32>
    %c0_89 = arith.constant 0 : index
    %c0_90 = arith.constant 0 : index
    %67 = vector.load %arg8[%c0_89, %c0_90] : memref<256x16xf32, #tpu.memory_space<vmem>>, vector<256x16xf32>
    %68 = arith.addf %67, %66 : vector<256x16xf32>
    %c0_91 = arith.constant 0 : index
    %c0_92 = arith.constant 0 : index
    %69 = vector.load %arg8[%c0_91, %c0_92] : memref<256x16xf32, #tpu.memory_space<vmem>>, vector<256x16xf32>
    tpu.vector_store %arg8[%c0_91, %c0_92], %68 {strides = array<i32>} : memref<256x16xf32, #tpu.memory_space<vmem>>, vector<256x16xf32>,
    %c0_93 = arith.constant 0 : index
    %c0_94 = arith.constant 0 : index
    %c2_95 = arith.constant 2 : index
    %c2_96 = arith.constant 2 : index
    %c0_97 = arith.constant 0 : index
    %70 = vector.load %arg3[%c0_93, %c0_94, %c2_95, %c2_96, %c0_97] : memref<1x1x18x18x8xbf16, #tpu.memory_space<vmem>>, vector<1x1x16x16x8xbf16>
    %71 = vector.shape_cast %70 : vector<1x1x16x16x8xbf16> to vector<16x16x8xbf16>
    %72 = vector.shape_cast %71 : vector<16x16x8xbf16> to vector<256x8xbf16>
    %c8 = arith.constant 8 : index
    %c0_98 = arith.constant 0 : index
    %c0_99 = arith.constant 0 : index
    %73 = vector.load %arg4[%c8, %c0_98, %c0_99] : memref<9x8x16xbf16, #tpu.memory_space<vmem>>, vector<1x8x16xbf16>
    %74 = vector.shape_cast %73 : vector<1x8x16xbf16> to vector<8x16xbf16>
    %cst_100 = arith.constant dense<0.000000e+00> : vector<256x16xf32>
    %75 = tpu.matmul %72, %74, %cst_100 {dimension_numbers = #tpu.dot_dimension_numbers<[1], [0], [0], [1], [0, 0, 1, 1], [], []>} : vector<256x8xbf16>, vector<8x16xbf16>, vector<256x16xf32> -> vector<256x16xf32>
    %c0_101 = arith.constant 0 : index
    %c0_102 = arith.constant 0 : index
    %76 = vector.load %arg8[%c0_101, %c0_102] : memref<256x16xf32, #tpu.memory_space<vmem>>, vector<256x16xf32>
    %77 = arith.addf %76, %75 : vector<256x16xf32>
    %c0_103 = arith.constant 0 : index
    %c0_104 = arith.constant 0 : index
    %78 = vector.load %arg8[%c0_103, %c0_104] : memref<256x16xf32, #tpu.memory_space<vmem>>, vector<256x16xf32>
    tpu.vector_store %arg8[%c0_103, %c0_104], %77 {strides = array<i32>} : memref<256x16xf32, #tpu.memory_space<vmem>>, vector<256x16xf32>,
    %c0_105 = arith.constant 0 : index
    %c0_106 = arith.constant 0 : index
    %79 = vector.load %arg8[%c0_105, %c0_106] : memref<256x16xf32, #tpu.memory_space<vmem>>, vector<256x16xf32>
    %c0_107 = arith.constant 0 : index
    %c0_108 = arith.constant 0 : index
    %80 = vector.load %arg5[%c0_107, %c0_108] : memref<1x16xf32, #tpu.memory_space<vmem>>, vector<1x16xf32>
    %81 = vector.broadcast %80 : vector<1x16xf32> to vector<256x16xf32>
    %82 = arith.mulf %79, %81 : vector<256x16xf32>
    %c0_109 = arith.constant 0 : index
    %c0_110 = arith.constant 0 : index
    %83 = vector.load %arg6[%c0_109, %c0_110] : memref<1x16xf32, #tpu.memory_space<vmem>>, vector<1x16xf32>
    %84 = vector.broadcast %83 : vector<1x16xf32> to vector<256x16xf32>
    %85 = arith.addf %82, %84 : vector<256x16xf32>
    %cst_111 = arith.constant 0.000000e+00 : f32
    %86 = vector.broadcast %cst_111 : f32 to vector<256x16xf32>
    %87 = arith.cmpf oge, %85, %86 : vector<256x16xf32>
    %cst_112 = arith.constant 1.000000e-01 : f32
    %88 = vector.broadcast %cst_112 : f32 to vector<256x16xf32>
    %89 = arith.mulf %88, %85 : vector<256x16xf32>
    %90 = arith.select %87, %85, %89 : vector<256x16xi1>, vector<256x16xf32>
    %91 = arith.truncf %90 : vector<256x16xf32> to vector<256x16xbf16>
    %c0_113 = arith.constant 0 : index
    %c0_114 = arith.constant 0 : index
    %c0_115 = arith.constant 0 : index
    %92 = vector.load %arg7[%c0_113, %c0_114, %c0_115] : memref<1x256x16xbf16, #tpu.memory_space<vmem>>, vector<1x256x16xbf16>
    %93 = vector.shape_cast %92 : vector<1x256x16xbf16> to vector<256x16xbf16>
    %94 = vector.shape_cast %91 : vector<256x16xbf16> to vector<1x256x16xbf16>
    tpu.vector_store %arg7[%c0_113, %c0_114, %c0_115], %94 {strides = array<i32>} : memref<1x256x16xbf16, #tpu.memory_space<vmem>>, vector<1x256x16xbf16>,
    return
  }
  func.func @transform_0(%arg0: i32, %arg1: i32, %arg2: i32) -> (i32, i32, i32, i32, i32) {
    %c0_i32 = arith.constant 0 : i32
    %c0_i32_0 = arith.constant 0 : i32
    %c0_i32_1 = arith.constant 0 : i32
    %c0_i32_2 = arith.constant 0 : i32
    return %arg0, %arg2, %c0_i32, %c0_i32_0, %c0_i32_1 : i32, i32, i32, i32, i32
  }
  func.func @transform_1(%arg0: i32, %arg1: i32, %arg2: i32) -> (i32, i32, i32) {
    %c0_i32 = arith.constant 0 : i32
    %c0_i32_0 = arith.constant 0 : i32
    %c0_i32_1 = arith.constant 0 : i32
    return %c0_i32, %c0_i32_0, %arg1 : i32, i32, i32
  }
  func.func @transform_2(%arg0: i32, %arg1: i32, %arg2: i32) -> (i32, i32) {
    %c0_i32 = arith.constant 0 : i32
    %c0_i32_0 = arith.constant 0 : i32
    return %c0_i32, %arg1 : i32, i32
  }
  func.func @transform_3(%arg0: i32, %arg1: i32, %arg2: i32) -> (i32, i32) {
    %c0_i32 = arith.constant 0 : i32
    %c0_i32_0 = arith.constant 0 : i32
    return %c0_i32, %arg1 : i32, i32
  }
  func.func @transform_4(%arg0: i32, %arg1: i32, %arg2: i32) -> (i32, i32, i32) {
    %c0_i32 = arith.constant 0 : i32
    return %arg0, %arg2, %arg1 : i32, i32, i32
  }
}

</mosaic_0001>

<llo_original>
// kernel: tpu_custom_call.1
$region0: #{tpu_custom_call.1}
  #allocation0 [shape = 'u32[]', space=smem, size = 0x4, offset = 0x4, fixed_abs, tag = 'smem constant byte address 0x4 - core index']
  #allocation1 [shape = 'u32[72,128]{1,0:T(1,128)}', space=vmem, size = 0x9000, scoped, tag = 'internal scratch']
  #allocation2 [shape = 'f32[256,16]{1,0:T(8,128)}', space=vmem, size = 0x20000, scoped, tag = 'scratch operand']
  %s0 = inlined_call_operand.vmem [shape: bf16[2,1,18,18,8], index: 0, kind: input, shape index: {}]
  %s1 = inlined_call_operand.vmem [shape: bf16[9,8,16], index: 1, kind: input, shape index: {}]
  %s2 = inlined_call_operand.vmem [shape: f32[1,16], index: 2, kind: input, shape index: {}]
  %s3 = inlined_call_operand.vmem [shape: f32[1,16], index: 3, kind: input, shape index: {}]
  %s4 = inlined_call_operand.vmem [shape: bf16[2,256,16], index: 4, kind: output, shape index: {}]
  %s5 = sld [smem:[#allocation0]]
  $region49: #{tpu_custom_call.1} parent=0
    _
  %s7 = ssub.s32 1, %s5
  %s8 = scalar_select 0, %s7, %s5
  loop: start=0, step=1, limit=4
  $region2: #{tpu_custom_call.1} parent=0 // loop_pre_header
    _
  $region3: #{tpu_custom_call.1} parent=0 // loop_header
    %s10 = sphi 0, %s14
    %p11 = scmp.ge.s32.totalorder %s10, 4
    %s17 = sphi 0, %s36
    %s18 = sphi 0, %s32
    %s19 = sphi 0, %s28
    %s20 = sphi 0, %s17
    %s21 = sphi 0, %s18
    %s22 = sphi 0, %s19
    %s23 = sphi 0, %s20
    %s24 = sphi 0, %s21
    %s25 = sphi 0, %s22
    %s41 = sphi 0, %s43
    %s44 = sphi 0, %s41
    %s45 = sphi 0, %s44
    %s61 = sphi 0, %s45
    %s67 = sphi 0, %s69
    %s70 = sphi 0, %s67
    %s71 = sphi 0, %s70
    %s87 = sphi 0, %s71
    %s93 = sphi 0, %s95
    %s96 = sphi 0, %s93
    %s97 = sphi 0, %s96
    %s113 = sphi 0, %s97
    %s119 = sphi 0, %s121
    %s122 = sphi 0, %s119
    %s123 = sphi 0, %s122
    %s139 = sphi 0, %s123
    %s149 = sphi 0, %s151
    %s152 = sphi 0, %s149
    %s153 = sphi 0, %s152
    %s169 = sphi 0, %s153
  $region4: #{tpu_custom_call.1} parent=0 // loop_header_branch
    %13 = sbr.rel (%p11) target = $region8
  $region5: #{tpu_custom_call.1} parent=0 // loop_body
    %s15 = ssub.s32 %s10, 1
    %s16 = ssub.s32 %s10, 2
    %s26 = sadd.s32 1, %s19
    %p27 = scmp.ge.s32.totalorder %s26, 1
    %s28 = scalar_select %p27, 0, %s26
    %s29 = sadd.s32 1, %s18
    %s30 = scalar_select %p27, %s29, %s18
    %p31 = scmp.ge.s32.totalorder %s30, 1
    %s32 = scalar_select %p31, 0, %s30
    %s33 = sadd.s32 1, %s17
    %s34 = scalar_select %p31, %s33, %s17
    %p35 = scmp.ge.s32.totalorder %s34, 2
    %s36 = scalar_select %p35, 0, %s34
    %s37 = ssub.s32 %s17, %s36
    %s38 = ssub.s32 %s19, %s28
    %s39 = sor.u32 %s37, %s38
    %p40 = scmp.eq.s32.totalorder %s39, 0
    %s42 = sadd.s32 %s41, 1
    %s43 = scalar_select %p40, %s41, %s42
    %p46 = pneg %p40
    %p47 = scmp.eq.s32.totalorder %s10, 1
    %p48 = por %p46, %p47
    %p49 = scmp.ne.s32.totalorder %s41, %s44
    %p50 = scmp.eq.s32.totalorder %s10, 0
    %p51 = por %p49, %p50
    %p52 = scmp.ne.s32.totalorder %s41, %s44
    %p53 = scmp.eq.s32.totalorder %s15, 1
    %p54 = por %p52, %p53
    %p55 = scmp.ne.s32.totalorder %s44, %s45
    %p56 = scmp.eq.s32.totalorder %s15, 0
    %p57 = por %p55, %p56
    %p58 = scmp.ne.s32.totalorder %s44, %s45
    %p59 = scmp.eq.s32.totalorder %s16, 1
    %p60 = por %p58, %p59
    %p62 = scmp.ne.s32.totalorder %s45, %s61
    %p63 = scmp.eq.s32.totalorder %s16, 0
    %p64 = por %p62, %p63
    %s65 = ssub.s32 %s18, %s32
    %p66 = scmp.eq.s32.totalorder %s65, 0
    %s68 = sadd.s32 %s67, 1
    %s69 = scalar_select %p66, %s67, %s68
    %p72 = pneg %p66
    %p73 = scmp.eq.s32.totalorder %s10, 1
    %p74 = por %p72, %p73
    %p75 = scmp.ne.s32.totalorder %s67, %s70
    %p76 = scmp.eq.s32.totalorder %s10, 0
    %p77 = por %p75, %p76
    %p78 = scmp.ne.s32.totalorder %s67, %s70
    %p79 = scmp.eq.s32.totalorder %s15, 1
    %p80 = por %p78, %p79
    %p81 = scmp.ne.s32.totalorder %s70, %s71
    %p82 = scmp.eq.s32.totalorder %s15, 0
    %p83 = por %p81, %p82
    %p84 = scmp.ne.s32.totalorder %s70, %s71
    %p85 = scmp.eq.s32.totalorder %s16, 1
    %p86 = por %p84, %p85
    %p88 = scmp.ne.s32.totalorder %s71, %s87
    %p89 = scmp.eq.s32.totalorder %s16, 0
    %p90 = por %p88, %p89
    %s91 = ssub.s32 %s18, %s32
    %p92 = scmp.eq.s32.totalorder %s91, 0
    %s94 = sadd.s32 %s93, 1
    %s95 = scalar_select %p92, %s93, %s94
    %p98 = pneg %p92
    %p99 = scmp.eq.s32.totalorder %s10, 1
    %p100 = por %p98, %p99
    %p101 = scmp.ne.s32.totalorder %s93, %s96
    %p102 = scmp.eq.s32.totalorder %s10, 0
    %p103 = por %p101, %p102
    %p104 = scmp.ne.s32.totalorder %s93, %s96
    %p105 = scmp.eq.s32.totalorder %s15, 1
    %p106 = por %p104, %p105
    %p107 = scmp.ne.s32.totalorder %s96, %s97
    %p108 = scmp.eq.s32.totalorder %s15, 0
    %p109 = por %p107, %p108
    %p110 = scmp.ne.s32.totalorder %s96, %s97
    %p111 = scmp.eq.s32.totalorder %s16, 1
    %p112 = por %p110, %p111
    %p114 = scmp.ne.s32.totalorder %s97, %s113
    %p115 = scmp.eq.s32.totalorder %s16, 0
    %p116 = por %p114, %p115
    %s117 = ssub.s32 %s18, %s32
    %p118 = scmp.eq.s32.totalorder %s117, 0
    %s120 = sadd.s32 %s119, 1
    %s121 = scalar_select %p118, %s119, %s120
    %p124 = pneg %p118
    %p125 = scmp.eq.s32.totalorder %s10, 1
    %p126 = por %p124, %p125
    %p127 = scmp.ne.s32.totalorder %s119, %s122
    %p128 = scmp.eq.s32.totalorder %s10, 0
    %p129 = por %p127, %p128
    %p130 = scmp.ne.s32.totalorder %s119, %s122
    %p131 = scmp.eq.s32.totalorder %s15, 1
    %p132 = por %p130, %p131
    %p133 = scmp.ne.s32.totalorder %s122, %s123
    %p134 = scmp.eq.s32.totalorder %s15, 0
    %p135 = por %p133, %p134
    %p136 = scmp.ne.s32.totalorder %s122, %s123
    %p137 = scmp.eq.s32.totalorder %s16, 1
    %p138 = por %p136, %p137
    %p140 = scmp.ne.s32.totalorder %s123, %s139
    %p141 = scmp.eq.s32.totalorder %s16, 0
    %p142 = por %p140, %p141
    %s143 = ssub.s32 %s17, %s36
    %s144 = ssub.s32 %s19, %s28
    %s145 = sor.u32 %s143, %s144
    %s146 = ssub.s32 %s18, %s32
    %s147 = sor.u32 %s145, %s146
    %p148 = scmp.eq.s32.totalorder %s147, 0
    %s150 = sadd.s32 %s149, 1
    %s151 = scalar_select %p148, %s149, %s150
    %p154 = pneg %p148
    %p155 = scmp.eq.s32.totalorder %s10, 1
    %p156 = por %p154, %p155
    %p157 = scmp.ne.s32.totalorder %s149, %s152
    %p158 = scmp.eq.s32.totalorder %s10, 0
    %p159 = por %p157, %p158
    %p160 = scmp.ne.s32.totalorder %s149, %s152
    %p161 = scmp.eq.s32.totalorder %s15, 1
    %p162 = por %p160, %p161
    %p163 = scmp.ne.s32.totalorder %s152, %s153
    %p164 = scmp.eq.s32.totalorder %s15, 0
    %p165 = por %p163, %p164
    %p166 = scmp.ne.s32.totalorder %s152, %s153
    %p167 = scmp.eq.s32.totalorder %s16, 1
    %p168 = por %p166, %p167
    %p170 = scmp.ne.s32.totalorder %s153, %s169
    %p171 = scmp.eq.s32.totalorder %s16, 0
    %p172 = por %p170, %p171
    %p173 = scmp.le.s32.totalorder 1, %s10
    %p174 = scmp.lt.s32.totalorder %s10, 3
    %p175 = pnand %p173, %p174
    %p176 = pneg %p175
    // Predicated region
    $region9: #{tpu_custom_call.1} parent=5 // pred_check
      _
    $region10: #{tpu_custom_call.1} parent=5 // pred_check_branch
      %178 = sbr.rel (%p175) target = $region12
    $region11: #{tpu_custom_call.1} parent=5 // pred_region
      %s179 = ssub.s32 %s10, 1
      // Predicated region
      $region13: #{tpu_custom_call.1} parent=11 // pred_check
        %p180 = pneg %p83
      $region14: #{tpu_custom_call.1} parent=11 // pred_check_branch
        %182 = sbr.rel (%p180) target = $region16
      $region15: #{tpu_custom_call.1} parent=11 // pred_region
        %p183 = scmp.lt.s32.totalorder %s21, 0
        %s184 = scalar_select %p183, %s21, 0
        %s185 = smul.addr %s184, 4
        %s186 = scalar_lea.vmem %s1, %s185
      $region16: #{tpu_custom_call.1} parent=11 // pred_fallthru
        _
      // Predicated region
      $region17: #{tpu_custom_call.1} parent=11 // pred_check
        %p187 = pneg %p109
      $region18: #{tpu_custom_call.1} parent=11 // pred_check_branch
        %189 = sbr.rel (%p187) target = $region20
      $region19: #{tpu_custom_call.1} parent=11 // pred_region
        %p190 = scmp.lt.s32.totalorder %s21, 0
        %s191 = scalar_select %p190, %s21, 0
        %s192 = scalar_lea.vmem %s2, %s191
      $region20: #{tpu_custom_call.1} parent=11 // pred_fallthru
        _
      // Predicated region
      $region21: #{tpu_custom_call.1} parent=11 // pred_check
        %p193 = pneg %p135
      $region22: #{tpu_custom_call.1} parent=11 // pred_check_branch
        %195 = sbr.rel (%p193) target = $region24
      $region23: #{tpu_custom_call.1} parent=11 // pred_region
        %p196 = scmp.lt.s32.totalorder %s21, 0
        %s197 = scalar_select %p196, %s21, 0
        %s198 = scalar_lea.vmem %s3, %s197
      $region24: #{tpu_custom_call.1} parent=11 // pred_fallthru
        _
    $region12: #{tpu_custom_call.1} parent=5 // pred_fallthru
      _
    %p199 = scmp.lt.s32.totalorder %s10, 2
    // Predicated region
    $region25: #{tpu_custom_call.1} parent=5 // pred_check
      %p200 = pneg %p199
    $region26: #{tpu_custom_call.1} parent=5 // pred_check_branch
      %202 = sbr.rel (%p200) target = $region28
    $region27: #{tpu_custom_call.1} parent=5 // pred_region
      // Predicated region
      $region29: #{tpu_custom_call.1} parent=27 // pred_check
        %p203 = pneg %p51
      $region30: #{tpu_custom_call.1} parent=27 // pred_check_branch
        %205 = sbr.rel (%p203) target = $region32
      $region31: #{tpu_custom_call.1} parent=27 // pred_region
        %p206 = scmp.lt.s32.totalorder %s17, 1
        %s207 = scalar_select %p206, %s17, 1
        %p208 = scmp.lt.s32.totalorder %s19, 0
        %s209 = scalar_select %p208, %s19, 0
        %s210 = smul.addr %s209, 54
        %s211 = smul.addr %s207, 54
        %s212 = sadd.s32 %s210, %s211
        %s213 = smul.addr %s212, 4
        %s214 = scalar_lea.vmem %s0, %s213
      $region32: #{tpu_custom_call.1} parent=27 // pred_fallthru
        _
    $region28: #{tpu_custom_call.1} parent=5 // pred_fallthru
      _
    %p215 = scmp.le.s32.totalorder 1, %s10
    %p216 = scmp.lt.s32.totalorder %s10, 3
    %p217 = pnand %p215, %p216
    %p218 = pneg %p217
    // Predicated region
    $region33: #{tpu_custom_call.1} parent=5 // pred_check
      _
    $region34: #{tpu_custom_call.1} parent=5 // pred_check_branch
      %220 = sbr.rel (%p217) target = $region36
    $region35: #{tpu_custom_call.1} parent=5 // pred_region
      %s221 = ssub.s32 %s10, 1
      %p222 = scmp.lt.s32.totalorder %s20, 1
      %s223 = scalar_select %p222, %s20, 1
      %p224 = scmp.lt.s32.totalorder %s22, 0
      %s225 = scalar_select %p224, %s22, 0
      %s226 = smul.addr %s225, 54
      %s227 = smul.addr %s223, 54
      %s228 = sadd.s32 %s226, %s227
      %s229 = smul.addr %s228, 4
      %s230 = scalar_lea.vmem %s0, %s229
      %p231 = pneg %p57
      %p232 = pneg %p54
      %p233 = scmp.lt.s32.totalorder %s21, 0
      %s234 = scalar_select %p233, %s21, 0
      %s235 = smul.addr %s234, 4
      %s236 = scalar_lea.vmem %s1, %s235
      %p237 = pneg %p83
      %p238 = pneg %p80
      %p239 = scmp.lt.s32.totalorder %s21, 0
      %s240 = scalar_select %p239, %s21, 0
      %s241 = scalar_lea.vmem %s2, %s240
      %p242 = pneg %p109
      %p243 = pneg %p106
      %p244 = scmp.lt.s32.totalorder %s21, 0
      %s245 = scalar_select %p244, %s21, 0
      %s246 = scalar_lea.vmem %s3, %s245
      %p247 = pneg %p135
      %p248 = pneg %p132
      %p249 = pneg %p165
      %p250 = pneg %p162
      %s251 = smul.u32 32, %s22
      %p252 = scmp.lt.s32.totalorder %s20, 1
      %s253 = scalar_select %p252, %s20, 1
      %p254 = scmp.lt.s32.totalorder %s251, 31
      %s255 = scalar_select %p254, %s251, 31
      %p256 = scmp.lt.s32.totalorder %s21, 0
      %s257 = scalar_select %p256, %s21, 0
      %s258 = sadd.s32 %s257, %s255
      %s259 = smul.addr %s253, 32
      %s260 = sadd.s32 %s258, %s259
      %s261 = smul.addr %s260, 4
      %s262 = scalar_lea.vmem %s4, %s261
      %p263 = scmp.lt.s32.totalorder %s20, 1
      %s264 = scalar_select %p263, %s20, 1
      %p265 = scmp.lt.s32.totalorder %s22, 0
      %s266 = scalar_select %p265, %s22, 0
      %s267 = smul.addr %s266, 54
      %s268 = smul.addr %s264, 54
      %s269 = sadd.s32 %s267, %s268
      %s270 = smul.addr %s269, 4
      %s271 = scalar_lea.vmem %s0, %s270
      %p272 = scmp.lt.s32.totalorder %s21, 0
      %s273 = scalar_select %p272, %s21, 0
      %s274 = smul.addr %s273, 4
      %s275 = scalar_lea.vmem %s1, %s274
      %p276 = scmp.lt.s32.totalorder %s21, 0
      %s277 = scalar_select %p276, %s21, 0
      %s278 = scalar_lea.vmem %s2, %s277
      %p279 = scmp.lt.s32.totalorder %s21, 0
      %s280 = scalar_select %p279, %s21, 0
      %s281 = scalar_lea.vmem %s3, %s280
      %s282 = smul.u32 32, %s22
      %p283 = scmp.lt.s32.totalorder %s20, 1
      %s284 = scalar_select %p283, %s20, 1
      %p285 = scmp.lt.s32.totalorder %s282, 31
      %s286 = scalar_select %p285, %s282, 31
      %p287 = scmp.lt.s32.totalorder %s21, 0
      %s288 = scalar_select %p287, %s21, 0
      %s289 = sadd.s32 %s288, %s286
      %s290 = smul.addr %s284, 32
      %s291 = sadd.s32 %s289, %s290
      %s292 = smul.addr %s291, 4
      %s293 = scalar_lea.vmem %s4, %s292
      %s294 = smul.u32 32, %s22
      %v296 = vld [vmem:[%s271] sm:$0xf]
      %v297 = vld [vmem:[%s271 + $0x4] sm:$0xf]
      %v298 = vld [vmem:[%s271 + $0xc] sm:$0xf]
      %v299 = vld [vmem:[%s271 + $0x10] sm:$0xf]
      %v300 = vld [vmem:[%s271 + $0x18] sm:$0xf]
      %v301 = vld [vmem:[%s271 + $0x1c] sm:$0xf]
      %v302 = vld [vmem:[%s271 + $0x24] sm:$0xf]
      %v303 = vld [vmem:[%s271 + $0x28] sm:$0xf]
      %v304 = vld [vmem:[%s271 + $0x30] sm:$0xf]
      %v305 = vld [vmem:[%s271 + $0x34] sm:$0xf]
      %v306 = vld [vmem:[%s271 + $0x3c] sm:$0xf]
      %v307 = vld [vmem:[%s271 + $0x40] sm:$0xf]
      %v308 = vld [vmem:[%s271 + $0x48] sm:$0xf]
      %v309 = vld [vmem:[%s271 + $0x4c] sm:$0xf]
      %v310 = vld [vmem:[%s271 + $0x54] sm:$0xf]
      %v311 = vld [vmem:[%s271 + $0x58] sm:$0xf]
      %v312 = vld [vmem:[%s271 + $0x60] sm:$0xf]
      %v313 = vld [vmem:[%s271 + $0x64] sm:$0xf]
      %v314 = vld [vmem:[%s271 + $0x6c] sm:$0xf]
      %v315 = vld [vmem:[%s271 + $0x70] sm:$0xf]
      %v316 = vld [vmem:[%s271 + $0x78] sm:$0xf]
      %v317 = vld [vmem:[%s271 + $0x7c] sm:$0xf]
      %v318 = vld [vmem:[%s271 + $0x84] sm:$0xf]
      %v319 = vld [vmem:[%s271 + $0x88] sm:$0xf]
      %v320 = vld [vmem:[%s271 + $0x90] sm:$0xf]
      %v321 = vld [vmem:[%s271 + $0x94] sm:$0xf]
      %v322 = vld [vmem:[%s271 + $0x9c] sm:$0xf]
      %v323 = vld [vmem:[%s271 + $0xa0] sm:$0xf]
      %v324 = vld [vmem:[%s271 + $0xa8] sm:$0xf]
      %v325 = vld [vmem:[%s271 + $0xac] sm:$0xf]
      %v326 = vld [vmem:[%s271 + $0xb4] sm:$0xf]
      %v327 = vld [vmem:[%s271 + $0xb8] sm:$0xf]
      %v328 = vld [vmem:[%s275] sm:$0xf]
      %v361 = vunpack.c.l.b16 %v296
      %v362 = vunpack.c.l.b16 %v297
      %v363 = vunpack.c.l.b16 %v298
      %v364 = vunpack.c.l.b16 %v299
      %v365 = vunpack.c.l.b16 %v300
      %v366 = vunpack.c.l.b16 %v301
      %v367 = vunpack.c.l.b16 %v302
      %v368 = vunpack.c.l.b16 %v303
      %v369 = vunpack.c.l.b16 %v304
      %v370 = vunpack.c.l.b16 %v305
      %v371 = vunpack.c.l.b16 %v306
      %v372 = vunpack.c.l.b16 %v307
      %v373 = vunpack.c.l.b16 %v308
      %v374 = vunpack.c.l.b16 %v309
      %v375 = vunpack.c.l.b16 %v310
      %v376 = vunpack.c.l.b16 %v311
      %v377 = vunpack.c.l.b16 %v312
      %v378 = vunpack.c.l.b16 %v313
      %v379 = vunpack.c.l.b16 %v314
      %v380 = vunpack.c.l.b16 %v315
      %v381 = vunpack.c.l.b16 %v316
      %v382 = vunpack.c.l.b16 %v317
      %v383 = vunpack.c.l.b16 %v318
      %v384 = vunpack.c.l.b16 %v319
      %v385 = vunpack.c.l.b16 %v320
      %v386 = vunpack.c.l.b16 %v321
      %v387 = vunpack.c.l.b16 %v322
      %v388 = vunpack.c.l.b16 %v323
      %v389 = vunpack.c.l.b16 %v324
      %v390 = vunpack.c.l.b16 %v325
      %v391 = vunpack.c.l.b16 %v326
      %v392 = vunpack.c.l.b16 %v327
      %v393 = vpack.c.b16 %v362, %v361
      %v394 = vpack.c.b16 %v364, %v363
      %v395 = vpack.c.b16 %v366, %v365
      %v396 = vpack.c.b16 %v368, %v367
      %v397 = vpack.c.b16 %v370, %v369
      %v398 = vpack.c.b16 %v372, %v371
      %v399 = vpack.c.b16 %v374, %v373
      %v400 = vpack.c.b16 %v376, %v375
      %v401 = vpack.c.b16 %v378, %v377
      %v402 = vpack.c.b16 %v380, %v379
      %v403 = vpack.c.b16 %v382, %v381
      %v404 = vpack.c.b16 %v384, %v383
      %v405 = vpack.c.b16 %v386, %v385
      %v406 = vpack.c.b16 %v388, %v387
      %v407 = vpack.c.b16 %v390, %v389
      %v408 = vpack.c.b16 %v392, %v391
      %vm409 = vcmask 64512
      %v411 = vsel %vm409, %v393, 0
      %v414 = vsel %vm409, %v394, 0
      %v417 = vsel %vm409, %v395, 0
      %v420 = vsel %vm409, %v396, 0
      %v423 = vsel %vm409, %v397, 0
      %v426 = vsel %vm409, %v398, 0
      %v429 = vsel %vm409, %v399, 0
      %v432 = vsel %vm409, %v400, 0
      %v435 = vsel %vm409, %v401, 0
      %v438 = vsel %vm409, %v402, 0
      %v441 = vsel %vm409, %v403, 0
      %v444 = vsel %vm409, %v404, 0
      %v447 = vsel %vm409, %v405, 0
      %v450 = vsel %vm409, %v406, 0
      %v453 = vsel %vm409, %v407, 0
      %v456 = vsel %vm409, %v408, 0
      %vm458 = vcmask 1043456
      %v460 = vsel %vm458, %v328, 0
      %462 = vmatpush.bf16.msra.mxu0 0
      %463 = vmatpush.bf16.msra.mxu0 0
      %464 = vmatpush.bf16.msra.mxu0 0
      %465 = vmatpush.bf16.msra.mxu0 0
      %466 = vmatpush.bf16.msra.mxu0 0
      %467 = vmatpush.bf16.msra.mxu0 0
      %468 = vmatpush.bf16.msra.mxu0 0
      %469 = vmatpush.bf16.msra.mxu0 %v460
      %470 = vmatmul.bf16.gmra.mxu0 %v411
      %v471 = vpop.f32.mrf.mxu0
      %v472 = vadd.f32 0.0, %v471
      %v473 = vpop.f32.mrf.mxu0
      %v474 = vadd.f32 0.0, %v473
      %475 = vmatmul.bf16.gmra.mxu0 %v414
      %v476 = vpop.f32.mrf.mxu0
      %v477 = vadd.f32 0.0, %v476
      %v478 = vpop.f32.mrf.mxu0
      %v479 = vadd.f32 0.0, %v478
      %480 = vmatmul.bf16.gmra.mxu0 %v417
      %v481 = vpop.f32.mrf.mxu0
      %v482 = vadd.f32 0.0, %v481
      %v483 = vpop.f32.mrf.mxu0
      %v484 = vadd.f32 0.0, %v483
      %485 = vmatmul.bf16.gmra.mxu0 %v420
      %v486 = vpop.f32.mrf.mxu0
      %v487 = vadd.f32 0.0, %v486
      %v488 = vpop.f32.mrf.mxu0
      %v489 = vadd.f32 0.0, %v488
      %490 = vmatmul.bf16.gmra.mxu0 %v423
      %v491 = vpop.f32.mrf.mxu0
      %v492 = vadd.f32 0.0, %v491
      %v493 = vpop.f32.mrf.mxu0
      %v494 = vadd.f32 0.0, %v493
      %495 = vmatmul.bf16.gmra.mxu0 %v426
      %v496 = vpop.f32.mrf.mxu0
      %v497 = vadd.f32 0.0, %v496
      %v498 = vpop.f32.mrf.mxu0
      %v499 = vadd.f32 0.0, %v498
      %500 = vmatmul.bf16.gmra.mxu0 %v429
      %v501 = vpop.f32.mrf.mxu0
      %v502 = vadd.f32 0.0, %v501
      %v503 = vpop.f32.mrf.mxu0
      %v504 = vadd.f32 0.0, %v503
      %505 = vmatmul.bf16.gmra.mxu0 %v432
      %v506 = vpop.f32.mrf.mxu0
      %v507 = vadd.f32 0.0, %v506
      %v508 = vpop.f32.mrf.mxu0
      %v509 = vadd.f32 0.0, %v508
      %510 = vmatmul.bf16.gmra.mxu0 %v435
      %v511 = vpop.f32.mrf.mxu0
      %v512 = vadd.f32 0.0, %v511
      %v513 = vpop.f32.mrf.mxu0
      %v514 = vadd.f32 0.0, %v513
      %515 = vmatmul.bf16.gmra.mxu0 %v438
      %v516 = vpop.f32.mrf.mxu0
      %v517 = vadd.f32 0.0, %v516
      %v518 = vpop.f32.mrf.mxu0
      %v519 = vadd.f32 0.0, %v518
      %520 = vmatmul.bf16.gmra.mxu0 %v441
      %v521 = vpop.f32.mrf.mxu0
      %v522 = vadd.f32 0.0, %v521
      %v523 = vpop.f32.mrf.mxu0
      %v524 = vadd.f32 0.0, %v523
      %525 = vmatmul.bf16.gmra.mxu0 %v444
      %v526 = vpop.f32.mrf.mxu0
      %v527 = vadd.f32 0.0, %v526
      %v528 = vpop.f32.mrf.mxu0
      %v529 = vadd.f32 0.0, %v528
      %530 = vmatmul.bf16.gmra.mxu0 %v447
      %v531 = vpop.f32.mrf.mxu0
      %v532 = vadd.f32 0.0, %v531
      %v533 = vpop.f32.mrf.mxu0
      %v534 = vadd.f32 0.0, %v533
      %535 = vmatmul.bf16.gmra.mxu0 %v450
      %v536 = vpop.f32.mrf.mxu0
      %v537 = vadd.f32 0.0, %v536
      %v538 = vpop.f32.mrf.mxu0
      %v539 = vadd.f32 0.0, %v538
      %540 = vmatmul.bf16.gmra.mxu0 %v453
      %v541 = vpop.f32.mrf.mxu0
      %v542 = vadd.f32 0.0, %v541
      %v543 = vpop.f32.mrf.mxu0
      %v544 = vadd.f32 0.0, %v543
      %545 = vmatmul.bf16.gmra.mxu0 %v456
      %v546 = vpop.f32.mrf.mxu0
      %v547 = vadd.f32 0.0, %v546
      %v548 = vpop.f32.mrf.mxu0
      %v549 = vadd.f32 0.0, %v548
      %550 = vdwg.mxu0
      %vm551 = vcmask 130048
      %552 = vst.msk [vmem:[#allocation2] sm:$0xff] %vm551, %v472
      %553 = vst.msk [vmem:[#allocation2 + $0x8] sm:$0xff] %vm551, %v474
      %554 = vst.msk [vmem:[#allocation2 + $0x10] sm:$0xff] %vm551, %v477
      %555 = vst.msk [vmem:[#allocation2 + $0x18] sm:$0xff] %vm551, %v479
      %556 = vst.msk [vmem:[#allocation2 + $0x20] sm:$0xff] %vm551, %v482
      %557 = vst.msk [vmem:[#allocation2 + $0x28] sm:$0xff] %vm551, %v484
      %558 = vst.msk [vmem:[#allocation2 + $0x30] sm:$0xff] %vm551, %v487
      %559 = vst.msk [vmem:[#allocation2 + $0x38] sm:$0xff] %vm551, %v489
      %560 = vst.msk [vmem:[#allocation2 + $0x40] sm:$0xff] %vm551, %v492
      %561 = vst.msk [vmem:[#allocation2 + $0x48] sm:$0xff] %vm551, %v494
      %562 = vst.msk [vmem:[#allocation2 + $0x50] sm:$0xff] %vm551, %v497
      %563 = vst.msk [vmem:[#allocation2 + $0x58] sm:$0xff] %vm551, %v499
      %564 = vst.msk [vmem:[#allocation2 + $0x60] sm:$0xff] %vm551, %v502
      %565 = vst.msk [vmem:[#allocation2 + $0x68] sm:$0xff] %vm551, %v504
      %566 = vst.msk [vmem:[#allocation2 + $0x70] sm:$0xff] %vm551, %v507
      %567 = vst.msk [vmem:[#allocation2 + $0x78] sm:$0xff] %vm551, %v509
      %568 = vst.msk [vmem:[#allocation2 + $0x80] sm:$0xff] %vm551, %v512
      %569 = vst.msk [vmem:[#allocation2 + $0x88] sm:$0xff] %vm551, %v514
      %570 = vst.msk [vmem:[#allocation2 + $0x90] sm:$0xff] %vm551, %v517
      %571 = vst.msk [vmem:[#allocation2 + $0x98] sm:$0xff] %vm551, %v519
      %572 = vst.msk [vmem:[#allocation2 + $0xa0] sm:$0xff] %vm551, %v522
      %573 = vst.msk [vmem:[#allocation2 + $0xa8] sm:$0xff] %vm551, %v524
      %574 = vst.msk [vmem:[#allocation2 + $0xb0] sm:$0xff] %vm551, %v527
      %575 = vst.msk [vmem:[#allocation2 + $0xb8] sm:$0xff] %vm551, %v529
      %576 = vst.msk [vmem:[#allocation2 + $0xc0] sm:$0xff] %vm551, %v532
      %577 = vst.msk [vmem:[#allocation2 + $0xc8] sm:$0xff] %vm551, %v534
      %578 = vst.msk [vmem:[#allocation2 + $0xd0] sm:$0xff] %vm551, %v537
      %579 = vst.msk [vmem:[#allocation2 + $0xd8] sm:$0xff] %vm551, %v539
      %580 = vst.msk [vmem:[#allocation2 + $0xe0] sm:$0xff] %vm551, %v542
      %581 = vst.msk [vmem:[#allocation2 + $0xe8] sm:$0xff] %vm551, %v544
      %582 = vst.msk [vmem:[#allocation2 + $0xf0] sm:$0xff] %vm551, %v547
      %583 = vst.msk [vmem:[#allocation2 + $0xf8] sm:$0xff] %vm551, %v549
      %v584 = vld [vmem:[%s271] sm:$0xf]
      %v585 = vld [vmem:[%s271 + $0x4] sm:$0xf]
      %v586 = vld [vmem:[%s271 + $0x8] sm:$0x1]
      %v587 = vld [vmem:[%s271 + $0xc] sm:$0xf]
      %v588 = vld [vmem:[%s271 + $0x10] sm:$0xf]
      %v589 = vld [vmem:[%s271 + $0x14] sm:$0x1]
      %v590 = vld [vmem:[%s271 + $0x18] sm:$0xf]
      %v591 = vld [vmem:[%s271 + $0x1c] sm:$0xf]
      %v592 = vld [vmem:[%s271 + $0x20] sm:$0x1]
      %v593 = vld [vmem:[%s271 + $0x24] sm:$0xf]
      %v594 = vld [vmem:[%s271 + $0x28] sm:$0xf]
      %v595 = vld [vmem:[%s271 + $0x2c] sm:$0x1]
      %v596 = vld [vmem:[%s271 + $0x30] sm:$0xf]
      %v597 = vld [vmem:[%s271 + $0x34] sm:$0xf]
      %v598 = vld [vmem:[%s271 + $0x38] sm:$0x1]
      %v599 = vld [vmem:[%s271 + $0x3c] sm:$0xf]
      %v600 = vld [vmem:[%s271 + $0x40] sm:$0xf]
      %v601 = vld [vmem:[%s271 + $0x44] sm:$0x1]
      %v602 = vld [vmem:[%s271 + $0x48] sm:$0xf]
      %v603 = vld [vmem:[%s271 + $0x4c] sm:$0xf]
      %v604 = vld [vmem:[%s271 + $0x50] sm:$0x1]
      %v605 = vld [vmem:[%s271 + $0x54] sm:$0xf]
      %v606 = vld [vmem:[%s271 + $0x58] sm:$0xf]
      %v607 = vld [vmem:[%s271 + $0x5c] sm:$0x1]
      %v608 = vld [vmem:[%s271 + $0x60] sm:$0xf]
      %v609 = vld [vmem:[%s271 + $0x64] sm:$0xf]
      %v610 = vld [vmem:[%s271 + $0x68] sm:$0x1]
      %v611 = vld [vmem:[%s271 + $0x6c] sm:$0xf]
      %v612 = vld [vmem:[%s271 + $0x70] sm:$0xf]
      %v613 = vld [vmem:[%s271 + $0x74] sm:$0x1]
      %v614 = vld [vmem:[%s271 + $0x78] sm:$0xf]
      %v615 = vld [vmem:[%s271 + $0x7c] sm:$0xf]
      %v616 = vld [vmem:[%s271 + $0x80] sm:$0x1]
      %v617 = vld [vmem:[%s271 + $0x84] sm:$0xf]
      %v618 = vld [vmem:[%s271 + $0x88] sm:$0xf]
      %v619 = vld [vmem:[%s271 + $0x8c] sm:$0x1]
      %v620 = vld [vmem:[%s271 + $0x90] sm:$0xf]
      %v621 = vld [vmem:[%s271 + $0x94] sm:$0xf]
      %v622 = vld [vmem:[%s271 + $0x98] sm:$0x1]
      %v623 = vld [vmem:[%s271 + $0x9c] sm:$0xf]
      %v624 = vld [vmem:[%s271 + $0xa0] sm:$0xf]
      %v625 = vld [vmem:[%s271 + $0xa4] sm:$0x1]
      %v626 = vld [vmem:[%s271 + $0xa8] sm:$0xf]
      %v627 = vld [vmem:[%s271 + $0xac] sm:$0xf]
      %v628 = vld [vmem:[%s271 + $0xb0] sm:$0x1]
      %v629 = vld [vmem:[%s271 + $0xb4] sm:$0xf]
      %v630 = vld [vmem:[%s271 + $0xb8] sm:$0xf]
      %v631 = vld [vmem:[%s271 + $0xbc] sm:$0x1]
      %vm632 = vsmask.f32 3328
      %vm633 = vsmask.f32 7440
      %vm634 = vmor %vm632, %vm633
      %v636 = vshrl.u32 %v584, 16
      %v638 = vrot.slane %v636, 4
      %v639 = vshll.u32 %v584, 16
      %v641 = vrot.slane %v639, 5
      %v642 = vor.u32 %v638, %v641
      %v643 = vrot.slane %v642, 4
      %v645 = vshll.u32 %v585, 16
      %v647 = vrot.slane %v645, 5
      %v648 = vsel %vm634, %v643, %v647
      %v649 = vshrl.u32 %v585, 16
      %v651 = vrot.slane %v649, 4
      %v652 = vor.u32 %v651, %v647
      %v653 = vrot.slane %v652, 4
      %v655 = vshll.u32 %v586, 16
      %v657 = vrot.slane %v655, 5
      %v658 = vsel %vm634, %v653, %v657
      %v660 = vshrl.u32 %v587, 16
      %v662 = vrot.slane %v660, 4
      %v663 = vshll.u32 %v587, 16
      %v665 = vrot.slane %v663, 5
      %v666 = vor.u32 %v662, %v665
      %v667 = vrot.slane %v666, 4
      %v669 = vshll.u32 %v588, 16
      %v671 = vrot.slane %v669, 5
      %v672 = vsel %vm634, %v667, %v671
      %v673 = vshrl.u32 %v588, 16
      %v675 = vrot.slane %v673, 4
      %v676 = vor.u32 %v675, %v671
      %v677 = vrot.slane %v676, 4
      %v679 = vshll.u32 %v589, 16
      %v681 = vrot.slane %v679, 5
      %v682 = vsel %vm634, %v677, %v681
      %v684 = vshrl.u32 %v590, 16
      %v686 = vrot.slane %v684, 4
      %v687 = vshll.u32 %v590, 16
      %v689 = vrot.slane %v687, 5
      %v690 = vor.u32 %v686, %v689
      %v691 = vrot.slane %v690, 4
      %v693 = vshll.u32 %v591, 16
      %v695 = vrot.slane %v693, 5
      %v696 = vsel %vm634, %v691, %v695
      %v697 = vshrl.u32 %v591, 16
      %v699 = vrot.slane %v697, 4
      %v700 = vor.u32 %v699, %v695
      %v701 = vrot.slane %v700, 4
      %v703 = vshll.u32 %v592, 16
      %v705 = vrot.slane %v703, 5
      %v706 = vsel %vm634, %v701, %v705
      %v708 = vshrl.u32 %v593, 16
      %v710 = vrot.slane %v708, 4
      %v711 = vshll.u32 %v593, 16
      %v713 = vrot.slane %v711, 5
      %v714 = vor.u32 %v710, %v713
      %v715 = vrot.slane %v714, 4
      %v717 = vshll.u32 %v594, 16
      %v719 = vrot.slane %v717, 5
      %v720 = vsel %vm634, %v715, %v719
      %v721 = vshrl.u32 %v594, 16
      %v723 = vrot.slane %v721, 4
      %v724 = vor.u32 %v723, %v719
      %v725 = vrot.slane %v724, 4
      %v727 = vshll.u32 %v595, 16
      %v729 = vrot.slane %v727, 5
      %v730 = vsel %vm634, %v725, %v729
      %v732 = vshrl.u32 %v596, 16
      %v734 = vrot.slane %v732, 4
      %v735 = vshll.u32 %v596, 16
      %v737 = vrot.slane %v735, 5
      %v738 = vor.u32 %v734, %v737
      %v739 = vrot.slane %v738, 4
      %v741 = vshll.u32 %v597, 16
      %v743 = vrot.slane %v741, 5
      %v744 = vsel %vm634, %v739, %v743
      %v745 = vshrl.u32 %v597, 16
      %v747 = vrot.slane %v745, 4
      %v748 = vor.u32 %v747, %v743
      %v749 = vrot.slane %v748, 4
      %v751 = vshll.u32 %v598, 16
      %v753 = vrot.slane %v751, 5
      %v754 = vsel %vm634, %v749, %v753
      %v756 = vshrl.u32 %v599, 16
      %v758 = vrot.slane %v756, 4
      %v759 = vshll.u32 %v599, 16
      %v761 = vrot.slane %v759, 5
      %v762 = vor.u32 %v758, %v761
      %v763 = vrot.slane %v762, 4
      %v765 = vshll.u32 %v600, 16
      %v767 = vrot.slane %v765, 5
      %v768 = vsel %vm634, %v763, %v767
      %v769 = vshrl.u32 %v600, 16
      %v771 = vrot.slane %v769, 4
      %v772 = vor.u32 %v771, %v767
      %v773 = vrot.slane %v772, 4
      %v775 = vshll.u32 %v601, 16
      %v777 = vrot.slane %v775, 5
      %v778 = vsel %vm634, %v773, %v777
      %v780 = vshrl.u32 %v602, 16
      %v782 = vrot.slane %v780, 4
      %v783 = vshll.u32 %v602, 16
      %v785 = vrot.slane %v783, 5
      %v786 = vor.u32 %v782, %v785
      %v787 = vrot.slane %v786, 4
      %v789 = vshll.u32 %v603, 16
      %v791 = vrot.slane %v789, 5
      %v792 = vsel %vm634, %v787, %v791
      %v793 = vshrl.u32 %v603, 16
      %v795 = vrot.slane %v793, 4
      %v796 = vor.u32 %v795, %v791
      %v797 = vrot.slane %v796, 4
      %v799 = vshll.u32 %v604, 16
      %v801 = vrot.slane %v799, 5
      %v802 = vsel %vm634, %v797, %v801
      %v804 = vshrl.u32 %v605, 16
      %v806 = vrot.slane %v804, 4
      %v807 = vshll.u32 %v605, 16
      %v809 = vrot.slane %v807, 5
      %v810 = vor.u32 %v806, %v809
      %v811 = vrot.slane %v810, 4
      %v813 = vshll.u32 %v606, 16
      %v815 = vrot.slane %v813, 5
      %v816 = vsel %vm634, %v811, %v815
      %v817 = vshrl.u32 %v606, 16
      %v819 = vrot.slane %v817, 4
      %v820 = vor.u32 %v819, %v815
      %v821 = vrot.slane %v820, 4
      %v823 = vshll.u32 %v607, 16
      %v825 = vrot.slane %v823, 5
      %v826 = vsel %vm634, %v821, %v825
      %v828 = vshrl.u32 %v608, 16
      %v830 = vrot.slane %v828, 4
      %v831 = vshll.u32 %v608, 16
      %v833 = vrot.slane %v831, 5
      %v834 = vor.u32 %v830, %v833
      %v835 = vrot.slane %v834, 4
      %v837 = vshll.u32 %v609, 16
      %v839 = vrot.slane %v837, 5
      %v840 = vsel %vm634, %v835, %v839
      %v841 = vshrl.u32 %v609, 16
      %v843 = vrot.slane %v841, 4
      %v844 = vor.u32 %v843, %v839
      %v845 = vrot.slane %v844, 4
      %v847 = vshll.u32 %v610, 16
      %v849 = vrot.slane %v847, 5
      %v850 = vsel %vm634, %v845, %v849
      %v852 = vshrl.u32 %v611, 16
      %v854 = vrot.slane %v852, 4
      %v855 = vshll.u32 %v611, 16
      %v857 = vrot.slane %v855, 5
      %v858 = vor.u32 %v854, %v857
      %v859 = vrot.slane %v858, 4
      %v861 = vshll.u32 %v612, 16
      %v863 = vrot.slane %v861, 5
      %v864 = vsel %vm634, %v859, %v863
      %v865 = vshrl.u32 %v612, 16
      %v867 = vrot.slane %v865, 4
      %v868 = vor.u32 %v867, %v863
      %v869 = vrot.slane %v868, 4
      %v871 = vshll.u32 %v613, 16
      %v873 = vrot.slane %v871, 5
      %v874 = vsel %vm634, %v869, %v873
      %v876 = vshrl.u32 %v614, 16
      %v878 = vrot.slane %v876, 4
      %v879 = vshll.u32 %v614, 16
      %v881 = vrot.slane %v879, 5
      %v882 = vor.u32 %v878, %v881
      %v883 = vrot.slane %v882, 4
      %v885 = vshll.u32 %v615, 16
      %v887 = vrot.slane %v885, 5
      %v888 = vsel %vm634, %v883, %v887
      %v889 = vshrl.u32 %v615, 16
      %v891 = vrot.slane %v889, 4
      %v892 = vor.u32 %v891, %v887
      %v893 = vrot.slane %v892, 4
      %v895 = vshll.u32 %v616, 16
      %v897 = vrot.slane %v895, 5
      %v898 = vsel %vm634, %v893, %v897
      %v900 = vshrl.u32 %v617, 16
      %v902 = vrot.slane %v900, 4
      %v903 = vshll.u32 %v617, 16
      %v905 = vrot.slane %v903, 5
      %v906 = vor.u32 %v902, %v905
      %v907 = vrot.slane %v906, 4
      %v909 = vshll.u32 %v618, 16
      %v911 = vrot.slane %v909, 5
      %v912 = vsel %vm634, %v907, %v911
      %v913 = vshrl.u32 %v618, 16
      %v915 = vrot.slane %v913, 4
      %v916 = vor.u32 %v915, %v911
      %v917 = vrot.slane %v916, 4
      %v919 = vshll.u32 %v619, 16
      %v921 = vrot.slane %v919, 5
      %v922 = vsel %vm634, %v917, %v921
      %v924 = vshrl.u32 %v620, 16
      %v926 = vrot.slane %v924, 4
      %v927 = vshll.u32 %v620, 16
      %v929 = vrot.slane %v927, 5
      %v930 = vor.u32 %v926, %v929
      %v931 = vrot.slane %v930, 4
      %v933 = vshll.u32 %v621, 16
      %v935 = vrot.slane %v933, 5
      %v936 = vsel %vm634, %v931, %v935
      %v937 = vshrl.u32 %v621, 16
      %v939 = vrot.slane %v937, 4
      %v940 = vor.u32 %v939, %v935
      %v941 = vrot.slane %v940, 4
      %v943 = vshll.u32 %v622, 16
      %v945 = vrot.slane %v943, 5
      %v946 = vsel %vm634, %v941, %v945
      %v948 = vshrl.u32 %v623, 16
      %v950 = vrot.slane %v948, 4
      %v951 = vshll.u32 %v623, 16
      %v953 = vrot.slane %v951, 5
      %v954 = vor.u32 %v950, %v953
      %v955 = vrot.slane %v954, 4
      %v957 = vshll.u32 %v624, 16
      %v959 = vrot.slane %v957, 5
      %v960 = vsel %vm634, %v955, %v959
      %v961 = vshrl.u32 %v624, 16
      %v963 = vrot.slane %v961, 4
      %v964 = vor.u32 %v963, %v959
      %v965 = vrot.slane %v964, 4
      %v967 = vshll.u32 %v625, 16
      %v969 = vrot.slane %v967, 5
      %v970 = vsel %vm634, %v965, %v969
      %v972 = vshrl.u32 %v626, 16
      %v974 = vrot.slane %v972, 4
      %v975 = vshll.u32 %v626, 16
      %v977 = vrot.slane %v975, 5
      %v978 = vor.u32 %v974, %v977
      %v979 = vrot.slane %v978, 4
      %v981 = vshll.u32 %v627, 16
      %v983 = vrot.slane %v981, 5
      %v984 = vsel %vm634, %v979, %v983
      %v985 = vshrl.u32 %v627, 16
      %v987 = vrot.slane %v985, 4
      %v988 = vor.u32 %v987, %v983
      %v989 = vrot.slane %v988, 4
      %v991 = vshll.u32 %v628, 16
      %v993 = vrot.slane %v991, 5
      %v994 = vsel %vm634, %v989, %v993
      %v996 = vshrl.u32 %v629, 16
      %v998 = vrot.slane %v996, 4
      %v999 = vshll.u32 %v629, 16
      %v1001 = vrot.slane %v999, 5
      %v1002 = vor.u32 %v998, %v1001
      %v1003 = vrot.slane %v1002, 4
      %v1005 = vshll.u32 %v630, 16
      %v1007 = vrot.slane %v1005, 5
      %v1008 = vsel %vm634, %v1003, %v1007
      %v1009 = vshrl.u32 %v630, 16
      %v1011 = vrot.slane %v1009, 4
      %v1012 = vor.u32 %v1011, %v1007
      %v1013 = vrot.slane %v1012, 4
      %v1015 = vshll.u32 %v631, 16
      %v1017 = vrot.slane %v1015, 5
      %v1018 = vsel %vm634, %v1013, %v1017
      %s1019 = scalar_lea.vmem %s275, 4
      %v1020 = vld [vmem:[%s1019] sm:$0xf]
      %v1021 = vunpack.c.l.b16 %v648
      %v1022 = vunpack.c.l.b16 %v658
      %v1023 = vunpack.c.l.b16 %v672
      %v1024 = vunpack.c.l.b16 %v682
      %v1025 = vunpack.c.l.b16 %v696
      %v1026 = vunpack.c.l.b16 %v706
      %v1027 = vunpack.c.l.b16 %v720
      %v1028 = vunpack.c.l.b16 %v730
      %v1029 = vunpack.c.l.b16 %v744
      %v1030 = vunpack.c.l.b16 %v754
      %v1031 = vunpack.c.l.b16 %v768
      %v1032 = vunpack.c.l.b16 %v778
      %v1033 = vunpack.c.l.b16 %v792
      %v1034 = vunpack.c.l.b16 %v802
      %v1035 = vunpack.c.l.b16 %v816
      %v1036 = vunpack.c.l.b16 %v826
      %v1037 = vunpack.c.l.b16 %v840
      %v1038 = vunpack.c.l.b16 %v850
      %v1039 = vunpack.c.l.b16 %v864
      %v1040 = vunpack.c.l.b16 %v874
      %v1041 = vunpack.c.l.b16 %v888
      %v1042 = vunpack.c.l.b16 %v898
      %v1043 = vunpack.c.l.b16 %v912
      %v1044 = vunpack.c.l.b16 %v922
      %v1045 = vunpack.c.l.b16 %v936
      %v1046 = vunpack.c.l.b16 %v946
      %v1047 = vunpack.c.l.b16 %v960
      %v1048 = vunpack.c.l.b16 %v970
      %v1049 = vunpack.c.l.b16 %v984
      %v1050 = vunpack.c.l.b16 %v994
      %v1051 = vunpack.c.l.b16 %v1008
      %v1052 = vunpack.c.l.b16 %v1018
      %v1053 = vpack.c.b16 %v1022, %v1021
      %v1054 = vpack.c.b16 %v1024, %v1023
      %v1055 = vpack.c.b16 %v1026, %v1025
      %v1056 = vpack.c.b16 %v1028, %v1027
      %v1057 = vpack.c.b16 %v1030, %v1029
      %v1058 = vpack.c.b16 %v1032, %v1031
      %v1059 = vpack.c.b16 %v1034, %v1033
      %v1060 = vpack.c.b16 %v1036, %v1035
      %v1061 = vpack.c.b16 %v1038, %v1037
      %v1062 = vpack.c.b16 %v1040, %v1039
      %v1063 = vpack.c.b16 %v1042, %v1041
      %v1064 = vpack.c.b16 %v1044, %v1043
      %v1065 = vpack.c.b16 %v1046, %v1045
      %v1066 = vpack.c.b16 %v1048, %v1047
      %v1067 = vpack.c.b16 %v1050, %v1049
      %v1068 = vpack.c.b16 %v1052, %v1051
      %v1070 = vsel %vm409, %v1053, 0
      %v1073 = vsel %vm409, %v1054, 0
      %v1076 = vsel %vm409, %v1055, 0
      %v1079 = vsel %vm409, %v1056, 0
      %v1082 = vsel %vm409, %v1057, 0
      %v1085 = vsel %vm409, %v1058, 0
      %v1088 = vsel %vm409, %v1059, 0
      %v1091 = vsel %vm409, %v1060, 0
      %v1094 = vsel %vm409, %v1061, 0
      %v1097 = vsel %vm409, %v1062, 0
      %v1100 = vsel %vm409, %v1063, 0
      %v1103 = vsel %vm409, %v1064, 0
      %v1106 = vsel %vm409, %v1065, 0
      %v1109 = vsel %vm409, %v1066, 0
      %v1112 = vsel %vm409, %v1067, 0
      %v1115 = vsel %vm409, %v1068, 0
      %v1118 = vsel %vm458, %v1020, 0
      %1120 = vmatpush.bf16.msra.mxu0 0
      %1121 = vmatpush.bf16.msra.mxu0 0
      %1122 = vmatpush.bf16.msra.mxu0 0
      %1123 = vmatpush.bf16.msra.mxu0 0
      %1124 = vmatpush.bf16.msra.mxu0 0
      %1125 = vmatpush.bf16.msra.mxu0 0
      %1126 = vmatpush.bf16.msra.mxu0 0
      %1127 = vmatpush.bf16.msra.mxu0 %v1118
      %1128 = vmatmul.bf16.gmra.mxu0 %v1070
      %v1129 = vpop.f32.mrf.mxu0
      %v1130 = vadd.f32 0.0, %v1129
      %v1131 = vpop.f32.mrf.mxu0
      %v1132 = vadd.f32 0.0, %v1131
      %1133 = vmatmul.bf16.gmra.mxu0 %v1073
      %v1134 = vpop.f32.mrf.mxu0
      %v1135 = vadd.f32 0.0, %v1134
      %v1136 = vpop.f32.mrf.mxu0
      %v1137 = vadd.f32 0.0, %v1136
      %1138 = vmatmul.bf16.gmra.mxu0 %v1076
      %v1139 = vpop.f32.mrf.mxu0
      %v1140 = vadd.f32 0.0, %v1139
      %v1141 = vpop.f32.mrf.mxu0
      %v1142 = vadd.f32 0.0, %v1141
      %1143 = vmatmul.bf16.gmra.mxu0 %v1079
      %v1144 = vpop.f32.mrf.mxu0
      %v1145 = vadd.f32 0.0, %v1144
      %v1146 = vpop.f32.mrf.mxu0
      %v1147 = vadd.f32 0.0, %v1146
      %1148 = vmatmul.bf16.gmra.mxu0 %v1082
      %v1149 = vpop.f32.mrf.mxu0
      %v1150 = vadd.f32 0.0, %v1149
      %v1151 = vpop.f32.mrf.mxu0
      %v1152 = vadd.f32 0.0, %v1151
      %1153 = vmatmul.bf16.gmra.mxu0 %v1085
      %v1154 = vpop.f32.mrf.mxu0
      %v1155 = vadd.f32 0.0, %v1154
      %v1156 = vpop.f32.mrf.mxu0
      %v1157 = vadd.f32 0.0, %v1156
      %1158 = vmatmul.bf16.gmra.mxu0 %v1088
      %v1159 = vpop.f32.mrf.mxu0
      %v1160 = vadd.f32 0.0, %v1159
      %v1161 = vpop.f32.mrf.mxu0
      %v1162 = vadd.f32 0.0, %v1161
      %1163 = vmatmul.bf16.gmra.mxu0 %v1091
      %v1164 = vpop.f32.mrf.mxu0
      %v1165 = vadd.f32 0.0, %v1164
      %v1166 = vpop.f32.mrf.mxu0
      %v1167 = vadd.f32 0.0, %v1166
      %1168 = vmatmul.bf16.gmra.mxu0 %v1094
      %v1169 = vpop.f32.mrf.mxu0
      %v1170 = vadd.f32 0.0, %v1169
      %v1171 = vpop.f32.mrf.mxu0
      %v1172 = vadd.f32 0.0, %v1171
      %1173 = vmatmul.bf16.gmra.mxu0 %v1097
      %v1174 = vpop.f32.mrf.mxu0
      %v1175 = vadd.f32 0.0, %v1174
      %v1176 = vpop.f32.mrf.mxu0
      %v1177 = vadd.f32 0.0, %v1176
      %1178 = vmatmul.bf16.gmra.mxu0 %v1100
      %v1179 = vpop.f32.mrf.mxu0
      %v1180 = vadd.f32 0.0, %v1179
      %v1181 = vpop.f32.mrf.mxu0
      %v1182 = vadd.f32 0.0, %v1181
      %1183 = vmatmul.bf16.gmra.mxu0 %v1103
      %v1184 = vpop.f32.mrf.mxu0
      %v1185 = vadd.f32 0.0, %v1184
      %v1186 = vpop.f32.mrf.mxu0
      %v1187 = vadd.f32 0.0, %v1186
      %1188 = vmatmul.bf16.gmra.mxu0 %v1106
      %v1189 = vpop.f32.mrf.mxu0
      %v1190 = vadd.f32 0.0, %v1189
      %v1191 = vpop.f32.mrf.mxu0
      %v1192 = vadd.f32 0.0, %v1191
      %1193 = vmatmul.bf16.gmra.mxu0 %v1109
      %v1194 = vpop.f32.mrf.mxu0
      %v1195 = vadd.f32 0.0, %v1194
      %v1196 = vpop.f32.mrf.mxu0
      %v1197 = vadd.f32 0.0, %v1196
      %1198 = vmatmul.bf16.gmra.mxu0 %v1112
      %v1199 = vpop.f32.mrf.mxu0
      %v1200 = vadd.f32 0.0, %v1199
      %v1201 = vpop.f32.mrf.mxu0
      %v1202 = vadd.f32 0.0, %v1201
      %1203 = vmatmul.bf16.gmra.mxu0 %v1115
      %v1204 = vpop.f32.mrf.mxu0
      %v1205 = vadd.f32 0.0, %v1204
      %v1206 = vpop.f32.mrf.mxu0
      %v1207 = vadd.f32 0.0, %v1206
      %1208 = vdwg.mxu0
      %v1209 = vld [vmem:[#allocation2] sm:$0xff]
      %v1210 = vld [vmem:[#allocation2 + $0x8] sm:$0xff]
      %v1211 = vld [vmem:[#allocation2 + $0x10] sm:$0xff]
      %v1212 = vld [vmem:[#allocation2 + $0x18] sm:$0xff]
      %v1213 = vld [vmem:[#allocation2 + $0x20] sm:$0xff]
      %v1214 = vld [vmem:[#allocation2 + $0x28] sm:$0xff]
      %v1215 = vld [vmem:[#allocation2 + $0x30] sm:$0xff]
      %v1216 = vld [vmem:[#allocation2 + $0x38] sm:$0xff]
      %v1217 = vld [vmem:[#allocation2 + $0x40] sm:$0xff]
      %v1218 = vld [vmem:[#allocation2 + $0x48] sm:$0xff]
      %v1219 = vld [vmem:[#allocation2 + $0x50] sm:$0xff]
      %v1220 = vld [vmem:[#allocation2 + $0x58] sm:$0xff]
      %v1221 = vld [vmem:[#allocation2 + $0x60] sm:$0xff]
      %v1222 = vld [vmem:[#allocation2 + $0x68] sm:$0xff]
      %v1223 = vld [vmem:[#allocation2 + $0x70] sm:$0xff]
      %v1224 = vld [vmem:[#allocation2 + $0x78] sm:$0xff]
      %v1225 = vld [vmem:[#allocation2 + $0x80] sm:$0xff]
      %v1226 = vld [vmem:[#allocation2 + $0x88] sm:$0xff]
      %v1227 = vld [vmem:[#allocation2 + $0x90] sm:$0xff]
      %v1228 = vld [vmem:[#allocation2 + $0x98] sm:$0xff]
      %v1229 = vld [vmem:[#allocation2 + $0xa0] sm:$0xff]
      %v1230 = vld [vmem:[#allocation2 + $0xa8] sm:$0xff]
      %v1231 = vld [vmem:[#allocation2 + $0xb0] sm:$0xff]
      %v1232 = vld [vmem:[#allocation2 + $0xb8] sm:$0xff]
      %v1233 = vld [vmem:[#allocation2 + $0xc0] sm:$0xff]
      %v1234 = vld [vmem:[#allocation2 + $0xc8] sm:$0xff]
      %v1235 = vld [vmem:[#allocation2 + $0xd0] sm:$0xff]
      %v1236 = vld [vmem:[#allocation2 + $0xd8] sm:$0xff]
      %v1237 = vld [vmem:[#allocation2 + $0xe0] sm:$0xff]
      %v1238 = vld [vmem:[#allocation2 + $0xe8] sm:$0xff]
      %v1239 = vld [vmem:[#allocation2 + $0xf0] sm:$0xff]
      %v1240 = vld [vmem:[#allocation2 + $0xf8] sm:$0xff]
      %v1241 = vadd.f32 %v1209, %v1130
      %v1242 = vadd.f32 %v1210, %v1132
      %v1243 = vadd.f32 %v1211, %v1135
      %v1244 = vadd.f32 %v1212, %v1137
      %v1245 = vadd.f32 %v1213, %v1140
      %v1246 = vadd.f32 %v1214, %v1142
      %v1247 = vadd.f32 %v1215, %v1145
      %v1248 = vadd.f32 %v1216, %v1147
      %v1249 = vadd.f32 %v1217, %v1150
      %v1250 = vadd.f32 %v1218, %v1152
      %v1251 = vadd.f32 %v1219, %v1155
      %v1252 = vadd.f32 %v1220, %v1157
      %v1253 = vadd.f32 %v1221, %v1160
      %v1254 = vadd.f32 %v1222, %v1162
      %v1255 = vadd.f32 %v1223, %v1165
      %v1256 = vadd.f32 %v1224, %v1167
      %v1257 = vadd.f32 %v1225, %v1170
      %v1258 = vadd.f32 %v1226, %v1172
      %v1259 = vadd.f32 %v1227, %v1175
      %v1260 = vadd.f32 %v1228, %v1177
      %v1261 = vadd.f32 %v1229, %v1180
      %v1262 = vadd.f32 %v1230, %v1182
      %v1263 = vadd.f32 %v1231, %v1185
      %v1264 = vadd.f32 %v1232, %v1187
      %v1265 = vadd.f32 %v1233, %v1190
      %v1266 = vadd.f32 %v1234, %v1192
      %v1267 = vadd.f32 %v1235, %v1195
      %v1268 = vadd.f32 %v1236, %v1197
      %v1269 = vadd.f32 %v1237, %v1200
      %v1270 = vadd.f32 %v1238, %v1202
      %v1271 = vadd.f32 %v1239, %v1205
      %v1272 = vadd.f32 %v1240, %v1207
      %1273 = vst.msk [vmem:[#allocation2] sm:$0xff] %vm551, %v1241
      %1274 = vst.msk [vmem:[#allocation2 + $0x8] sm:$0xff] %vm551, %v1242
      %1275 = vst.msk [vmem:[#allocation2 + $0x10] sm:$0xff] %vm551, %v1243
      %1276 = vst.msk [vmem:[#allocation2 + $0x18] sm:$0xff] %vm551, %v1244
      %1277 = vst.msk [vmem:[#allocation2 + $0x20] sm:$0xff] %vm551, %v1245
      %1278 = vst.msk [vmem:[#allocation2 + $0x28] sm:$0xff] %vm551, %v1246
      %1279 = vst.msk [vmem:[#allocation2 + $0x30] sm:$0xff] %vm551, %v1247
      %1280 = vst.msk [vmem:[#allocation2 + $0x38] sm:$0xff] %vm551, %v1248
      %1281 = vst.msk [vmem:[#allocation2 + $0x40] sm:$0xff] %vm551, %v1249
      %1282 = vst.msk [vmem:[#allocation2 + $0x48] sm:$0xff] %vm551, %v1250
      %1283 = vst.msk [vmem:[#allocation2 + $0x50] sm:$0xff] %vm551, %v1251
      %1284 = vst.msk [vmem:[#allocation2 + $0x58] sm:$0xff] %vm551, %v1252
      %1285 = vst.msk [vmem:[#allocation2 + $0x60] sm:$0xff] %vm551, %v1253
      %1286 = vst.msk [vmem:[#allocation2 + $0x68] sm:$0xff] %vm551, %v1254
      %1287 = vst.msk [vmem:[#allocation2 + $0x70] sm:$0xff] %vm551, %v1255
      %1288 = vst.msk [vmem:[#allocation2 + $0x78] sm:$0xff] %vm551, %v1256
      %1289 = vst.msk [vmem:[#allocation2 + $0x80] sm:$0xff] %vm551, %v1257
      %1290 = vst.msk [vmem:[#allocation2 + $0x88] sm:$0xff] %vm551, %v1258
      %1291 = vst.msk [vmem:[#allocation2 + $0x90] sm:$0xff] %vm551, %v1259
      %1292 = vst.msk [vmem:[#allocation2 + $0x98] sm:$0xff] %vm551, %v1260
      %1293 = vst.msk [vmem:[#allocation2 + $0xa0] sm:$0xff] %vm551, %v1261
      %1294 = vst.msk [vmem:[#allocation2 + $0xa8] sm:$0xff] %vm551, %v1262
      %1295 = vst.msk [vmem:[#allocation2 + $0xb0] sm:$0xff] %vm551, %v1263
      %1296 = vst.msk [vmem:[#allocation2 + $0xb8] sm:$0xff] %vm551, %v1264
      %1297 = vst.msk [vmem:[#allocation2 + $0xc0] sm:$0xff] %vm551, %v1265
      %1298 = vst.msk [vmem:[#allocation2 + $0xc8] sm:$0xff] %vm551, %v1266
      %1299 = vst.msk [vmem:[#allocation2 + $0xd0] sm:$0xff] %vm551, %v1267
      %1300 = vst.msk [vmem:[#allocation2 + $0xd8] sm:$0xff] %vm551, %v1268
      %1301 = vst.msk [vmem:[#allocation2 + $0xe0] sm:$0xff] %vm551, %v1269
      %1302 = vst.msk [vmem:[#allocation2 + $0xe8] sm:$0xff] %vm551, %v1270
      %1303 = vst.msk [vmem:[#allocation2 + $0xf0] sm:$0xff] %vm551, %v1271
      %1304 = vst.msk [vmem:[#allocation2 + $0xf8] sm:$0xff] %vm551, %v1272
      %v1305 = vld [vmem:[%s271] sm:$0xe]
      %v1306 = vld [vmem:[%s271 + $0x4] sm:$0xf]
      %v1307 = vld [vmem:[%s271 + $0x8] sm:$0x1]
      %v1308 = vld [vmem:[%s271 + $0xc] sm:$0xe]
      %v1309 = vld [vmem:[%s271 + $0x10] sm:$0xf]
      %v1310 = vld [vmem:[%s271 + $0x14] sm:$0x1]
      %v1311 = vld [vmem:[%s271 + $0x18] sm:$0xe]
      %v1312 = vld [vmem:[%s271 + $0x1c] sm:$0xf]
      %v1313 = vld [vmem:[%s271 + $0x20] sm:$0x1]
      %v1314 = vld [vmem:[%s271 + $0x24] sm:$0xe]
      %v1315 = vld [vmem:[%s271 + $0x28] sm:$0xf]
      %v1316 = vld [vmem:[%s271 + $0x2c] sm:$0x1]
      %v1317 = vld [vmem:[%s271 + $0x30] sm:$0xe]
      %v1318 = vld [vmem:[%s271 + $0x34] sm:$0xf]
      %v1319 = vld [vmem:[%s271 + $0x38] sm:$0x1]
      %v1320 = vld [vmem:[%s271 + $0x3c] sm:$0xe]
      %v1321 = vld [vmem:[%s271 + $0x40] sm:$0xf]
      %v1322 = vld [vmem:[%s271 + $0x44] sm:$0x1]
      %v1323 = vld [vmem:[%s271 + $0x48] sm:$0xe]
      %v1324 = vld [vmem:[%s271 + $0x4c] sm:$0xf]
      %v1325 = vld [vmem:[%s271 + $0x50] sm:$0x1]
      %v1326 = vld [vmem:[%s271 + $0x54] sm:$0xe]
      %v1327 = vld [vmem:[%s271 + $0x58] sm:$0xf]
      %v1328 = vld [vmem:[%s271 + $0x5c] sm:$0x1]
      %v1329 = vld [vmem:[%s271 + $0x60] sm:$0xe]
      %v1330 = vld [vmem:[%s271 + $0x64] sm:$0xf]
      %v1331 = vld [vmem:[%s271 + $0x68] sm:$0x1]
      %v1332 = vld [vmem:[%s271 + $0x6c] sm:$0xe]
      %v1333 = vld [vmem:[%s271 + $0x70] sm:$0xf]
      %v1334 = vld [vmem:[%s271 + $0x74] sm:$0x1]
      %v1335 = vld [vmem:[%s271 + $0x78] sm:$0xe]
      %v1336 = vld [vmem:[%s271 + $0x7c] sm:$0xf]
      %v1337 = vld [vmem:[%s271 + $0x80] sm:$0x1]
      %v1338 = vld [vmem:[%s271 + $0x84] sm:$0xe]
      %v1339 = vld [vmem:[%s271 + $0x88] sm:$0xf]
      %v1340 = vld [vmem:[%s271 + $0x8c] sm:$0x1]
      %v1341 = vld [vmem:[%s271 + $0x90] sm:$0xe]
      %v1342 = vld [vmem:[%s271 + $0x94] sm:$0xf]
      %v1343 = vld [vmem:[%s271 + $0x98] sm:$0x1]
      %v1344 = vld [vmem:[%s271 + $0x9c] sm:$0xe]
      %v1345 = vld [vmem:[%s271 + $0xa0] sm:$0xf]
      %v1346 = vld [vmem:[%s271 + $0xa4] sm:$0x1]
      %v1347 = vld [vmem:[%s271 + $0xa8] sm:$0xe]
      %v1348 = vld [vmem:[%s271 + $0xac] sm:$0xf]
      %v1349 = vld [vmem:[%s271 + $0xb0] sm:$0x1]
      %v1350 = vld [vmem:[%s271 + $0xb4] sm:$0xe]
      %v1351 = vld [vmem:[%s271 + $0xb8] sm:$0xf]
      %v1352 = vld [vmem:[%s271 + $0xbc] sm:$0x1]
      %vm1401 = vcmask 1042432
      %vm1402 = vcmask 1046532
      %vm1403 = vmor %vm1401, %vm1402
      %v1404 = vrot.slane %v1305, 5
      %v1405 = vrot.slane %v1404, 4
      %v1406 = vrot.slane %v1306, 5
      %v1407 = vsel %vm1403, %v1405, %v1406
      %v1408 = vrot.slane %v1406, 4
      %v1409 = vrot.slane %v1307, 5
      %v1410 = vsel %vm1403, %v1408, %v1409
      %v1411 = vrot.slane %v1308, 5
      %v1412 = vrot.slane %v1411, 4
      %v1413 = vrot.slane %v1309, 5
      %v1414 = vsel %vm1403, %v1412, %v1413
      %v1415 = vrot.slane %v1413, 4
      %v1416 = vrot.slane %v1310, 5
      %v1417 = vsel %vm1403, %v1415, %v1416
      %v1418 = vrot.slane %v1311, 5
      %v1419 = vrot.slane %v1418, 4
      %v1420 = vrot.slane %v1312, 5
      %v1421 = vsel %vm1403, %v1419, %v1420
      %v1422 = vrot.slane %v1420, 4
      %v1423 = vrot.slane %v1313, 5
      %v1424 = vsel %vm1403, %v1422, %v1423
      %v1425 = vrot.slane %v1314, 5
      %v1426 = vrot.slane %v1425, 4
      %v1427 = vrot.slane %v1315, 5
      %v1428 = vsel %vm1403, %v1426, %v1427
      %v1429 = vrot.slane %v1427, 4
      %v1430 = vrot.slane %v1316, 5
      %v1431 = vsel %vm1403, %v1429, %v1430
      %v1432 = vrot.slane %v1317, 5
      %v1433 = vrot.slane %v1432, 4
      %v1434 = vrot.slane %v1318, 5
      %v1435 = vsel %vm1403, %v1433, %v1434
      %v1436 = vrot.slane %v1434, 4
      %v1437 = vrot.slane %v1319, 5
      %v1438 = vsel %vm1403, %v1436, %v1437
      %v1439 = vrot.slane %v1320, 5
      %v1440 = vrot.slane %v1439, 4
      %v1441 = vrot.slane %v1321, 5
      %v1442 = vsel %vm1403, %v1440, %v1441
      %v1443 = vrot.slane %v1441, 4
      %v1444 = vrot.slane %v1322, 5
      %v1445 = vsel %vm1403, %v1443, %v1444
      %v1446 = vrot.slane %v1323, 5
      %v1447 = vrot.slane %v1446, 4
      %v1448 = vrot.slane %v1324, 5
      %v1449 = vsel %vm1403, %v1447, %v1448
      %v1450 = vrot.slane %v1448, 4
      %v1451 = vrot.slane %v1325, 5
      %v1452 = vsel %vm1403, %v1450, %v1451
      %v1453 = vrot.slane %v1326, 5
      %v1454 = vrot.slane %v1453, 4
      %v1455 = vrot.slane %v1327, 5
      %v1456 = vsel %vm1403, %v1454, %v1455
      %v1457 = vrot.slane %v1455, 4
      %v1458 = vrot.slane %v1328, 5
      %v1459 = vsel %vm1403, %v1457, %v1458
      %v1460 = vrot.slane %v1329, 5
      %v1461 = vrot.slane %v1460, 4
      %v1462 = vrot.slane %v1330, 5
      %v1463 = vsel %vm1403, %v1461, %v1462
      %v1464 = vrot.slane %v1462, 4
      %v1465 = vrot.slane %v1331, 5
      %v1466 = vsel %vm1403, %v1464, %v1465
      %v1467 = vrot.slane %v1332, 5
      %v1468 = vrot.slane %v1467, 4
      %v1469 = vrot.slane %v1333, 5
      %v1470 = vsel %vm1403, %v1468, %v1469
      %v1471 = vrot.slane %v1469, 4
      %v1472 = vrot.slane %v1334, 5
      %v1473 = vsel %vm1403, %v1471, %v1472
      %v1474 = vrot.slane %v1335, 5
      %v1475 = vrot.slane %v1474, 4
      %v1476 = vrot.slane %v1336, 5
      %v1477 = vsel %vm1403, %v1475, %v1476
      %v1478 = vrot.slane %v1476, 4
      %v1479 = vrot.slane %v1337, 5
      %v1480 = vsel %vm1403, %v1478, %v1479
      %v1481 = vrot.slane %v1338, 5
      %v1482 = vrot.slane %v1481, 4
      %v1483 = vrot.slane %v1339, 5
      %v1484 = vsel %vm1403, %v1482, %v1483
      %v1485 = vrot.slane %v1483, 4
      %v1486 = vrot.slane %v1340, 5
      %v1487 = vsel %vm1403, %v1485, %v1486
      %v1488 = vrot.slane %v1341, 5
      %v1489 = vrot.slane %v1488, 4
      %v1490 = vrot.slane %v1342, 5
      %v1491 = vsel %vm1403, %v1489, %v1490
      %v1492 = vrot.slane %v1490, 4
      %v1493 = vrot.slane %v1343, 5
      %v1494 = vsel %vm1403, %v1492, %v1493
      %v1495 = vrot.slane %v1344, 5
      %v1496 = vrot.slane %v1495, 4
      %v1497 = vrot.slane %v1345, 5
      %v1498 = vsel %vm1403, %v1496, %v1497
      %v1499 = vrot.slane %v1497, 4
      %v1500 = vrot.slane %v1346, 5
      %v1501 = vsel %vm1403, %v1499, %v1500
      %v1502 = vrot.slane %v1347, 5
      %v1503 = vrot.slane %v1502, 4
      %v1504 = vrot.slane %v1348, 5
      %v1505 = vsel %vm1403, %v1503, %v1504
      %v1506 = vrot.slane %v1504, 4
      %v1507 = vrot.slane %v1349, 5
      %v1508 = vsel %vm1403, %v1506, %v1507
      %v1509 = vrot.slane %v1350, 5
      %v1510 = vrot.slane %v1509, 4
      %v1511 = vrot.slane %v1351, 5
      %v1512 = vsel %vm1403, %v1510, %v1511
      %v1513 = vrot.slane %v1511, 4
      %v1514 = vrot.slane %v1352, 5
      %v1515 = vsel %vm1403, %v1513, %v1514
      %s1516 = scalar_lea.vmem %s275, 8
      %v1517 = vld [vmem:[%s1516] sm:$0xf]
      %v1518 = vunpack.c.l.b16 %v1407
      %v1519 = vunpack.c.l.b16 %v1410
      %v1520 = vunpack.c.l.b16 %v1414
      %v1521 = vunpack.c.l.b16 %v1417
      %v1522 = vunpack.c.l.b16 %v1421
      %v1523 = vunpack.c.l.b16 %v1424
      %v1524 = vunpack.c.l.b16 %v1428
      %v1525 = vunpack.c.l.b16 %v1431
      %v1526 = vunpack.c.l.b16 %v1435
      %v1527 = vunpack.c.l.b16 %v1438
      %v1528 = vunpack.c.l.b16 %v1442
      %v1529 = vunpack.c.l.b16 %v1445
      %v1530 = vunpack.c.l.b16 %v1449
      %v1531 = vunpack.c.l.b16 %v1452
      %v1532 = vunpack.c.l.b16 %v1456
      %v1533 = vunpack.c.l.b16 %v1459
      %v1534 = vunpack.c.l.b16 %v1463
      %v1535 = vunpack.c.l.b16 %v1466
      %v1536 = vunpack.c.l.b16 %v1470
      %v1537 = vunpack.c.l.b16 %v1473
      %v1538 = vunpack.c.l.b16 %v1477
      %v1539 = vunpack.c.l.b16 %v1480
      %v1540 = vunpack.c.l.b16 %v1484
      %v1541 = vunpack.c.l.b16 %v1487
      %v1542 = vunpack.c.l.b16 %v1491
      %v1543 = vunpack.c.l.b16 %v1494
      %v1544 = vunpack.c.l.b16 %v1498
      %v1545 = vunpack.c.l.b16 %v1501
      %v1546 = vunpack.c.l.b16 %v1505
      %v1547 = vunpack.c.l.b16 %v1508
      %v1548 = vunpack.c.l.b16 %v1512
      %v1549 = vunpack.c.l.b16 %v1515
      %v1550 = vpack.c.b16 %v1519, %v1518
      %v1551 = vpack.c.b16 %v1521, %v1520
      %v1552 = vpack.c.b16 %v1523, %v1522
      %v1553 = vpack.c.b16 %v1525, %v1524
      %v1554 = vpack.c.b16 %v1527, %v1526
      %v1555 = vpack.c.b16 %v1529, %v1528
      %v1556 = vpack.c.b16 %v1531, %v1530
      %v1557 = vpack.c.b16 %v1533, %v1532
      %v1558 = vpack.c.b16 %v1535, %v1534
      %v1559 = vpack.c.b16 %v1537, %v1536
      %v1560 = vpack.c.b16 %v1539, %v1538
      %v1561 = vpack.c.b16 %v1541, %v1540
      %v1562 = vpack.c.b16 %v1543, %v1542
      %v1563 = vpack.c.b16 %v1545, %v1544
      %v1564 = vpack.c.b16 %v1547, %v1546
      %v1565 = vpack.c.b16 %v1549, %v1548
      %v1567 = vsel %vm409, %v1550, 0
      %v1570 = vsel %vm409, %v1551, 0
      %v1573 = vsel %vm409, %v1552, 0
      %v1576 = vsel %vm409, %v1553, 0
      %v1579 = vsel %vm409, %v1554, 0
      %v1582 = vsel %vm409, %v1555, 0
      %v1585 = vsel %vm409, %v1556, 0
      %v1588 = vsel %vm409, %v1557, 0
      %v1591 = vsel %vm409, %v1558, 0
      %v1594 = vsel %vm409, %v1559, 0
      %v1597 = vsel %vm409, %v1560, 0
      %v1600 = vsel %vm409, %v1561, 0
      %v1603 = vsel %vm409, %v1562, 0
      %v1606 = vsel %vm409, %v1563, 0
      %v1609 = vsel %vm409, %v1564, 0
      %v1612 = vsel %vm409, %v1565, 0
      %v1615 = vsel %vm458, %v1517, 0
      %1617 = vmatpush.bf16.msra.mxu0 0
      %1618 = vmatpush.bf16.msra.mxu0 0
      %1619 = vmatpush.bf16.msra.mxu0 0
      %1620 = vmatpush.bf16.msra.mxu0 0
      %1621 = vmatpush.bf16.msra.mxu0 0
      %1622 = vmatpush.bf16.msra.mxu0 0
      %1623 = vmatpush.bf16.msra.mxu0 0
      %1624 = vmatpush.bf16.msra.mxu0 %v1615
      %1625 = vmatmul.bf16.gmra.mxu0 %v1567
      %v1626 = vpop.f32.mrf.mxu0
      %v1627 = vadd.f32 0.0, %v1626
      %v1628 = vpop.f32.mrf.mxu0
      %v1629 = vadd.f32 0.0, %v1628
      %1630 = vmatmul.bf16.gmra.mxu0 %v1570
      %v1631 = vpop.f32.mrf.mxu0
      %v1632 = vadd.f32 0.0, %v1631
      %v1633 = vpop.f32.mrf.mxu0
      %v1634 = vadd.f32 0.0, %v1633
      %1635 = vmatmul.bf16.gmra.mxu0 %v1573
      %v1636 = vpop.f32.mrf.mxu0
      %v1637 = vadd.f32 0.0, %v1636
      %v1638 = vpop.f32.mrf.mxu0
      %v1639 = vadd.f32 0.0, %v1638
      %1640 = vmatmul.bf16.gmra.mxu0 %v1576
      %v1641 = vpop.f32.mrf.mxu0
      %v1642 = vadd.f32 0.0, %v1641
      %v1643 = vpop.f32.mrf.mxu0
      %v1644 = vadd.f32 0.0, %v1643
      %1645 = vmatmul.bf16.gmra.mxu0 %v1579
      %v1646 = vpop.f32.mrf.mxu0
      %v1647 = vadd.f32 0.0, %v1646
      %v1648 = vpop.f32.mrf.mxu0
      %v1649 = vadd.f32 0.0, %v1648
      %1650 = vmatmul.bf16.gmra.mxu0 %v1582
      %v1651 = vpop.f32.mrf.mxu0
      %v1652 = vadd.f32 0.0, %v1651
      %v1653 = vpop.f32.mrf.mxu0
      %v1654 = vadd.f32 0.0, %v1653
      %1655 = vmatmul.bf16.gmra.mxu0 %v1585
      %v1656 = vpop.f32.mrf.mxu0
      %v1657 = vadd.f32 0.0, %v1656
      %v1658 = vpop.f32.mrf.mxu0
      %v1659 = vadd.f32 0.0, %v1658
      %1660 = vmatmul.bf16.gmra.mxu0 %v1588
      %v1661 = vpop.f32.mrf.mxu0
      %v1662 = vadd.f32 0.0, %v1661
      %v1663 = vpop.f32.mrf.mxu0
      %v1664 = vadd.f32 0.0, %v1663
      %1665 = vmatmul.bf16.gmra.mxu0 %v1591
      %v1666 = vpop.f32.mrf.mxu0
      %v1667 = vadd.f32 0.0, %v1666
      %v1668 = vpop.f32.mrf.mxu0
      %v1669 = vadd.f32 0.0, %v1668
      %1670 = vmatmul.bf16.gmra.mxu0 %v1594
      %v1671 = vpop.f32.mrf.mxu0
      %v1672 = vadd.f32 0.0, %v1671
      %v1673 = vpop.f32.mrf.mxu0
      %v1674 = vadd.f32 0.0, %v1673
      %1675 = vmatmul.bf16.gmra.mxu0 %v1597
      %v1676 = vpop.f32.mrf.mxu0
      %v1677 = vadd.f32 0.0, %v1676
      %v1678 = vpop.f32.mrf.mxu0
      %v1679 = vadd.f32 0.0, %v1678
      %1680 = vmatmul.bf16.gmra.mxu0 %v1600
      %v1681 = vpop.f32.mrf.mxu0
      %v1682 = vadd.f32 0.0, %v1681
      %v1683 = vpop.f32.mrf.mxu0
      %v1684 = vadd.f32 0.0, %v1683
      %1685 = vmatmul.bf16.gmra.mxu0 %v1603
      %v1686 = vpop.f32.mrf.mxu0
      %v1687 = vadd.f32 0.0, %v1686
      %v1688 = vpop.f32.mrf.mxu0
      %v1689 = vadd.f32 0.0, %v1688
      %1690 = vmatmul.bf16.gmra.mxu0 %v1606
      %v1691 = vpop.f32.mrf.mxu0
      %v1692 = vadd.f32 0.0, %v1691
      %v1693 = vpop.f32.mrf.mxu0
      %v1694 = vadd.f32 0.0, %v1693
      %1695 = vmatmul.bf16.gmra.mxu0 %v1609
      %v1696 = vpop.f32.mrf.mxu0
      %v1697 = vadd.f32 0.0, %v1696
      %v1698 = vpop.f32.mrf.mxu0
      %v1699 = vadd.f32 0.0, %v1698
      %1700 = vmatmul.bf16.gmra.mxu0 %v1612
      %v1701 = vpop.f32.mrf.mxu0
      %v1702 = vadd.f32 0.0, %v1701
      %v1703 = vpop.f32.mrf.mxu0
      %v1704 = vadd.f32 0.0, %v1703
      %1705 = vdwg.mxu0
      %v1706 = vld [vmem:[#allocation2] sm:$0xff]
      %v1707 = vld [vmem:[#allocation2 + $0x8] sm:$0xff]
      %v1708 = vld [vmem:[#allocation2 + $0x10] sm:$0xff]
      %v1709 = vld [vmem:[#allocation2 + $0x18] sm:$0xff]
      %v1710 = vld [vmem:[#allocation2 + $0x20] sm:$0xff]
      %v1711 = vld [vmem:[#allocation2 + $0x28] sm:$0xff]
      %v1712 = vld [vmem:[#allocation2 + $0x30] sm:$0xff]
      %v1713 = vld [vmem:[#allocation2 + $0x38] sm:$0xff]
      %v1714 = vld [vmem:[#allocation2 + $0x40] sm:$0xff]
      %v1715 = vld [vmem:[#allocation2 + $0x48] sm:$0xff]
      %v1716 = vld [vmem:[#allocation2 + $0x50] sm:$0xff]
      %v1717 = vld [vmem:[#allocation2 + $0x58] sm:$0xff]
      %v1718 = vld [vmem:[#allocation2 + $0x60] sm:$0xff]
      %v1719 = vld [vmem:[#allocation2 + $0x68] sm:$0xff]
      %v1720 = vld [vmem:[#allocation2 + $0x70] sm:$0xff]
      %v1721 = vld [vmem:[#allocation2 + $0x78] sm:$0xff]
      %v1722 = vld [vmem:[#allocation2 + $0x80] sm:$0xff]
      %v1723 = vld [vmem:[#allocation2 + $0x88] sm:$0xff]
      %v1724 = vld [vmem:[#allocation2 + $0x90] sm:$0xff]
      %v1725 = vld [vmem:[#allocation2 + $0x98] sm:$0xff]
      %v1726 = vld [vmem:[#allocation2 + $0xa0] sm:$0xff]
      %v1727 = vld [vmem:[#allocation2 + $0xa8] sm:$0xff]
      %v1728 = vld [vmem:[#allocation2 + $0xb0] sm:$0xff]
      %v1729 = vld [vmem:[#allocation2 + $0xb8] sm:$0xff]
      %v1730 = vld [vmem:[#allocation2 + $0xc0] sm:$0xff]
      %v1731 = vld [vmem:[#allocation2 + $0xc8] sm:$0xff]
      %v1732 = vld [vmem:[#allocation2 + $0xd0] sm:$0xff]
      %v1733 = vld [vmem:[#allocation2 + $0xd8] sm:$0xff]
      %v1734 = vld [vmem:[#allocation2 + $0xe0] sm:$0xff]
      %v1735 = vld [vmem:[#allocation2 + $0xe8] sm:$0xff]
      %v1736 = vld [vmem:[#allocation2 + $0xf0] sm:$0xff]
      %v1737 = vld [vmem:[#allocation2 + $0xf8] sm:$0xff]
      %v1738 = vadd.f32 %v1706, %v1627
      %v1739 = vadd.f32 %v1707, %v1629
      %v1740 = vadd.f32 %v1708, %v1632
      %v1741 = vadd.f32 %v1709, %v1634
      %v1742 = vadd.f32 %v1710, %v1637
      %v1743 = vadd.f32 %v1711, %v1639
      %v1744 = vadd.f32 %v1712, %v1642
      %v1745 = vadd.f32 %v1713, %v1644
      %v1746 = vadd.f32 %v1714, %v1647
      %v1747 = vadd.f32 %v1715, %v1649
      %v1748 = vadd.f32 %v1716, %v1652
      %v1749 = vadd.f32 %v1717, %v1654
      %v1750 = vadd.f32 %v1718, %v1657
      %v1751 = vadd.f32 %v1719, %v1659
      %v1752 = vadd.f32 %v1720, %v1662
      %v1753 = vadd.f32 %v1721, %v1664
      %v1754 = vadd.f32 %v1722, %v1667
      %v1755 = vadd.f32 %v1723, %v1669
      %v1756 = vadd.f32 %v1724, %v1672
      %v1757 = vadd.f32 %v1725, %v1674
      %v1758 = vadd.f32 %v1726, %v1677
      %v1759 = vadd.f32 %v1727, %v1679
      %v1760 = vadd.f32 %v1728, %v1682
      %v1761 = vadd.f32 %v1729, %v1684
      %v1762 = vadd.f32 %v1730, %v1687
      %v1763 = vadd.f32 %v1731, %v1689
      %v1764 = vadd.f32 %v1732, %v1692
      %v1765 = vadd.f32 %v1733, %v1694
      %v1766 = vadd.f32 %v1734, %v1697
      %v1767 = vadd.f32 %v1735, %v1699
      %v1768 = vadd.f32 %v1736, %v1702
      %v1769 = vadd.f32 %v1737, %v1704
      %1770 = vst.msk [vmem:[#allocation2] sm:$0xff] %vm551, %v1738
      %1771 = vst.msk [vmem:[#allocation2 + $0x8] sm:$0xff] %vm551, %v1739
      %1772 = vst.msk [vmem:[#allocation2 + $0x10] sm:$0xff] %vm551, %v1740
      %1773 = vst.msk [vmem:[#allocation2 + $0x18] sm:$0xff] %vm551, %v1741
      %1774 = vst.msk [vmem:[#allocation2 + $0x20] sm:$0xff] %vm551, %v1742
      %1775 = vst.msk [vmem:[#allocation2 + $0x28] sm:$0xff] %vm551, %v1743
      %1776 = vst.msk [vmem:[#allocation2 + $0x30] sm:$0xff] %vm551, %v1744
      %1777 = vst.msk [vmem:[#allocation2 + $0x38] sm:$0xff] %vm551, %v1745
      %1778 = vst.msk [vmem:[#allocation2 + $0x40] sm:$0xff] %vm551, %v1746
      %1779 = vst.msk [vmem:[#allocation2 + $0x48] sm:$0xff] %vm551, %v1747
      %1780 = vst.msk [vmem:[#allocation2 + $0x50] sm:$0xff] %vm551, %v1748
      %1781 = vst.msk [vmem:[#allocation2 + $0x58] sm:$0xff] %vm551, %v1749
      %1782 = vst.msk [vmem:[#allocation2 + $0x60] sm:$0xff] %vm551, %v1750
      %1783 = vst.msk [vmem:[#allocation2 + $0x68] sm:$0xff] %vm551, %v1751
      %1784 = vst.msk [vmem:[#allocation2 + $0x70] sm:$0xff] %vm551, %v1752
      %1785 = vst.msk [vmem:[#allocation2 + $0x78] sm:$0xff] %vm551, %v1753
      %1786 = vst.msk [vmem:[#allocation2 + $0x80] sm:$0xff] %vm551, %v1754
      %1787 = vst.msk [vmem:[#allocation2 + $0x88] sm:$0xff] %vm551, %v1755
      %1788 = vst.msk [vmem:[#allocation2 + $0x90] sm:$0xff] %vm551, %v1756
      %1789 = vst.msk [vmem:[#allocation2 + $0x98] sm:$0xff] %vm551, %v1757
      %1790 = vst.msk [vmem:[#allocation2 + $0xa0] sm:$0xff] %vm551, %v1758
      %1791 = vst.msk [vmem:[#allocation2 + $0xa8] sm:$0xff] %vm551, %v1759
      %1792 = vst.msk [vmem:[#allocation2 + $0xb0] sm:$0xff] %vm551, %v1760
      %1793 = vst.msk [vmem:[#allocation2 + $0xb8] sm:$0xff] %vm551, %v1761
      %1794 = vst.msk [vmem:[#allocation2 + $0xc0] sm:$0xff] %vm551, %v1762
      %1795 = vst.msk [vmem:[#allocation2 + $0xc8] sm:$0xff] %vm551, %v1763
      %1796 = vst.msk [vmem:[#allocation2 + $0xd0] sm:$0xff] %vm551, %v1764
      %1797 = vst.msk [vmem:[#allocation2 + $0xd8] sm:$0xff] %vm551, %v1765
      %1798 = vst.msk [vmem:[#allocation2 + $0xe0] sm:$0xff] %vm551, %v1766
      %1799 = vst.msk [vmem:[#allocation2 + $0xe8] sm:$0xff] %vm551, %v1767
      %1800 = vst.msk [vmem:[#allocation2 + $0xf0] sm:$0xff] %vm551, %v1768
      %1801 = vst.msk [vmem:[#allocation2 + $0xf8] sm:$0xff] %vm551, %v1769
      %s1802 = scalar_lea.vmem %s271, 12
      %v1803 = vld [vmem:[%s1802] sm:$0xf]
      %v1804 = vld [vmem:[%s1802 + $0x4] sm:$0xf]
      %v1805 = vld [vmem:[%s1802 + $0xc] sm:$0xf]
      %v1806 = vld [vmem:[%s1802 + $0x10] sm:$0xf]
      %v1807 = vld [vmem:[%s1802 + $0x18] sm:$0xf]
      %v1808 = vld [vmem:[%s1802 + $0x1c] sm:$0xf]
      %v1809 = vld [vmem:[%s1802 + $0x24] sm:$0xf]
      %v1810 = vld [vmem:[%s1802 + $0x28] sm:$0xf]
      %v1811 = vld [vmem:[%s1802 + $0x30] sm:$0xf]
      %v1812 = vld [vmem:[%s1802 + $0x34] sm:$0xf]
      %v1813 = vld [vmem:[%s1802 + $0x3c] sm:$0xf]
      %v1814 = vld [vmem:[%s1802 + $0x40] sm:$0xf]
      %v1815 = vld [vmem:[%s1802 + $0x48] sm:$0xf]
      %v1816 = vld [vmem:[%s1802 + $0x4c] sm:$0xf]
      %v1817 = vld [vmem:[%s1802 + $0x54] sm:$0xf]
      %v1818 = vld [vmem:[%s1802 + $0x58] sm:$0xf]
      %v1819 = vld [vmem:[%s1802 + $0x60] sm:$0xf]
      %v1820 = vld [vmem:[%s1802 + $0x64] sm:$0xf]
      %v1821 = vld [vmem:[%s1802 + $0x6c] sm:$0xf]
      %v1822 = vld [vmem:[%s1802 + $0x70] sm:$0xf]
      %v1823 = vld [vmem:[%s1802 + $0x78] sm:$0xf]
      %v1824 = vld [vmem:[%s1802 + $0x7c] sm:$0xf]
      %v1825 = vld [vmem:[%s1802 + $0x84] sm:$0xf]
      %v1826 = vld [vmem:[%s1802 + $0x88] sm:$0xf]
      %v1827 = vld [vmem:[%s1802 + $0x90] sm:$0xf]
      %v1828 = vld [vmem:[%s1802 + $0x94] sm:$0xf]
      %v1829 = vld [vmem:[%s1802 + $0x9c] sm:$0xf]
      %v1830 = vld [vmem:[%s1802 + $0xa0] sm:$0xf]
      %v1831 = vld [vmem:[%s1802 + $0xa8] sm:$0xf]
      %v1832 = vld [vmem:[%s1802 + $0xac] sm:$0xf]
      %v1833 = vld [vmem:[%s1802 + $0xb4] sm:$0xf]
      %v1834 = vld [vmem:[%s1802 + $0xb8] sm:$0xf]
      %s1835 = scalar_lea.vmem %s275, 12
      %v1836 = vld [vmem:[%s1835] sm:$0xf]
      %v1869 = vunpack.c.l.b16 %v1803
      %v1870 = vunpack.c.l.b16 %v1804
      %v1871 = vunpack.c.l.b16 %v1805
      %v1872 = vunpack.c.l.b16 %v1806
      %v1873 = vunpack.c.l.b16 %v1807
      %v1874 = vunpack.c.l.b16 %v1808
      %v1875 = vunpack.c.l.b16 %v1809
      %v1876 = vunpack.c.l.b16 %v1810
      %v1877 = vunpack.c.l.b16 %v1811
      %v1878 = vunpack.c.l.b16 %v1812
      %v1879 = vunpack.c.l.b16 %v1813
      %v1880 = vunpack.c.l.b16 %v1814
      %v1881 = vunpack.c.l.b16 %v1815
      %v1882 = vunpack.c.l.b16 %v1816
      %v1883 = vunpack.c.l.b16 %v1817
      %v1884 = vunpack.c.l.b16 %v1818
      %v1885 = vunpack.c.l.b16 %v1819
      %v1886 = vunpack.c.l.b16 %v1820
      %v1887 = vunpack.c.l.b16 %v1821
      %v1888 = vunpack.c.l.b16 %v1822
      %v1889 = vunpack.c.l.b16 %v1823
      %v1890 = vunpack.c.l.b16 %v1824
      %v1891 = vunpack.c.l.b16 %v1825
      %v1892 = vunpack.c.l.b16 %v1826
      %v1893 = vunpack.c.l.b16 %v1827
      %v1894 = vunpack.c.l.b16 %v1828
      %v1895 = vunpack.c.l.b16 %v1829
      %v1896 = vunpack.c.l.b16 %v1830
      %v1897 = vunpack.c.l.b16 %v1831
      %v1898 = vunpack.c.l.b16 %v1832
      %v1899 = vunpack.c.l.b16 %v1833
      %v1900 = vunpack.c.l.b16 %v1834
      %v1901 = vpack.c.b16 %v1870, %v1869
      %v1902 = vpack.c.b16 %v1872, %v1871
      %v1903 = vpack.c.b16 %v1874, %v1873
      %v1904 = vpack.c.b16 %v1876, %v1875
      %v1905 = vpack.c.b16 %v1878, %v1877
      %v1906 = vpack.c.b16 %v1880, %v1879
      %v1907 = vpack.c.b16 %v1882, %v1881
      %v1908 = vpack.c.b16 %v1884, %v1883
      %v1909 = vpack.c.b16 %v1886, %v1885
      %v1910 = vpack.c.b16 %v1888, %v1887
      %v1911 = vpack.c.b16 %v1890, %v1889
      %v1912 = vpack.c.b16 %v1892, %v1891
      %v1913 = vpack.c.b16 %v1894, %v1893
      %v1914 = vpack.c.b16 %v1896, %v1895
      %v1915 = vpack.c.b16 %v1898, %v1897
      %v1916 = vpack.c.b16 %v1900, %v1899
      %v1918 = vsel %vm409, %v1901, 0
      %v1921 = vsel %vm409, %v1902, 0
      %v1924 = vsel %vm409, %v1903, 0
      %v1927 = vsel %vm409, %v1904, 0
      %v1930 = vsel %vm409, %v1905, 0
      %v1933 = vsel %vm409, %v1906, 0
      %v1936 = vsel %vm409, %v1907, 0
      %v1939 = vsel %vm409, %v1908, 0
      %v1942 = vsel %vm409, %v1909, 0
      %v1945 = vsel %vm409, %v1910, 0
      %v1948 = vsel %vm409, %v1911, 0
      %v1951 = vsel %vm409, %v1912, 0
      %v1954 = vsel %vm409, %v1913, 0
      %v1957 = vsel %vm409, %v1914, 0
      %v1960 = vsel %vm409, %v1915, 0
      %v1963 = vsel %vm409, %v1916, 0
      %v1966 = vsel %vm458, %v1836, 0
      %1968 = vmatpush.bf16.msra.mxu0 0
      %1969 = vmatpush.bf16.msra.mxu0 0
      %1970 = vmatpush.bf16.msra.mxu0 0
      %1971 = vmatpush.bf16.msra.mxu0 0
      %1972 = vmatpush.bf16.msra.mxu0 0
      %1973 = vmatpush.bf16.msra.mxu0 0
      %1974 = vmatpush.bf16.msra.mxu0 0
      %1975 = vmatpush.bf16.msra.mxu0 %v1966
      %1976 = vmatmul.bf16.gmra.mxu0 %v1918
      %v1977 = vpop.f32.mrf.mxu0
      %v1978 = vadd.f32 0.0, %v1977
      %v1979 = vpop.f32.mrf.mxu0
      %v1980 = vadd.f32 0.0, %v1979
      %1981 = vmatmul.bf16.gmra.mxu0 %v1921
      %v1982 = vpop.f32.mrf.mxu0
      %v1983 = vadd.f32 0.0, %v1982
      %v1984 = vpop.f32.mrf.mxu0
      %v1985 = vadd.f32 0.0, %v1984
      %1986 = vmatmul.bf16.gmra.mxu0 %v1924
      %v1987 = vpop.f32.mrf.mxu0
      %v1988 = vadd.f32 0.0, %v1987
      %v1989 = vpop.f32.mrf.mxu0
      %v1990 = vadd.f32 0.0, %v1989
      %1991 = vmatmul.bf16.gmra.mxu0 %v1927
      %v1992 = vpop.f32.mrf.mxu0
      %v1993 = vadd.f32 0.0, %v1992
      %v1994 = vpop.f32.mrf.mxu0
      %v1995 = vadd.f32 0.0, %v1994
      %1996 = vmatmul.bf16.gmra.mxu0 %v1930
      %v1997 = vpop.f32.mrf.mxu0
      %v1998 = vadd.f32 0.0, %v1997
      %v1999 = vpop.f32.mrf.mxu0
      %v2000 = vadd.f32 0.0, %v1999
      %2001 = vmatmul.bf16.gmra.mxu0 %v1933
      %v2002 = vpop.f32.mrf.mxu0
      %v2003 = vadd.f32 0.0, %v2002
      %v2004 = vpop.f32.mrf.mxu0
      %v2005 = vadd.f32 0.0, %v2004
      %2006 = vmatmul.bf16.gmra.mxu0 %v1936
      %v2007 = vpop.f32.mrf.mxu0
      %v2008 = vadd.f32 0.0, %v2007
      %v2009 = vpop.f32.mrf.mxu0
      %v2010 = vadd.f32 0.0, %v2009
      %2011 = vmatmul.bf16.gmra.mxu0 %v1939
      %v2012 = vpop.f32.mrf.mxu0
      %v2013 = vadd.f32 0.0, %v2012
      %v2014 = vpop.f32.mrf.mxu0
      %v2015 = vadd.f32 0.0, %v2014
      %2016 = vmatmul.bf16.gmra.mxu0 %v1942
      %v2017 = vpop.f32.mrf.mxu0
      %v2018 = vadd.f32 0.0, %v2017
      %v2019 = vpop.f32.mrf.mxu0
      %v2020 = vadd.f32 0.0, %v2019
      %2021 = vmatmul.bf16.gmra.mxu0 %v1945
      %v2022 = vpop.f32.mrf.mxu0
      %v2023 = vadd.f32 0.0, %v2022
      %v2024 = vpop.f32.mrf.mxu0
      %v2025 = vadd.f32 0.0, %v2024
      %2026 = vmatmul.bf16.gmra.mxu0 %v1948
      %v2027 = vpop.f32.mrf.mxu0
      %v2028 = vadd.f32 0.0, %v2027
      %v2029 = vpop.f32.mrf.mxu0
      %v2030 = vadd.f32 0.0, %v2029
      %2031 = vmatmul.bf16.gmra.mxu0 %v1951
      %v2032 = vpop.f32.mrf.mxu0
      %v2033 = vadd.f32 0.0, %v2032
      %v2034 = vpop.f32.mrf.mxu0
      %v2035 = vadd.f32 0.0, %v2034
      %2036 = vmatmul.bf16.gmra.mxu0 %v1954
      %v2037 = vpop.f32.mrf.mxu0
      %v2038 = vadd.f32 0.0, %v2037
      %v2039 = vpop.f32.mrf.mxu0
      %v2040 = vadd.f32 0.0, %v2039
      %2041 = vmatmul.bf16.gmra.mxu0 %v1957
      %v2042 = vpop.f32.mrf.mxu0
      %v2043 = vadd.f32 0.0, %v2042
      %v2044 = vpop.f32.mrf.mxu0
      %v2045 = vadd.f32 0.0, %v2044
      %2046 = vmatmul.bf16.gmra.mxu0 %v1960
      %v2047 = vpop.f32.mrf.mxu0
      %v2048 = vadd.f32 0.0, %v2047
      %v2049 = vpop.f32.mrf.mxu0
      %v2050 = vadd.f32 0.0, %v2049
      %2051 = vmatmul.bf16.gmra.mxu0 %v1963
      %v2052 = vpop.f32.mrf.mxu0
      %v2053 = vadd.f32 0.0, %v2052
      %v2054 = vpop.f32.mrf.mxu0
      %v2055 = vadd.f32 0.0, %v2054
      %2056 = vdwg.mxu0
      %v2057 = vld [vmem:[#allocation2] sm:$0xff]
      %v2058 = vld [vmem:[#allocation2 + $0x8] sm:$0xff]
      %v2059 = vld [vmem:[#allocation2 + $0x10] sm:$0xff]
      %v2060 = vld [vmem:[#allocation2 + $0x18] sm:$0xff]
      %v2061 = vld [vmem:[#allocation2 + $0x20] sm:$0xff]
      %v2062 = vld [vmem:[#allocation2 + $0x28] sm:$0xff]
      %v2063 = vld [vmem:[#allocation2 + $0x30] sm:$0xff]
      %v2064 = vld [vmem:[#allocation2 + $0x38] sm:$0xff]
      %v2065 = vld [vmem:[#allocation2 + $0x40] sm:$0xff]
      %v2066 = vld [vmem:[#allocation2 + $0x48] sm:$0xff]
      %v2067 = vld [vmem:[#allocation2 + $0x50] sm:$0xff]
      %v2068 = vld [vmem:[#allocation2 + $0x58] sm:$0xff]
      %v2069 = vld [vmem:[#allocation2 + $0x60] sm:$0xff]
      %v2070 = vld [vmem:[#allocation2 + $0x68] sm:$0xff]
      %v2071 = vld [vmem:[#allocation2 + $0x70] sm:$0xff]
      %v2072 = vld [vmem:[#allocation2 + $0x78] sm:$0xff]
      %v2073 = vld [vmem:[#allocation2 + $0x80] sm:$0xff]
      %v2074 = vld [vmem:[#allocation2 + $0x88] sm:$0xff]
      %v2075 = vld [vmem:[#allocation2 + $0x90] sm:$0xff]
      %v2076 = vld [vmem:[#allocation2 + $0x98] sm:$0xff]
      %v2077 = vld [vmem:[#allocation2 + $0xa0] sm:$0xff]
      %v2078 = vld [vmem:[#allocation2 + $0xa8] sm:$0xff]
      %v2079 = vld [vmem:[#allocation2 + $0xb0] sm:$0xff]
      %v2080 = vld [vmem:[#allocation2 + $0xb8] sm:$0xff]
      %v2081 = vld [vmem:[#allocation2 + $0xc0] sm:$0xff]
      %v2082 = vld [vmem:[#allocation2 + $0xc8] sm:$0xff]
      %v2083 = vld [vmem:[#allocation2 + $0xd0] sm:$0xff]
      %v2084 = vld [vmem:[#allocation2 + $0xd8] sm:$0xff]
      %v2085 = vld [vmem:[#allocation2 + $0xe0] sm:$0xff]
      %v2086 = vld [vmem:[#allocation2 + $0xe8] sm:$0xff]
      %v2087 = vld [vmem:[#allocation2 + $0xf0] sm:$0xff]
      %v2088 = vld [vmem:[#allocation2 + $0xf8] sm:$0xff]
      %v2089 = vadd.f32 %v2057, %v1978
      %v2090 = vadd.f32 %v2058, %v1980
      %v2091 = vadd.f32 %v2059, %v1983
      %v2092 = vadd.f32 %v2060, %v1985
      %v2093 = vadd.f32 %v2061, %v1988
      %v2094 = vadd.f32 %v2062, %v1990
      %v2095 = vadd.f32 %v2063, %v1993
      %v2096 = vadd.f32 %v2064, %v1995
      %v2097 = vadd.f32 %v2065, %v1998
      %v2098 = vadd.f32 %v2066, %v2000
      %v2099 = vadd.f32 %v2067, %v2003
      %v2100 = vadd.f32 %v2068, %v2005
      %v2101 = vadd.f32 %v2069, %v2008
      %v2102 = vadd.f32 %v2070, %v2010
      %v2103 = vadd.f32 %v2071, %v2013
      %v2104 = vadd.f32 %v2072, %v2015
      %v2105 = vadd.f32 %v2073, %v2018
      %v2106 = vadd.f32 %v2074, %v2020
      %v2107 = vadd.f32 %v2075, %v2023
      %v2108 = vadd.f32 %v2076, %v2025
      %v2109 = vadd.f32 %v2077, %v2028
      %v2110 = vadd.f32 %v2078, %v2030
      %v2111 = vadd.f32 %v2079, %v2033
      %v2112 = vadd.f32 %v2080, %v2035
      %v2113 = vadd.f32 %v2081, %v2038
      %v2114 = vadd.f32 %v2082, %v2040
      %v2115 = vadd.f32 %v2083, %v2043
      %v2116 = vadd.f32 %v2084, %v2045
      %v2117 = vadd.f32 %v2085, %v2048
      %v2118 = vadd.f32 %v2086, %v2050
      %v2119 = vadd.f32 %v2087, %v2053
      %v2120 = vadd.f32 %v2088, %v2055
      %2121 = vst.msk [vmem:[#allocation2] sm:$0xff] %vm551, %v2089
      %2122 = vst.msk [vmem:[#allocation2 + $0x8] sm:$0xff] %vm551, %v2090
      %2123 = vst.msk [vmem:[#allocation2 + $0x10] sm:$0xff] %vm551, %v2091
      %2124 = vst.msk [vmem:[#allocation2 + $0x18] sm:$0xff] %vm551, %v2092
      %2125 = vst.msk [vmem:[#allocation2 + $0x20] sm:$0xff] %vm551, %v2093
      %2126 = vst.msk [vmem:[#allocation2 + $0x28] sm:$0xff] %vm551, %v2094
      %2127 = vst.msk [vmem:[#allocation2 + $0x30] sm:$0xff] %vm551, %v2095
      %2128 = vst.msk [vmem:[#allocation2 + $0x38] sm:$0xff] %vm551, %v2096
      %2129 = vst.msk [vmem:[#allocation2 + $0x40] sm:$0xff] %vm551, %v2097
      %2130 = vst.msk [vmem:[#allocation2 + $0x48] sm:$0xff] %vm551, %v2098
      %2131 = vst.msk [vmem:[#allocation2 + $0x50] sm:$0xff] %vm551, %v2099
      %2132 = vst.msk [vmem:[#allocation2 + $0x58] sm:$0xff] %vm551, %v2100
      %2133 = vst.msk [vmem:[#allocation2 + $0x60] sm:$0xff] %vm551, %v2101
      %2134 = vst.msk [vmem:[#allocation2 + $0x68] sm:$0xff] %vm551, %v2102
      %2135 = vst.msk [vmem:[#allocation2 + $0x70] sm:$0xff] %vm551, %v2103
      %2136 = vst.msk [vmem:[#allocation2 + $0x78] sm:$0xff] %vm551, %v2104
      %2137 = vst.msk [vmem:[#allocation2 + $0x80] sm:$0xff] %vm551, %v2105
      %2138 = vst.msk [vmem:[#allocation2 + $0x88] sm:$0xff] %vm551, %v2106
      %2139 = vst.msk [vmem:[#allocation2 + $0x90] sm:$0xff] %vm551, %v2107
      %2140 = vst.msk [vmem:[#allocation2 + $0x98] sm:$0xff] %vm551, %v2108
      %2141 = vst.msk [vmem:[#allocation2 + $0xa0] sm:$0xff] %vm551, %v2109
      %2142 = vst.msk [vmem:[#allocation2 + $0xa8] sm:$0xff] %vm551, %v2110
      %2143 = vst.msk [vmem:[#allocation2 + $0xb0] sm:$0xff] %vm551, %v2111
      %2144 = vst.msk [vmem:[#allocation2 + $0xb8] sm:$0xff] %vm551, %v2112
      %2145 = vst.msk [vmem:[#allocation2 + $0xc0] sm:$0xff] %vm551, %v2113
      %2146 = vst.msk [vmem:[#allocation2 + $0xc8] sm:$0xff] %vm551, %v2114
      %2147 = vst.msk [vmem:[#allocation2 + $0xd0] sm:$0xff] %vm551, %v2115
      %2148 = vst.msk [vmem:[#allocation2 + $0xd8] sm:$0xff] %vm551, %v2116
      %2149 = vst.msk [vmem:[#allocation2 + $0xe0] sm:$0xff] %vm551, %v2117
      %2150 = vst.msk [vmem:[#allocation2 + $0xe8] sm:$0xff] %vm551, %v2118
      %2151 = vst.msk [vmem:[#allocation2 + $0xf0] sm:$0xff] %vm551, %v2119
      %2152 = vst.msk [vmem:[#allocation2 + $0xf8] sm:$0xff] %vm551, %v2120
      %v2153 = vld [vmem:[%s1802] sm:$0xf]
      %v2154 = vld [vmem:[%s1802 + $0x4] sm:$0xf]
      %v2155 = vld [vmem:[%s1802 + $0x8] sm:$0x1]
      %v2156 = vld [vmem:[%s1802 + $0xc] sm:$0xf]
      %v2157 = vld [vmem:[%s1802 + $0x10] sm:$0xf]
      %v2158 = vld [vmem:[%s1802 + $0x14] sm:$0x1]
      %v2159 = vld [vmem:[%s1802 + $0x18] sm:$0xf]
      %v2160 = vld [vmem:[%s1802 + $0x1c] sm:$0xf]
      %v2161 = vld [vmem:[%s1802 + $0x20] sm:$0x1]
      %v2162 = vld [vmem:[%s1802 + $0x24] sm:$0xf]
      %v2163 = vld [vmem:[%s1802 + $0x28] sm:$0xf]
      %v2164 = vld [vmem:[%s1802 + $0x2c] sm:$0x1]
      %v2165 = vld [vmem:[%s1802 + $0x30] sm:$0xf]
      %v2166 = vld [vmem:[%s1802 + $0x34] sm:$0xf]
      %v2167 = vld [vmem:[%s1802 + $0x38] sm:$0x1]
      %v2168 = vld [vmem:[%s1802 + $0x3c] sm:$0xf]
      %v2169 = vld [vmem:[%s1802 + $0x40] sm:$0xf]
      %v2170 = vld [vmem:[%s1802 + $0x44] sm:$0x1]
      %v2171 = vld [vmem:[%s1802 + $0x48] sm:$0xf]
      %v2172 = vld [vmem:[%s1802 + $0x4c] sm:$0xf]
      %v2173 = vld [vmem:[%s1802 + $0x50] sm:$0x1]
      %v2174 = vld [vmem:[%s1802 + $0x54] sm:$0xf]
      %v2175 = vld [vmem:[%s1802 + $0x58] sm:$0xf]
      %v2176 = vld [vmem:[%s1802 + $0x5c] sm:$0x1]
      %v2177 = vld [vmem:[%s1802 + $0x60] sm:$0xf]
      %v2178 = vld [vmem:[%s1802 + $0x64] sm:$0xf]
      %v2179 = vld [vmem:[%s1802 + $0x68] sm:$0x1]
      %v2180 = vld [vmem:[%s1802 + $0x6c] sm:$0xf]
      %v2181 = vld [vmem:[%s1802 + $0x70] sm:$0xf]
      %v2182 = vld [vmem:[%s1802 + $0x74] sm:$0x1]
      %v2183 = vld [vmem:[%s1802 + $0x78] sm:$0xf]
      %v2184 = vld [vmem:[%s1802 + $0x7c] sm:$0xf]
      %v2185 = vld [vmem:[%s1802 + $0x80] sm:$0x1]
      %v2186 = vld [vmem:[%s1802 + $0x84] sm:$0xf]
      %v2187 = vld [vmem:[%s1802 + $0x88] sm:$0xf]
      %v2188 = vld [vmem:[%s1802 + $0x8c] sm:$0x1]
      %v2189 = vld [vmem:[%s1802 + $0x90] sm:$0xf]
      %v2190 = vld [vmem:[%s1802 + $0x94] sm:$0xf]
      %v2191 = vld [vmem:[%s1802 + $0x98] sm:$0x1]
      %v2192 = vld [vmem:[%s1802 + $0x9c] sm:$0xf]
      %v2193 = vld [vmem:[%s1802 + $0xa0] sm:$0xf]
      %v2194 = vld [vmem:[%s1802 + $0xa4] sm:$0x1]
      %v2195 = vld [vmem:[%s1802 + $0xa8] sm:$0xf]
      %v2196 = vld [vmem:[%s1802 + $0xac] sm:$0xf]
      %v2197 = vld [vmem:[%s1802 + $0xb0] sm:$0x1]
      %v2198 = vld [vmem:[%s1802 + $0xb4] sm:$0xf]
      %v2199 = vld [vmem:[%s1802 + $0xb8] sm:$0xf]
      %v2200 = vld [vmem:[%s1802 + $0xbc] sm:$0x1]
      %v2202 = vshrl.u32 %v2153, 16
      %v2204 = vrot.slane %v2202, 4
      %v2205 = vshll.u32 %v2153, 16
      %v2207 = vrot.slane %v2205, 5
      %v2208 = vor.u32 %v2204, %v2207
      %v2209 = vrot.slane %v2208, 4
      %v2211 = vshll.u32 %v2154, 16
      %v2213 = vrot.slane %v2211, 5
      %v2214 = vsel %vm634, %v2209, %v2213
      %v2215 = vshrl.u32 %v2154, 16
      %v2217 = vrot.slane %v2215, 4
      %v2218 = vor.u32 %v2217, %v2213
      %v2219 = vrot.slane %v2218, 4
      %v2221 = vshll.u32 %v2155, 16
      %v2223 = vrot.slane %v2221, 5
      %v2224 = vsel %vm634, %v2219, %v2223
      %v2226 = vshrl.u32 %v2156, 16
      %v2228 = vrot.slane %v2226, 4
      %v2229 = vshll.u32 %v2156, 16
      %v2231 = vrot.slane %v2229, 5
      %v2232 = vor.u32 %v2228, %v2231
      %v2233 = vrot.slane %v2232, 4
      %v2235 = vshll.u32 %v2157, 16
      %v2237 = vrot.slane %v2235, 5
      %v2238 = vsel %vm634, %v2233, %v2237
      %v2239 = vshrl.u32 %v2157, 16
      %v2241 = vrot.slane %v2239, 4
      %v2242 = vor.u32 %v2241, %v2237
      %v2243 = vrot.slane %v2242, 4
      %v2245 = vshll.u32 %v2158, 16
      %v2247 = vrot.slane %v2245, 5
      %v2248 = vsel %vm634, %v2243, %v2247
      %v2250 = vshrl.u32 %v2159, 16
      %v2252 = vrot.slane %v2250, 4
      %v2253 = vshll.u32 %v2159, 16
      %v2255 = vrot.slane %v2253, 5
      %v2256 = vor.u32 %v2252, %v2255
      %v2257 = vrot.slane %v2256, 4
      %v2259 = vshll.u32 %v2160, 16
      %v2261 = vrot.slane %v2259, 5
      %v2262 = vsel %vm634, %v2257, %v2261
      %v2263 = vshrl.u32 %v2160, 16
      %v2265 = vrot.slane %v2263, 4
      %v2266 = vor.u32 %v2265, %v2261
      %v2267 = vrot.slane %v2266, 4
      %v2269 = vshll.u32 %v2161, 16
      %v2271 = vrot.slane %v2269, 5
      %v2272 = vsel %vm634, %v2267, %v2271
      %v2274 = vshrl.u32 %v2162, 16
      %v2276 = vrot.slane %v2274, 4
      %v2277 = vshll.u32 %v2162, 16
      %v2279 = vrot.slane %v2277, 5
      %v2280 = vor.u32 %v2276, %v2279
      %v2281 = vrot.slane %v2280, 4
      %v2283 = vshll.u32 %v2163, 16
      %v2285 = vrot.slane %v2283, 5
      %v2286 = vsel %vm634, %v2281, %v2285
      %v2287 = vshrl.u32 %v2163, 16
      %v2289 = vrot.slane %v2287, 4
      %v2290 = vor.u32 %v2289, %v2285
      %v2291 = vrot.slane %v2290, 4
      %v2293 = vshll.u32 %v2164, 16
      %v2295 = vrot.slane %v2293, 5
      %v2296 = vsel %vm634, %v2291, %v2295
      %v2298 = vshrl.u32 %v2165, 16
      %v2300 = vrot.slane %v2298, 4
      %v2301 = vshll.u32 %v2165, 16
      %v2303 = vrot.slane %v2301, 5
      %v2304 = vor.u32 %v2300, %v2303
      %v2305 = vrot.slane %v2304, 4
      %v2307 = vshll.u32 %v2166, 16
      %v2309 = vrot.slane %v2307, 5
      %v2310 = vsel %vm634, %v2305, %v2309
      %v2311 = vshrl.u32 %v2166, 16
      %v2313 = vrot.slane %v2311, 4
      %v2314 = vor.u32 %v2313, %v2309
      %v2315 = vrot.slane %v2314, 4
      %v2317 = vshll.u32 %v2167, 16
      %v2319 = vrot.slane %v2317, 5
      %v2320 = vsel %vm634, %v2315, %v2319
      %v2322 = vshrl.u32 %v2168, 16
      %v2324 = vrot.slane %v2322, 4
      %v2325 = vshll.u32 %v2168, 16
      %v2327 = vrot.slane %v2325, 5
      %v2328 = vor.u32 %v2324, %v2327
      %v2329 = vrot.slane %v2328, 4
      %v2331 = vshll.u32 %v2169, 16
      %v2333 = vrot.slane %v2331, 5
      %v2334 = vsel %vm634, %v2329, %v2333
      %v2335 = vshrl.u32 %v2169, 16
      %v2337 = vrot.slane %v2335, 4
      %v2338 = vor.u32 %v2337, %v2333
      %v2339 = vrot.slane %v2338, 4
      %v2341 = vshll.u32 %v2170, 16
      %v2343 = vrot.slane %v2341, 5
      %v2344 = vsel %vm634, %v2339, %v2343
      %v2346 = vshrl.u32 %v2171, 16
      %v2348 = vrot.slane %v2346, 4
      %v2349 = vshll.u32 %v2171, 16
      %v2351 = vrot.slane %v2349, 5
      %v2352 = vor.u32 %v2348, %v2351
      %v2353 = vrot.slane %v2352, 4
      %v2355 = vshll.u32 %v2172, 16
      %v2357 = vrot.slane %v2355, 5
      %v2358 = vsel %vm634, %v2353, %v2357
      %v2359 = vshrl.u32 %v2172, 16
      %v2361 = vrot.slane %v2359, 4
      %v2362 = vor.u32 %v2361, %v2357
      %v2363 = vrot.slane %v2362, 4
      %v2365 = vshll.u32 %v2173, 16
      %v2367 = vrot.slane %v2365, 5
      %v2368 = vsel %vm634, %v2363, %v2367
      %v2370 = vshrl.u32 %v2174, 16
      %v2372 = vrot.slane %v2370, 4
      %v2373 = vshll.u32 %v2174, 16
      %v2375 = vrot.slane %v2373, 5
      %v2376 = vor.u32 %v2372, %v2375
      %v2377 = vrot.slane %v2376, 4
      %v2379 = vshll.u32 %v2175, 16
      %v2381 = vrot.slane %v2379, 5
      %v2382 = vsel %vm634, %v2377, %v2381
      %v2383 = vshrl.u32 %v2175, 16
      %v2385 = vrot.slane %v2383, 4
      %v2386 = vor.u32 %v2385, %v2381
      %v2387 = vrot.slane %v2386, 4
      %v2389 = vshll.u32 %v2176, 16
      %v2391 = vrot.slane %v2389, 5
      %v2392 = vsel %vm634, %v2387, %v2391
      %v2394 = vshrl.u32 %v2177, 16
      %v2396 = vrot.slane %v2394, 4
      %v2397 = vshll.u32 %v2177, 16
      %v2399 = vrot.slane %v2397, 5
      %v2400 = vor.u32 %v2396, %v2399
      %v2401 = vrot.slane %v2400, 4
      %v2403 = vshll.u32 %v2178, 16
      %v2405 = vrot.slane %v2403, 5
      %v2406 = vsel %vm634, %v2401, %v2405
      %v2407 = vshrl.u32 %v2178, 16
      %v2409 = vrot.slane %v2407, 4
      %v2410 = vor.u32 %v2409, %v2405
      %v2411 = vrot.slane %v2410, 4
      %v2413 = vshll.u32 %v2179, 16
      %v2415 = vrot.slane %v2413, 5
      %v2416 = vsel %vm634, %v2411, %v2415
      %v2418 = vshrl.u32 %v2180, 16
      %v2420 = vrot.slane %v2418, 4
      %v2421 = vshll.u32 %v2180, 16
      %v2423 = vrot.slane %v2421, 5
      %v2424 = vor.u32 %v2420, %v2423
      %v2425 = vrot.slane %v2424, 4
      %v2427 = vshll.u32 %v2181, 16
      %v2429 = vrot.slane %v2427, 5
      %v2430 = vsel %vm634, %v2425, %v2429
      %v2431 = vshrl.u32 %v2181, 16
      %v2433 = vrot.slane %v2431, 4
      %v2434 = vor.u32 %v2433, %v2429
      %v2435 = vrot.slane %v2434, 4
      %v2437 = vshll.u32 %v2182, 16
      %v2439 = vrot.slane %v2437, 5
      %v2440 = vsel %vm634, %v2435, %v2439
      %v2442 = vshrl.u32 %v2183, 16
      %v2444 = vrot.slane %v2442, 4
      %v2445 = vshll.u32 %v2183, 16
      %v2447 = vrot.slane %v2445, 5
      %v2448 = vor.u32 %v2444, %v2447
      %v2449 = vrot.slane %v2448, 4
      %v2451 = vshll.u32 %v2184, 16
      %v2453 = vrot.slane %v2451, 5
      %v2454 = vsel %vm634, %v2449, %v2453
      %v2455 = vshrl.u32 %v2184, 16
      %v2457 = vrot.slane %v2455, 4
      %v2458 = vor.u32 %v2457, %v2453
      %v2459 = vrot.slane %v2458, 4
      %v2461 = vshll.u32 %v2185, 16
      %v2463 = vrot.slane %v2461, 5
      %v2464 = vsel %vm634, %v2459, %v2463
      %v2466 = vshrl.u32 %v2186, 16
      %v2468 = vrot.slane %v2466, 4
      %v2469 = vshll.u32 %v2186, 16
      %v2471 = vrot.slane %v2469, 5
      %v2472 = vor.u32 %v2468, %v2471
      %v2473 = vrot.slane %v2472, 4
      %v2475 = vshll.u32 %v2187, 16
      %v2477 = vrot.slane %v2475, 5
      %v2478 = vsel %vm634, %v2473, %v2477
      %v2479 = vshrl.u32 %v2187, 16
      %v2481 = vrot.slane %v2479, 4
      %v2482 = vor.u32 %v2481, %v2477
      %v2483 = vrot.slane %v2482, 4
      %v2485 = vshll.u32 %v2188, 16
      %v2487 = vrot.slane %v2485, 5
      %v2488 = vsel %vm634, %v2483, %v2487
      %v2490 = vshrl.u32 %v2189, 16
      %v2492 = vrot.slane %v2490, 4
      %v2493 = vshll.u32 %v2189, 16
      %v2495 = vrot.slane %v2493, 5
      %v2496 = vor.u32 %v2492, %v2495
      %v2497 = vrot.slane %v2496, 4
      %v2499 = vshll.u32 %v2190, 16
      %v2501 = vrot.slane %v2499, 5
      %v2502 = vsel %vm634, %v2497, %v2501
      %v2503 = vshrl.u32 %v2190, 16
      %v2505 = vrot.slane %v2503, 4
      %v2506 = vor.u32 %v2505, %v2501
      %v2507 = vrot.slane %v2506, 4
      %v2509 = vshll.u32 %v2191, 16
      %v2511 = vrot.slane %v2509, 5
      %v2512 = vsel %vm634, %v2507, %v2511
      %v2514 = vshrl.u32 %v2192, 16
      %v2516 = vrot.slane %v2514, 4
      %v2517 = vshll.u32 %v2192, 16
      %v2519 = vrot.slane %v2517, 5
      %v2520 = vor.u32 %v2516, %v2519
      %v2521 = vrot.slane %v2520, 4
      %v2523 = vshll.u32 %v2193, 16
      %v2525 = vrot.slane %v2523, 5
      %v2526 = vsel %vm634, %v2521, %v2525
      %v2527 = vshrl.u32 %v2193, 16
      %v2529 = vrot.slane %v2527, 4
      %v2530 = vor.u32 %v2529, %v2525
      %v2531 = vrot.slane %v2530, 4
      %v2533 = vshll.u32 %v2194, 16
      %v2535 = vrot.slane %v2533, 5
      %v2536 = vsel %vm634, %v2531, %v2535
      %v2538 = vshrl.u32 %v2195, 16
      %v2540 = vrot.slane %v2538, 4
      %v2541 = vshll.u32 %v2195, 16
      %v2543 = vrot.slane %v2541, 5
      %v2544 = vor.u32 %v2540, %v2543
      %v2545 = vrot.slane %v2544, 4
      %v2547 = vshll.u32 %v2196, 16
      %v2549 = vrot.slane %v2547, 5
      %v2550 = vsel %vm634, %v2545, %v2549
      %v2551 = vshrl.u32 %v2196, 16
      %v2553 = vrot.slane %v2551, 4
      %v2554 = vor.u32 %v2553, %v2549
      %v2555 = vrot.slane %v2554, 4
      %v2557 = vshll.u32 %v2197, 16
      %v2559 = vrot.slane %v2557, 5
      %v2560 = vsel %vm634, %v2555, %v2559
      %v2562 = vshrl.u32 %v2198, 16
      %v2564 = vrot.slane %v2562, 4
      %v2565 = vshll.u32 %v2198, 16
      %v2567 = vrot.slane %v2565, 5
      %v2568 = vor.u32 %v2564, %v2567
      %v2569 = vrot.slane %v2568, 4
      %v2571 = vshll.u32 %v2199, 16
      %v2573 = vrot.slane %v2571, 5
      %v2574 = vsel %vm634, %v2569, %v2573
      %v2575 = vshrl.u32 %v2199, 16
      %v2577 = vrot.slane %v2575, 4
      %v2578 = vor.u32 %v2577, %v2573
      %v2579 = vrot.slane %v2578, 4
      %v2581 = vshll.u32 %v2200, 16
      %v2583 = vrot.slane %v2581, 5
      %v2584 = vsel %vm634, %v2579, %v2583
      %s2585 = scalar_lea.vmem %s275, 16
      %v2586 = vld [vmem:[%s2585] sm:$0xf]
      %v2587 = vunpack.c.l.b16 %v2214
      %v2588 = vunpack.c.l.b16 %v2224
      %v2589 = vunpack.c.l.b16 %v2238
      %v2590 = vunpack.c.l.b16 %v2248
      %v2591 = vunpack.c.l.b16 %v2262
      %v2592 = vunpack.c.l.b16 %v2272
      %v2593 = vunpack.c.l.b16 %v2286
      %v2594 = vunpack.c.l.b16 %v2296
      %v2595 = vunpack.c.l.b16 %v2310
      %v2596 = vunpack.c.l.b16 %v2320
      %v2597 = vunpack.c.l.b16 %v2334
      %v2598 = vunpack.c.l.b16 %v2344
      %v2599 = vunpack.c.l.b16 %v2358
      %v2600 = vunpack.c.l.b16 %v2368
      %v2601 = vunpack.c.l.b16 %v2382
      %v2602 = vunpack.c.l.b16 %v2392
      %v2603 = vunpack.c.l.b16 %v2406
      %v2604 = vunpack.c.l.b16 %v2416
      %v2605 = vunpack.c.l.b16 %v2430
      %v2606 = vunpack.c.l.b16 %v2440
      %v2607 = vunpack.c.l.b16 %v2454
      %v2608 = vunpack.c.l.b16 %v2464
      %v2609 = vunpack.c.l.b16 %v2478
      %v2610 = vunpack.c.l.b16 %v2488
      %v2611 = vunpack.c.l.b16 %v2502
      %v2612 = vunpack.c.l.b16 %v2512
      %v2613 = vunpack.c.l.b16 %v2526
      %v2614 = vunpack.c.l.b16 %v2536
      %v2615 = vunpack.c.l.b16 %v2550
      %v2616 = vunpack.c.l.b16 %v2560
      %v2617 = vunpack.c.l.b16 %v2574
      %v2618 = vunpack.c.l.b16 %v2584
      %v2619 = vpack.c.b16 %v2588, %v2587
      %v2620 = vpack.c.b16 %v2590, %v2589
      %v2621 = vpack.c.b16 %v2592, %v2591
      %v2622 = vpack.c.b16 %v2594, %v2593
      %v2623 = vpack.c.b16 %v2596, %v2595
      %v2624 = vpack.c.b16 %v2598, %v2597
      %v2625 = vpack.c.b16 %v2600, %v2599
      %v2626 = vpack.c.b16 %v2602, %v2601
      %v2627 = vpack.c.b16 %v2604, %v2603
      %v2628 = vpack.c.b16 %v2606, %v2605
      %v2629 = vpack.c.b16 %v2608, %v2607
      %v2630 = vpack.c.b16 %v2610, %v2609
      %v2631 = vpack.c.b16 %v2612, %v2611
      %v2632 = vpack.c.b16 %v2614, %v2613
      %v2633 = vpack.c.b16 %v2616, %v2615
      %v2634 = vpack.c.b16 %v2618, %v2617
      %v2636 = vsel %vm409, %v2619, 0
      %v2639 = vsel %vm409, %v2620, 0
      %v2642 = vsel %vm409, %v2621, 0
      %v2645 = vsel %vm409, %v2622, 0
      %v2648 = vsel %vm409, %v2623, 0
      %v2651 = vsel %vm409, %v2624, 0
      %v2654 = vsel %vm409, %v2625, 0
      %v2657 = vsel %vm409, %v2626, 0
      %v2660 = vsel %vm409, %v2627, 0
      %v2663 = vsel %vm409, %v2628, 0
      %v2666 = vsel %vm409, %v2629, 0
      %v2669 = vsel %vm409, %v2630, 0
      %v2672 = vsel %vm409, %v2631, 0
      %v2675 = vsel %vm409, %v2632, 0
      %v2678 = vsel %vm409, %v2633, 0
      %v2681 = vsel %vm409, %v2634, 0
      %v2684 = vsel %vm458, %v2586, 0
      %2686 = vmatpush.bf16.msra.mxu0 0
      %2687 = vmatpush.bf16.msra.mxu0 0
      %2688 = vmatpush.bf16.msra.mxu0 0
      %2689 = vmatpush.bf16.msra.mxu0 0
      %2690 = vmatpush.bf16.msra.mxu0 0
      %2691 = vmatpush.bf16.msra.mxu0 0
      %2692 = vmatpush.bf16.msra.mxu0 0
      %2693 = vmatpush.bf16.msra.mxu0 %v2684
      %2694 = vmatmul.bf16.gmra.mxu0 %v2636
      %v2695 = vpop.f32.mrf.mxu0
      %v2696 = vadd.f32 0.0, %v2695
      %v2697 = vpop.f32.mrf.mxu0
      %v2698 = vadd.f32 0.0, %v2697
      %2699 = vmatmul.bf16.gmra.mxu0 %v2639
      %v2700 = vpop.f32.mrf.mxu0
      %v2701 = vadd.f32 0.0, %v2700
      %v2702 = vpop.f32.mrf.mxu0
      %v2703 = vadd.f32 0.0, %v2702
      %2704 = vmatmul.bf16.gmra.mxu0 %v2642
      %v2705 = vpop.f32.mrf.mxu0
      %v2706 = vadd.f32 0.0, %v2705
      %v2707 = vpop.f32.mrf.mxu0
      %v2708 = vadd.f32 0.0, %v2707
      %2709 = vmatmul.bf16.gmra.mxu0 %v2645
      %v2710 = vpop.f32.mrf.mxu0
      %v2711 = vadd.f32 0.0, %v2710
      %v2712 = vpop.f32.mrf.mxu0
      %v2713 = vadd.f32 0.0, %v2712
      %2714 = vmatmul.bf16.gmra.mxu0 %v2648
      %v2715 = vpop.f32.mrf.mxu0
      %v2716 = vadd.f32 0.0, %v2715
      %v2717 = vpop.f32.mrf.mxu0
      %v2718 = vadd.f32 0.0, %v2717
      %2719 = vmatmul.bf16.gmra.mxu0 %v2651
      %v2720 = vpop.f32.mrf.mxu0
      %v2721 = vadd.f32 0.0, %v2720
      %v2722 = vpop.f32.mrf.mxu0
      %v2723 = vadd.f32 0.0, %v2722
      %2724 = vmatmul.bf16.gmra.mxu0 %v2654
      %v2725 = vpop.f32.mrf.mxu0
      %v2726 = vadd.f32 0.0, %v2725
      %v2727 = vpop.f32.mrf.mxu0
      %v2728 = vadd.f32 0.0, %v2727
      %2729 = vmatmul.bf16.gmra.mxu0 %v2657
      %v2730 = vpop.f32.mrf.mxu0
      %v2731 = vadd.f32 0.0, %v2730
      %v2732 = vpop.f32.mrf.mxu0
      %v2733 = vadd.f32 0.0, %v2732
      %2734 = vmatmul.bf16.gmra.mxu0 %v2660
      %v2735 = vpop.f32.mrf.mxu0
      %v2736 = vadd.f32 0.0, %v2735
      %v2737 = vpop.f32.mrf.mxu0
      %v2738 = vadd.f32 0.0, %v2737
      %2739 = vmatmul.bf16.gmra.mxu0 %v2663
      %v2740 = vpop.f32.mrf.mxu0
      %v2741 = vadd.f32 0.0, %v2740
      %v2742 = vpop.f32.mrf.mxu0
      %v2743 = vadd.f32 0.0, %v2742
      %2744 = vmatmul.bf16.gmra.mxu0 %v2666
      %v2745 = vpop.f32.mrf.mxu0
      %v2746 = vadd.f32 0.0, %v2745
      %v2747 = vpop.f32.mrf.mxu0
      %v2748 = vadd.f32 0.0, %v2747
      %2749 = vmatmul.bf16.gmra.mxu0 %v2669
      %v2750 = vpop.f32.mrf.mxu0
      %v2751 = vadd.f32 0.0, %v2750
      %v2752 = vpop.f32.mrf.mxu0
      %v2753 = vadd.f32 0.0, %v2752
      %2754 = vmatmul.bf16.gmra.mxu0 %v2672
      %v2755 = vpop.f32.mrf.mxu0
      %v2756 = vadd.f32 0.0, %v2755
      %v2757 = vpop.f32.mrf.mxu0
      %v2758 = vadd.f32 0.0, %v2757
      %2759 = vmatmul.bf16.gmra.mxu0 %v2675
      %v2760 = vpop.f32.mrf.mxu0
      %v2761 = vadd.f32 0.0, %v2760
      %v2762 = vpop.f32.mrf.mxu0
      %v2763 = vadd.f32 0.0, %v2762
      %2764 = vmatmul.bf16.gmra.mxu0 %v2678
      %v2765 = vpop.f32.mrf.mxu0
      %v2766 = vadd.f32 0.0, %v2765
      %v2767 = vpop.f32.mrf.mxu0
      %v2768 = vadd.f32 0.0, %v2767
      %2769 = vmatmul.bf16.gmra.mxu0 %v2681
      %v2770 = vpop.f32.mrf.mxu0
      %v2771 = vadd.f32 0.0, %v2770
      %v2772 = vpop.f32.mrf.mxu0
      %v2773 = vadd.f32 0.0, %v2772
      %2774 = vdwg.mxu0
      %v2775 = vld [vmem:[#allocation2] sm:$0xff]
      %v2776 = vld [vmem:[#allocation2 + $0x8] sm:$0xff]
      %v2777 = vld [vmem:[#allocation2 + $0x10] sm:$0xff]
      %v2778 = vld [vmem:[#allocation2 + $0x18] sm:$0xff]
      %v2779 = vld [vmem:[#allocation2 + $0x20] sm:$0xff]
      %v2780 = vld [vmem:[#allocation2 + $0x28] sm:$0xff]
      %v2781 = vld [vmem:[#allocation2 + $0x30] sm:$0xff]
      %v2782 = vld [vmem:[#allocation2 + $0x38] sm:$0xff]
      %v2783 = vld [vmem:[#allocation2 + $0x40] sm:$0xff]
      %v2784 = vld [vmem:[#allocation2 + $0x48] sm:$0xff]
      %v2785 = vld [vmem:[#allocation2 + $0x50] sm:$0xff]
      %v2786 = vld [vmem:[#allocation2 + $0x58] sm:$0xff]
      %v2787 = vld [vmem:[#allocation2 + $0x60] sm:$0xff]
      %v2788 = vld [vmem:[#allocation2 + $0x68] sm:$0xff]
      %v2789 = vld [vmem:[#allocation2 + $0x70] sm:$0xff]
      %v2790 = vld [vmem:[#allocation2 + $0x78] sm:$0xff]
      %v2791 = vld [vmem:[#allocation2 + $0x80] sm:$0xff]
      %v2792 = vld [vmem:[#allocation2 + $0x88] sm:$0xff]
      %v2793 = vld [vmem:[#allocation2 + $0x90] sm:$0xff]
      %v2794 = vld [vmem:[#allocation2 + $0x98] sm:$0xff]
      %v2795 = vld [vmem:[#allocation2 + $0xa0] sm:$0xff]
      %v2796 = vld [vmem:[#allocation2 + $0xa8] sm:$0xff]
      %v2797 = vld [vmem:[#allocation2 + $0xb0] sm:$0xff]
      %v2798 = vld [vmem:[#allocation2 + $0xb8] sm:$0xff]
      %v2799 = vld [vmem:[#allocation2 + $0xc0] sm:$0xff]
      %v2800 = vld [vmem:[#allocation2 + $0xc8] sm:$0xff]
      %v2801 = vld [vmem:[#allocation2 + $0xd0] sm:$0xff]
      %v2802 = vld [vmem:[#allocation2 + $0xd8] sm:$0xff]
      %v2803 = vld [vmem:[#allocation2 + $0xe0] sm:$0xff]
      %v2804 = vld [vmem:[#allocation2 + $0xe8] sm:$0xff]
      %v2805 = vld [vmem:[#allocation2 + $0xf0] sm:$0xff]
      %v2806 = vld [vmem:[#allocation2 + $0xf8] sm:$0xff]
      %v2807 = vadd.f32 %v2775, %v2696
      %v2808 = vadd.f32 %v2776, %v2698
      %v2809 = vadd.f32 %v2777, %v2701
      %v2810 = vadd.f32 %v2778, %v2703
      %v2811 = vadd.f32 %v2779, %v2706
      %v2812 = vadd.f32 %v2780, %v2708
      %v2813 = vadd.f32 %v2781, %v2711
      %v2814 = vadd.f32 %v2782, %v2713
      %v2815 = vadd.f32 %v2783, %v2716
      %v2816 = vadd.f32 %v2784, %v2718
      %v2817 = vadd.f32 %v2785, %v2721
      %v2818 = vadd.f32 %v2786, %v2723
      %v2819 = vadd.f32 %v2787, %v2726
      %v2820 = vadd.f32 %v2788, %v2728
      %v2821 = vadd.f32 %v2789, %v2731
      %v2822 = vadd.f32 %v2790, %v2733
      %v2823 = vadd.f32 %v2791, %v2736
      %v2824 = vadd.f32 %v2792, %v2738
      %v2825 = vadd.f32 %v2793, %v2741
      %v2826 = vadd.f32 %v2794, %v2743
      %v2827 = vadd.f32 %v2795, %v2746
      %v2828 = vadd.f32 %v2796, %v2748
      %v2829 = vadd.f32 %v2797, %v2751
      %v2830 = vadd.f32 %v2798, %v2753
      %v2831 = vadd.f32 %v2799, %v2756
      %v2832 = vadd.f32 %v2800, %v2758
      %v2833 = vadd.f32 %v2801, %v2761
      %v2834 = vadd.f32 %v2802, %v2763
      %v2835 = vadd.f32 %v2803, %v2766
      %v2836 = vadd.f32 %v2804, %v2768
      %v2837 = vadd.f32 %v2805, %v2771
      %v2838 = vadd.f32 %v2806, %v2773
      %2839 = vst.msk [vmem:[#allocation2] sm:$0xff] %vm551, %v2807
      %2840 = vst.msk [vmem:[#allocation2 + $0x8] sm:$0xff] %vm551, %v2808
      %2841 = vst.msk [vmem:[#allocation2 + $0x10] sm:$0xff] %vm551, %v2809
      %2842 = vst.msk [vmem:[#allocation2 + $0x18] sm:$0xff] %vm551, %v2810
      %2843 = vst.msk [vmem:[#allocation2 + $0x20] sm:$0xff] %vm551, %v2811
      %2844 = vst.msk [vmem:[#allocation2 + $0x28] sm:$0xff] %vm551, %v2812
      %2845 = vst.msk [vmem:[#allocation2 + $0x30] sm:$0xff] %vm551, %v2813
      %2846 = vst.msk [vmem:[#allocation2 + $0x38] sm:$0xff] %vm551, %v2814
      %2847 = vst.msk [vmem:[#allocation2 + $0x40] sm:$0xff] %vm551, %v2815
      %2848 = vst.msk [vmem:[#allocation2 + $0x48] sm:$0xff] %vm551, %v2816
      %2849 = vst.msk [vmem:[#allocation2 + $0x50] sm:$0xff] %vm551, %v2817
      %2850 = vst.msk [vmem:[#allocation2 + $0x58] sm:$0xff] %vm551, %v2818
      %2851 = vst.msk [vmem:[#allocation2 + $0x60] sm:$0xff] %vm551, %v2819
      %2852 = vst.msk [vmem:[#allocation2 + $0x68] sm:$0xff] %vm551, %v2820
      %2853 = vst.msk [vmem:[#allocation2 + $0x70] sm:$0xff] %vm551, %v2821
      %2854 = vst.msk [vmem:[#allocation2 + $0x78] sm:$0xff] %vm551, %v2822
      %2855 = vst.msk [vmem:[#allocation2 + $0x80] sm:$0xff] %vm551, %v2823
      %2856 = vst.msk [vmem:[#allocation2 + $0x88] sm:$0xff] %vm551, %v2824
      %2857 = vst.msk [vmem:[#allocation2 + $0x90] sm:$0xff] %vm551, %v2825
      %2858 = vst.msk [vmem:[#allocation2 + $0x98] sm:$0xff] %vm551, %v2826
      %2859 = vst.msk [vmem:[#allocation2 + $0xa0] sm:$0xff] %vm551, %v2827
      %2860 = vst.msk [vmem:[#allocation2 + $0xa8] sm:$0xff] %vm551, %v2828
      %2861 = vst.msk [vmem:[#allocation2 + $0xb0] sm:$0xff] %vm551, %v2829
      %2862 = vst.msk [vmem:[#allocation2 + $0xb8] sm:$0xff] %vm551, %v2830
      %2863 = vst.msk [vmem:[#allocation2 + $0xc0] sm:$0xff] %vm551, %v2831
      %2864 = vst.msk [vmem:[#allocation2 + $0xc8] sm:$0xff] %vm551, %v2832
      %2865 = vst.msk [vmem:[#allocation2 + $0xd0] sm:$0xff] %vm551, %v2833
      %2866 = vst.msk [vmem:[#allocation2 + $0xd8] sm:$0xff] %vm551, %v2834
      %2867 = vst.msk [vmem:[#allocation2 + $0xe0] sm:$0xff] %vm551, %v2835
      %2868 = vst.msk [vmem:[#allocation2 + $0xe8] sm:$0xff] %vm551, %v2836
      %2869 = vst.msk [vmem:[#allocation2 + $0xf0] sm:$0xff] %vm551, %v2837
      %2870 = vst.msk [vmem:[#allocation2 + $0xf8] sm:$0xff] %vm551, %v2838
      %v2871 = vld [vmem:[%s1802] sm:$0xe]
      %v2872 = vld [vmem:[%s1802 + $0x4] sm:$0xf]
      %v2873 = vld [vmem:[%s1802 + $0x8] sm:$0x1]
      %v2874 = vld [vmem:[%s1802 + $0xc] sm:$0xe]
      %v2875 = vld [vmem:[%s1802 + $0x10] sm:$0xf]
      %v2876 = vld [vmem:[%s1802 + $0x14] sm:$0x1]
      %v2877 = vld [vmem:[%s1802 + $0x18] sm:$0xe]
      %v2878 = vld [vmem:[%s1802 + $0x1c] sm:$0xf]
      %v2879 = vld [vmem:[%s1802 + $0x20] sm:$0x1]
      %v2880 = vld [vmem:[%s1802 + $0x24] sm:$0xe]
      %v2881 = vld [vmem:[%s1802 + $0x28] sm:$0xf]
      %v2882 = vld [vmem:[%s1802 + $0x2c] sm:$0x1]
      %v2883 = vld [vmem:[%s1802 + $0x30] sm:$0xe]
      %v2884 = vld [vmem:[%s1802 + $0x34] sm:$0xf]
      %v2885 = vld [vmem:[%s1802 + $0x38] sm:$0x1]
      %v2886 = vld [vmem:[%s1802 + $0x3c] sm:$0xe]
      %v2887 = vld [vmem:[%s1802 + $0x40] sm:$0xf]
      %v2888 = vld [vmem:[%s1802 + $0x44] sm:$0x1]
      %v2889 = vld [vmem:[%s1802 + $0x48] sm:$0xe]
      %v2890 = vld [vmem:[%s1802 + $0x4c] sm:$0xf]
      %v2891 = vld [vmem:[%s1802 + $0x50] sm:$0x1]
      %v2892 = vld [vmem:[%s1802 + $0x54] sm:$0xe]
      %v2893 = vld [vmem:[%s1802 + $0x58] sm:$0xf]
      %v2894 = vld [vmem:[%s1802 + $0x5c] sm:$0x1]
      %v2895 = vld [vmem:[%s1802 + $0x60] sm:$0xe]
      %v2896 = vld [vmem:[%s1802 + $0x64] sm:$0xf]
      %v2897 = vld [vmem:[%s1802 + $0x68] sm:$0x1]
      %v2898 = vld [vmem:[%s1802 + $0x6c] sm:$0xe]
      %v2899 = vld [vmem:[%s1802 + $0x70] sm:$0xf]
      %v2900 = vld [vmem:[%s1802 + $0x74] sm:$0x1]
      %v2901 = vld [vmem:[%s1802 + $0x78] sm:$0xe]
      %v2902 = vld [vmem:[%s1802 + $0x7c] sm:$0xf]
      %v2903 = vld [vmem:[%s1802 + $0x80] sm:$0x1]
      %v2904 = vld [vmem:[%s1802 + $0x84] sm:$0xe]
      %v2905 = vld [vmem:[%s1802 + $0x88] sm:$0xf]
      %v2906 = vld [vmem:[%s1802 + $0x8c] sm:$0x1]
      %v2907 = vld [vmem:[%s1802 + $0x90] sm:$0xe]
      %v2908 = vld [vmem:[%s1802 + $0x94] sm:$0xf]
      %v2909 = vld [vmem:[%s1802 + $0x98] sm:$0x1]
      %v2910 = vld [vmem:[%s1802 + $0x9c] sm:$0xe]
      %v2911 = vld [vmem:[%s1802 + $0xa0] sm:$0xf]
      %v2912 = vld [vmem:[%s1802 + $0xa4] sm:$0x1]
      %v2913 = vld [vmem:[%s1802 + $0xa8] sm:$0xe]
      %v2914 = vld [vmem:[%s1802 + $0xac] sm:$0xf]
      %v2915 = vld [vmem:[%s1802 + $0xb0] sm:$0x1]
      %v2916 = vld [vmem:[%s1802 + $0xb4] sm:$0xe]
      %v2917 = vld [vmem:[%s1802 + $0xb8] sm:$0xf]
      %v2918 = vld [vmem:[%s1802 + $0xbc] sm:$0x1]
      %v2967 = vrot.slane %v2871, 5
      %v2968 = vrot.slane %v2967, 4
      %v2969 = vrot.slane %v2872, 5
      %v2970 = vsel %vm1403, %v2968, %v2969
      %v2971 = vrot.slane %v2969, 4
      %v2972 = vrot.slane %v2873, 5
      %v2973 = vsel %vm1403, %v2971, %v2972
      %v2974 = vrot.slane %v2874, 5
      %v2975 = vrot.slane %v2974, 4
      %v2976 = vrot.slane %v2875, 5
      %v2977 = vsel %vm1403, %v2975, %v2976
      %v2978 = vrot.slane %v2976, 4
      %v2979 = vrot.slane %v2876, 5
      %v2980 = vsel %vm1403, %v2978, %v2979
      %v2981 = vrot.slane %v2877, 5
      %v2982 = vrot.slane %v2981, 4
      %v2983 = vrot.slane %v2878, 5
      %v2984 = vsel %vm1403, %v2982, %v2983
      %v2985 = vrot.slane %v2983, 4
      %v2986 = vrot.slane %v2879, 5
      %v2987 = vsel %vm1403, %v2985, %v2986
      %v2988 = vrot.slane %v2880, 5
      %v2989 = vrot.slane %v2988, 4
      %v2990 = vrot.slane %v2881, 5
      %v2991 = vsel %vm1403, %v2989, %v2990
      %v2992 = vrot.slane %v2990, 4
      %v2993 = vrot.slane %v2882, 5
      %v2994 = vsel %vm1403, %v2992, %v2993
      %v2995 = vrot.slane %v2883, 5
      %v2996 = vrot.slane %v2995, 4
      %v2997 = vrot.slane %v2884, 5
      %v2998 = vsel %vm1403, %v2996, %v2997
      %v2999 = vrot.slane %v2997, 4
      %v3000 = vrot.slane %v2885, 5
      %v3001 = vsel %vm1403, %v2999, %v3000
      %v3002 = vrot.slane %v2886, 5
      %v3003 = vrot.slane %v3002, 4
      %v3004 = vrot.slane %v2887, 5
      %v3005 = vsel %vm1403, %v3003, %v3004
      %v3006 = vrot.slane %v3004, 4
      %v3007 = vrot.slane %v2888, 5
      %v3008 = vsel %vm1403, %v3006, %v3007
      %v3009 = vrot.slane %v2889, 5
      %v3010 = vrot.slane %v3009, 4
      %v3011 = vrot.slane %v2890, 5
      %v3012 = vsel %vm1403, %v3010, %v3011
      %v3013 = vrot.slane %v3011, 4
      %v3014 = vrot.slane %v2891, 5
      %v3015 = vsel %vm1403, %v3013, %v3014
      %v3016 = vrot.slane %v2892, 5
      %v3017 = vrot.slane %v3016, 4
      %v3018 = vrot.slane %v2893, 5
      %v3019 = vsel %vm1403, %v3017, %v3018
      %v3020 = vrot.slane %v3018, 4
      %v3021 = vrot.slane %v2894, 5
      %v3022 = vsel %vm1403, %v3020, %v3021
      %v3023 = vrot.slane %v2895, 5
      %v3024 = vrot.slane %v3023, 4
      %v3025 = vrot.slane %v2896, 5
      %v3026 = vsel %vm1403, %v3024, %v3025
      %v3027 = vrot.slane %v3025, 4
      %v3028 = vrot.slane %v2897, 5
      %v3029 = vsel %vm1403, %v3027, %v3028
      %v3030 = vrot.slane %v2898, 5
      %v3031 = vrot.slane %v3030, 4
      %v3032 = vrot.slane %v2899, 5
      %v3033 = vsel %vm1403, %v3031, %v3032
      %v3034 = vrot.slane %v3032, 4
      %v3035 = vrot.slane %v2900, 5
      %v3036 = vsel %vm1403, %v3034, %v3035
      %v3037 = vrot.slane %v2901, 5
      %v3038 = vrot.slane %v3037, 4
      %v3039 = vrot.slane %v2902, 5
      %v3040 = vsel %vm1403, %v3038, %v3039
      %v3041 = vrot.slane %v3039, 4
      %v3042 = vrot.slane %v2903, 5
      %v3043 = vsel %vm1403, %v3041, %v3042
      %v3044 = vrot.slane %v2904, 5
      %v3045 = vrot.slane %v3044, 4
      %v3046 = vrot.slane %v2905, 5
      %v3047 = vsel %vm1403, %v3045, %v3046
      %v3048 = vrot.slane %v3046, 4
      %v3049 = vrot.slane %v2906, 5
      %v3050 = vsel %vm1403, %v3048, %v3049
      %v3051 = vrot.slane %v2907, 5
      %v3052 = vrot.slane %v3051, 4
      %v3053 = vrot.slane %v2908, 5
      %v3054 = vsel %vm1403, %v3052, %v3053
      %v3055 = vrot.slane %v3053, 4
      %v3056 = vrot.slane %v2909, 5
      %v3057 = vsel %vm1403, %v3055, %v3056
      %v3058 = vrot.slane %v2910, 5
      %v3059 = vrot.slane %v3058, 4
      %v3060 = vrot.slane %v2911, 5
      %v3061 = vsel %vm1403, %v3059, %v3060
      %v3062 = vrot.slane %v3060, 4
      %v3063 = vrot.slane %v2912, 5
      %v3064 = vsel %vm1403, %v3062, %v3063
      %v3065 = vrot.slane %v2913, 5
      %v3066 = vrot.slane %v3065, 4
      %v3067 = vrot.slane %v2914, 5
      %v3068 = vsel %vm1403, %v3066, %v3067
      %v3069 = vrot.slane %v3067, 4
      %v3070 = vrot.slane %v2915, 5
      %v3071 = vsel %vm1403, %v3069, %v3070
      %v3072 = vrot.slane %v2916, 5
      %v3073 = vrot.slane %v3072, 4
      %v3074 = vrot.slane %v2917, 5
      %v3075 = vsel %vm1403, %v3073, %v3074
      %v3076 = vrot.slane %v3074, 4
      %v3077 = vrot.slane %v2918, 5
      %v3078 = vsel %vm1403, %v3076, %v3077
      %s3079 = scalar_lea.vmem %s275, 20
      %v3080 = vld [vmem:[%s3079] sm:$0xf]
      %v3081 = vunpack.c.l.b16 %v2970
      %v3082 = vunpack.c.l.b16 %v2973
      %v3083 = vunpack.c.l.b16 %v2977
      %v3084 = vunpack.c.l.b16 %v2980
      %v3085 = vunpack.c.l.b16 %v2984
      %v3086 = vunpack.c.l.b16 %v2987
      %v3087 = vunpack.c.l.b16 %v2991
      %v3088 = vunpack.c.l.b16 %v2994
      %v3089 = vunpack.c.l.b16 %v2998
      %v3090 = vunpack.c.l.b16 %v3001
      %v3091 = vunpack.c.l.b16 %v3005
      %v3092 = vunpack.c.l.b16 %v3008
      %v3093 = vunpack.c.l.b16 %v3012
      %v3094 = vunpack.c.l.b16 %v3015
      %v3095 = vunpack.c.l.b16 %v3019
      %v3096 = vunpack.c.l.b16 %v3022
      %v3097 = vunpack.c.l.b16 %v3026
      %v3098 = vunpack.c.l.b16 %v3029
      %v3099 = vunpack.c.l.b16 %v3033
      %v3100 = vunpack.c.l.b16 %v3036
      %v3101 = vunpack.c.l.b16 %v3040
      %v3102 = vunpack.c.l.b16 %v3043
      %v3103 = vunpack.c.l.b16 %v3047
      %v3104 = vunpack.c.l.b16 %v3050
      %v3105 = vunpack.c.l.b16 %v3054
      %v3106 = vunpack.c.l.b16 %v3057
      %v3107 = vunpack.c.l.b16 %v3061
      %v3108 = vunpack.c.l.b16 %v3064
      %v3109 = vunpack.c.l.b16 %v3068
      %v3110 = vunpack.c.l.b16 %v3071
      %v3111 = vunpack.c.l.b16 %v3075
      %v3112 = vunpack.c.l.b16 %v3078
      %v3113 = vpack.c.b16 %v3082, %v3081
      %v3114 = vpack.c.b16 %v3084, %v3083
      %v3115 = vpack.c.b16 %v3086, %v3085
      %v3116 = vpack.c.b16 %v3088, %v3087
      %v3117 = vpack.c.b16 %v3090, %v3089
      %v3118 = vpack.c.b16 %v3092, %v3091
      %v3119 = vpack.c.b16 %v3094, %v3093
      %v3120 = vpack.c.b16 %v3096, %v3095
      %v3121 = vpack.c.b16 %v3098, %v3097
      %v3122 = vpack.c.b16 %v3100, %v3099
      %v3123 = vpack.c.b16 %v3102, %v3101
      %v3124 = vpack.c.b16 %v3104, %v3103
      %v3125 = vpack.c.b16 %v3106, %v3105
      %v3126 = vpack.c.b16 %v3108, %v3107
      %v3127 = vpack.c.b16 %v3110, %v3109
      %v3128 = vpack.c.b16 %v3112, %v3111
      %v3130 = vsel %vm409, %v3113, 0
      %v3133 = vsel %vm409, %v3114, 0
      %v3136 = vsel %vm409, %v3115, 0
      %v3139 = vsel %vm409, %v3116, 0
      %v3142 = vsel %vm409, %v3117, 0
      %v3145 = vsel %vm409, %v3118, 0
      %v3148 = vsel %vm409, %v3119, 0
      %v3151 = vsel %vm409, %v3120, 0
      %v3154 = vsel %vm409, %v3121, 0
      %v3157 = vsel %vm409, %v3122, 0
      %v3160 = vsel %vm409, %v3123, 0
      %v3163 = vsel %vm409, %v3124, 0
      %v3166 = vsel %vm409, %v3125, 0
      %v3169 = vsel %vm409, %v3126, 0
      %v3172 = vsel %vm409, %v3127, 0
      %v3175 = vsel %vm409, %v3128, 0
      %v3178 = vsel %vm458, %v3080, 0
      %3180 = vmatpush.bf16.msra.mxu0 0
      %3181 = vmatpush.bf16.msra.mxu0 0
      %3182 = vmatpush.bf16.msra.mxu0 0
      %3183 = vmatpush.bf16.msra.mxu0 0
      %3184 = vmatpush.bf16.msra.mxu0 0
      %3185 = vmatpush.bf16.msra.mxu0 0
      %3186 = vmatpush.bf16.msra.mxu0 0
      %3187 = vmatpush.bf16.msra.mxu0 %v3178
      %3188 = vmatmul.bf16.gmra.mxu0 %v3130
      %v3189 = vpop.f32.mrf.mxu0
      %v3190 = vadd.f32 0.0, %v3189
      %v3191 = vpop.f32.mrf.mxu0
      %v3192 = vadd.f32 0.0, %v3191
      %3193 = vmatmul.bf16.gmra.mxu0 %v3133
      %v3194 = vpop.f32.mrf.mxu0
      %v3195 = vadd.f32 0.0, %v3194
      %v3196 = vpop.f32.mrf.mxu0
      %v3197 = vadd.f32 0.0, %v3196
      %3198 = vmatmul.bf16.gmra.mxu0 %v3136
      %v3199 = vpop.f32.mrf.mxu0
      %v3200 = vadd.f32 0.0, %v3199
      %v3201 = vpop.f32.mrf.mxu0
      %v3202 = vadd.f32 0.0, %v3201
      %3203 = vmatmul.bf16.gmra.mxu0 %v3139
      %v3204 = vpop.f32.mrf.mxu0
      %v3205 = vadd.f32 0.0, %v3204
      %v3206 = vpop.f32.mrf.mxu0
      %v3207 = vadd.f32 0.0, %v3206
      %3208 = vmatmul.bf16.gmra.mxu0 %v3142
      %v3209 = vpop.f32.mrf.mxu0
      %v3210 = vadd.f32 0.0, %v3209
      %v3211 = vpop.f32.mrf.mxu0
      %v3212 = vadd.f32 0.0, %v3211
      %3213 = vmatmul.bf16.gmra.mxu0 %v3145
      %v3214 = vpop.f32.mrf.mxu0
      %v3215 = vadd.f32 0.0, %v3214
      %v3216 = vpop.f32.mrf.mxu0
      %v3217 = vadd.f32 0.0, %v3216
      %3218 = vmatmul.bf16.gmra.mxu0 %v3148
      %v3219 = vpop.f32.mrf.mxu0
      %v3220 = vadd.f32 0.0, %v3219
      %v3221 = vpop.f32.mrf.mxu0
      %v3222 = vadd.f32 0.0, %v3221
      %3223 = vmatmul.bf16.gmra.mxu0 %v3151
      %v3224 = vpop.f32.mrf.mxu0
      %v3225 = vadd.f32 0.0, %v3224
      %v3226 = vpop.f32.mrf.mxu0
      %v3227 = vadd.f32 0.0, %v3226
      %3228 = vmatmul.bf16.gmra.mxu0 %v3154
      %v3229 = vpop.f32.mrf.mxu0
      %v3230 = vadd.f32 0.0, %v3229
      %v3231 = vpop.f32.mrf.mxu0
      %v3232 = vadd.f32 0.0, %v3231
      %3233 = vmatmul.bf16.gmra.mxu0 %v3157
      %v3234 = vpop.f32.mrf.mxu0
      %v3235 = vadd.f32 0.0, %v3234
      %v3236 = vpop.f32.mrf.mxu0
      %v3237 = vadd.f32 0.0, %v3236
      %3238 = vmatmul.bf16.gmra.mxu0 %v3160
      %v3239 = vpop.f32.mrf.mxu0
      %v3240 = vadd.f32 0.0, %v3239
      %v3241 = vpop.f32.mrf.mxu0
      %v3242 = vadd.f32 0.0, %v3241
      %3243 = vmatmul.bf16.gmra.mxu0 %v3163
      %v3244 = vpop.f32.mrf.mxu0
      %v3245 = vadd.f32 0.0, %v3244
      %v3246 = vpop.f32.mrf.mxu0
      %v3247 = vadd.f32 0.0, %v3246
      %3248 = vmatmul.bf16.gmra.mxu0 %v3166
      %v3249 = vpop.f32.mrf.mxu0
      %v3250 = vadd.f32 0.0, %v3249
      %v3251 = vpop.f32.mrf.mxu0
      %v3252 = vadd.f32 0.0, %v3251
      %3253 = vmatmul.bf16.gmra.mxu0 %v3169
      %v3254 = vpop.f32.mrf.mxu0
      %v3255 = vadd.f32 0.0, %v3254
      %v3256 = vpop.f32.mrf.mxu0
      %v3257 = vadd.f32 0.0, %v3256
      %3258 = vmatmul.bf16.gmra.mxu0 %v3172
      %v3259 = vpop.f32.mrf.mxu0
      %v3260 = vadd.f32 0.0, %v3259
      %v3261 = vpop.f32.mrf.mxu0
      %v3262 = vadd.f32 0.0, %v3261
      %3263 = vmatmul.bf16.gmra.mxu0 %v3175
      %v3264 = vpop.f32.mrf.mxu0
      %v3265 = vadd.f32 0.0, %v3264
      %v3266 = vpop.f32.mrf.mxu0
      %v3267 = vadd.f32 0.0, %v3266
      %3268 = vdwg.mxu0
      %v3269 = vld [vmem:[#allocation2] sm:$0xff]
      %v3270 = vld [vmem:[#allocation2 + $0x8] sm:$0xff]
      %v3271 = vld [vmem:[#allocation2 + $0x10] sm:$0xff]
      %v3272 = vld [vmem:[#allocation2 + $0x18] sm:$0xff]
      %v3273 = vld [vmem:[#allocation2 + $0x20] sm:$0xff]
      %v3274 = vld [vmem:[#allocation2 + $0x28] sm:$0xff]
      %v3275 = vld [vmem:[#allocation2 + $0x30] sm:$0xff]
      %v3276 = vld [vmem:[#allocation2 + $0x38] sm:$0xff]
      %v3277 = vld [vmem:[#allocation2 + $0x40] sm:$0xff]
      %v3278 = vld [vmem:[#allocation2 + $0x48] sm:$0xff]
      %v3279 = vld [vmem:[#allocation2 + $0x50] sm:$0xff]
      %v3280 = vld [vmem:[#allocation2 + $0x58] sm:$0xff]
      %v3281 = vld [vmem:[#allocation2 + $0x60] sm:$0xff]
      %v3282 = vld [vmem:[#allocation2 + $0x68] sm:$0xff]
      %v3283 = vld [vmem:[#allocation2 + $0x70] sm:$0xff]
      %v3284 = vld [vmem:[#allocation2 + $0x78] sm:$0xff]
      %v3285 = vld [vmem:[#allocation2 + $0x80] sm:$0xff]
      %v3286 = vld [vmem:[#allocation2 + $0x88] sm:$0xff]
      %v3287 = vld [vmem:[#allocation2 + $0x90] sm:$0xff]
      %v3288 = vld [vmem:[#allocation2 + $0x98] sm:$0xff]
      %v3289 = vld [vmem:[#allocation2 + $0xa0] sm:$0xff]
      %v3290 = vld [vmem:[#allocation2 + $0xa8] sm:$0xff]
      %v3291 = vld [vmem:[#allocation2 + $0xb0] sm:$0xff]
      %v3292 = vld [vmem:[#allocation2 + $0xb8] sm:$0xff]
      %v3293 = vld [vmem:[#allocation2 + $0xc0] sm:$0xff]
      %v3294 = vld [vmem:[#allocation2 + $0xc8] sm:$0xff]
      %v3295 = vld [vmem:[#allocation2 + $0xd0] sm:$0xff]
      %v3296 = vld [vmem:[#allocation2 + $0xd8] sm:$0xff]
      %v3297 = vld [vmem:[#allocation2 + $0xe0] sm:$0xff]
      %v3298 = vld [vmem:[#allocation2 + $0xe8] sm:$0xff]
      %v3299 = vld [vmem:[#allocation2 + $0xf0] sm:$0xff]
      %v3300 = vld [vmem:[#allocation2 + $0xf8] sm:$0xff]
      %v3301 = vadd.f32 %v3269, %v3190
      %v3302 = vadd.f32 %v3270, %v3192
      %v3303 = vadd.f32 %v3271, %v3195
      %v3304 = vadd.f32 %v3272, %v3197
      %v3305 = vadd.f32 %v3273, %v3200
      %v3306 = vadd.f32 %v3274, %v3202
      %v3307 = vadd.f32 %v3275, %v3205
      %v3308 = vadd.f32 %v3276, %v3207
      %v3309 = vadd.f32 %v3277, %v3210
      %v3310 = vadd.f32 %v3278, %v3212
      %v3311 = vadd.f32 %v3279, %v3215
      %v3312 = vadd.f32 %v3280, %v3217
      %v3313 = vadd.f32 %v3281, %v3220
      %v3314 = vadd.f32 %v3282, %v3222
      %v3315 = vadd.f32 %v3283, %v3225
      %v3316 = vadd.f32 %v3284, %v3227
      %v3317 = vadd.f32 %v3285, %v3230
      %v3318 = vadd.f32 %v3286, %v3232
      %v3319 = vadd.f32 %v3287, %v3235
      %v3320 = vadd.f32 %v3288, %v3237
      %v3321 = vadd.f32 %v3289, %v3240
      %v3322 = vadd.f32 %v3290, %v3242
      %v3323 = vadd.f32 %v3291, %v3245
      %v3324 = vadd.f32 %v3292, %v3247
      %v3325 = vadd.f32 %v3293, %v3250
      %v3326 = vadd.f32 %v3294, %v3252
      %v3327 = vadd.f32 %v3295, %v3255
      %v3328 = vadd.f32 %v3296, %v3257
      %v3329 = vadd.f32 %v3297, %v3260
      %v3330 = vadd.f32 %v3298, %v3262
      %v3331 = vadd.f32 %v3299, %v3265
      %v3332 = vadd.f32 %v3300, %v3267
      %3333 = vst.msk [vmem:[#allocation2] sm:$0xff] %vm551, %v3301
      %3334 = vst.msk [vmem:[#allocation2 + $0x8] sm:$0xff] %vm551, %v3302
      %3335 = vst.msk [vmem:[#allocation2 + $0x10] sm:$0xff] %vm551, %v3303
      %3336 = vst.msk [vmem:[#allocation2 + $0x18] sm:$0xff] %vm551, %v3304
      %3337 = vst.msk [vmem:[#allocation2 + $0x20] sm:$0xff] %vm551, %v3305
      %3338 = vst.msk [vmem:[#allocation2 + $0x28] sm:$0xff] %vm551, %v3306
      %3339 = vst.msk [vmem:[#allocation2 + $0x30] sm:$0xff] %vm551, %v3307
      %3340 = vst.msk [vmem:[#allocation2 + $0x38] sm:$0xff] %vm551, %v3308
      %3341 = vst.msk [vmem:[#allocation2 + $0x40] sm:$0xff] %vm551, %v3309
      %3342 = vst.msk [vmem:[#allocation2 + $0x48] sm:$0xff] %vm551, %v3310
      %3343 = vst.msk [vmem:[#allocation2 + $0x50] sm:$0xff] %vm551, %v3311
      %3344 = vst.msk [vmem:[#allocation2 + $0x58] sm:$0xff] %vm551, %v3312
      %3345 = vst.msk [vmem:[#allocation2 + $0x60] sm:$0xff] %vm551, %v3313
      %3346 = vst.msk [vmem:[#allocation2 + $0x68] sm:$0xff] %vm551, %v3314
      %3347 = vst.msk [vmem:[#allocation2 + $0x70] sm:$0xff] %vm551, %v3315
      %3348 = vst.msk [vmem:[#allocation2 + $0x78] sm:$0xff] %vm551, %v3316
      %3349 = vst.msk [vmem:[#allocation2 + $0x80] sm:$0xff] %vm551, %v3317
      %3350 = vst.msk [vmem:[#allocation2 + $0x88] sm:$0xff] %vm551, %v3318
      %3351 = vst.msk [vmem:[#allocation2 + $0x90] sm:$0xff] %vm551, %v3319
      %3352 = vst.msk [vmem:[#allocation2 + $0x98] sm:$0xff] %vm551, %v3320
      %3353 = vst.msk [vmem:[#allocation2 + $0xa0] sm:$0xff] %vm551, %v3321
      %3354 = vst.msk [vmem:[#allocation2 + $0xa8] sm:$0xff] %vm551, %v3322
      %3355 = vst.msk [vmem:[#allocation2 + $0xb0] sm:$0xff] %vm551, %v3323
      %3356 = vst.msk [vmem:[#allocation2 + $0xb8] sm:$0xff] %vm551, %v3324
      %3357 = vst.msk [vmem:[#allocation2 + $0xc0] sm:$0xff] %vm551, %v3325
      %3358 = vst.msk [vmem:[#allocation2 + $0xc8] sm:$0xff] %vm551, %v3326
      %3359 = vst.msk [vmem:[#allocation2 + $0xd0] sm:$0xff] %vm551, %v3327
      %3360 = vst.msk [vmem:[#allocation2 + $0xd8] sm:$0xff] %vm551, %v3328
      %3361 = vst.msk [vmem:[#allocation2 + $0xe0] sm:$0xff] %vm551, %v3329
      %3362 = vst.msk [vmem:[#allocation2 + $0xe8] sm:$0xff] %vm551, %v3330
      %3363 = vst.msk [vmem:[#allocation2 + $0xf0] sm:$0xff] %vm551, %v3331
      %3364 = vst.msk [vmem:[#allocation2 + $0xf8] sm:$0xff] %vm551, %v3332
      %s3365 = scalar_lea.vmem %s271, 24
      %v3366 = vld [vmem:[%s3365] sm:$0xf]
      %v3367 = vld [vmem:[%s3365 + $0x4] sm:$0xf]
      %v3368 = vld [vmem:[%s3365 + $0xc] sm:$0xf]
      %v3369 = vld [vmem:[%s3365 + $0x10] sm:$0xf]
      %v3370 = vld [vmem:[%s3365 + $0x18] sm:$0xf]
      %v3371 = vld [vmem:[%s3365 + $0x1c] sm:$0xf]
      %v3372 = vld [vmem:[%s3365 + $0x24] sm:$0xf]
      %v3373 = vld [vmem:[%s3365 + $0x28] sm:$0xf]
      %v3374 = vld [vmem:[%s3365 + $0x30] sm:$0xf]
      %v3375 = vld [vmem:[%s3365 + $0x34] sm:$0xf]
      %v3376 = vld [vmem:[%s3365 + $0x3c] sm:$0xf]
      %v3377 = vld [vmem:[%s3365 + $0x40] sm:$0xf]
      %v3378 = vld [vmem:[%s3365 + $0x48] sm:$0xf]
      %v3379 = vld [vmem:[%s3365 + $0x4c] sm:$0xf]
      %v3380 = vld [vmem:[%s3365 + $0x54] sm:$0xf]
      %v3381 = vld [vmem:[%s3365 + $0x58] sm:$0xf]
      %v3382 = vld [vmem:[%s3365 + $0x60] sm:$0xf]
      %v3383 = vld [vmem:[%s3365 + $0x64] sm:$0xf]
      %v3384 = vld [vmem:[%s3365 + $0x6c] sm:$0xf]
      %v3385 = vld [vmem:[%s3365 + $0x70] sm:$0xf]
      %v3386 = vld [vmem:[%s3365 + $0x78] sm:$0xf]
      %v3387 = vld [vmem:[%s3365 + $0x7c] sm:$0xf]
      %v3388 = vld [vmem:[%s3365 + $0x84] sm:$0xf]
      %v3389 = vld [vmem:[%s3365 + $0x88] sm:$0xf]
      %v3390 = vld [vmem:[%s3365 + $0x90] sm:$0xf]
      %v3391 = vld [vmem:[%s3365 + $0x94] sm:$0xf]
      %v3392 = vld [vmem:[%s3365 + $0x9c] sm:$0xf]
      %v3393 = vld [vmem:[%s3365 + $0xa0] sm:$0xf]
      %v3394 = vld [vmem:[%s3365 + $0xa8] sm:$0xf]
      %v3395 = vld [vmem:[%s3365 + $0xac] sm:$0xf]
      %v3396 = vld [vmem:[%s3365 + $0xb4] sm:$0xf]
      %v3397 = vld [vmem:[%s3365 + $0xb8] sm:$0xf]
      %s3398 = scalar_lea.vmem %s275, 24
      %v3399 = vld [vmem:[%s3398] sm:$0xf]
      %v3432 = vunpack.c.l.b16 %v3366
      %v3433 = vunpack.c.l.b16 %v3367
      %v3434 = vunpack.c.l.b16 %v3368
      %v3435 = vunpack.c.l.b16 %v3369
      %v3436 = vunpack.c.l.b16 %v3370
      %v3437 = vunpack.c.l.b16 %v3371
      %v3438 = vunpack.c.l.b16 %v3372
      %v3439 = vunpack.c.l.b16 %v3373
      %v3440 = vunpack.c.l.b16 %v3374
      %v3441 = vunpack.c.l.b16 %v3375
      %v3442 = vunpack.c.l.b16 %v3376
      %v3443 = vunpack.c.l.b16 %v3377
      %v3444 = vunpack.c.l.b16 %v3378
      %v3445 = vunpack.c.l.b16 %v3379
      %v3446 = vunpack.c.l.b16 %v3380
      %v3447 = vunpack.c.l.b16 %v3381
      %v3448 = vunpack.c.l.b16 %v3382
      %v3449 = vunpack.c.l.b16 %v3383
      %v3450 = vunpack.c.l.b16 %v3384
      %v3451 = vunpack.c.l.b16 %v3385
      %v3452 = vunpack.c.l.b16 %v3386
      %v3453 = vunpack.c.l.b16 %v3387
      %v3454 = vunpack.c.l.b16 %v3388
      %v3455 = vunpack.c.l.b16 %v3389
      %v3456 = vunpack.c.l.b16 %v3390
      %v3457 = vunpack.c.l.b16 %v3391
      %v3458 = vunpack.c.l.b16 %v3392
      %v3459 = vunpack.c.l.b16 %v3393
      %v3460 = vunpack.c.l.b16 %v3394
      %v3461 = vunpack.c.l.b16 %v3395
      %v3462 = vunpack.c.l.b16 %v3396
      %v3463 = vunpack.c.l.b16 %v3397
      %v3464 = vpack.c.b16 %v3433, %v3432
      %v3465 = vpack.c.b16 %v3435, %v3434
      %v3466 = vpack.c.b16 %v3437, %v3436
      %v3467 = vpack.c.b16 %v3439, %v3438
      %v3468 = vpack.c.b16 %v3441, %v3440
      %v3469 = vpack.c.b16 %v3443, %v3442
      %v3470 = vpack.c.b16 %v3445, %v3444
      %v3471 = vpack.c.b16 %v3447, %v3446
      %v3472 = vpack.c.b16 %v3449, %v3448
      %v3473 = vpack.c.b16 %v3451, %v3450
      %v3474 = vpack.c.b16 %v3453, %v3452
      %v3475 = vpack.c.b16 %v3455, %v3454
      %v3476 = vpack.c.b16 %v3457, %v3456
      %v3477 = vpack.c.b16 %v3459, %v3458
      %v3478 = vpack.c.b16 %v3461, %v3460
      %v3479 = vpack.c.b16 %v3463, %v3462
      %v3481 = vsel %vm409, %v3464, 0
      %v3484 = vsel %vm409, %v3465, 0
      %v3487 = vsel %vm409, %v3466, 0
      %v3490 = vsel %vm409, %v3467, 0
      %v3493 = vsel %vm409, %v3468, 0
      %v3496 = vsel %vm409, %v3469, 0
      %v3499 = vsel %vm409, %v3470, 0
      %v3502 = vsel %vm409, %v3471, 0
      %v3505 = vsel %vm409, %v3472, 0
      %v3508 = vsel %vm409, %v3473, 0
      %v3511 = vsel %vm409, %v3474, 0
      %v3514 = vsel %vm409, %v3475, 0
      %v3517 = vsel %vm409, %v3476, 0
      %v3520 = vsel %vm409, %v3477, 0
      %v3523 = vsel %vm409, %v3478, 0
      %v3526 = vsel %vm409, %v3479, 0
      %v3529 = vsel %vm458, %v3399, 0
      %3531 = vmatpush.bf16.msra.mxu0 0
      %3532 = vmatpush.bf16.msra.mxu0 0
      %3533 = vmatpush.bf16.msra.mxu0 0
      %3534 = vmatpush.bf16.msra.mxu0 0
      %3535 = vmatpush.bf16.msra.mxu0 0
      %3536 = vmatpush.bf16.msra.mxu0 0
      %3537 = vmatpush.bf16.msra.mxu0 0
      %3538 = vmatpush.bf16.msra.mxu0 %v3529
      %3539 = vmatmul.bf16.gmra.mxu0 %v3481
      %v3540 = vpop.f32.mrf.mxu0
      %v3541 = vadd.f32 0.0, %v3540
      %v3542 = vpop.f32.mrf.mxu0
      %v3543 = vadd.f32 0.0, %v3542
      %3544 = vmatmul.bf16.gmra.mxu0 %v3484
      %v3545 = vpop.f32.mrf.mxu0
      %v3546 = vadd.f32 0.0, %v3545
      %v3547 = vpop.f32.mrf.mxu0
      %v3548 = vadd.f32 0.0, %v3547
      %3549 = vmatmul.bf16.gmra.mxu0 %v3487
      %v3550 = vpop.f32.mrf.mxu0
      %v3551 = vadd.f32 0.0, %v3550
      %v3552 = vpop.f32.mrf.mxu0
      %v3553 = vadd.f32 0.0, %v3552
      %3554 = vmatmul.bf16.gmra.mxu0 %v3490
      %v3555 = vpop.f32.mrf.mxu0
      %v3556 = vadd.f32 0.0, %v3555
      %v3557 = vpop.f32.mrf.mxu0
      %v3558 = vadd.f32 0.0, %v3557
      %3559 = vmatmul.bf16.gmra.mxu0 %v3493
      %v3560 = vpop.f32.mrf.mxu0
      %v3561 = vadd.f32 0.0, %v3560
      %v3562 = vpop.f32.mrf.mxu0
      %v3563 = vadd.f32 0.0, %v3562
      %3564 = vmatmul.bf16.gmra.mxu0 %v3496
      %v3565 = vpop.f32.mrf.mxu0
      %v3566 = vadd.f32 0.0, %v3565
      %v3567 = vpop.f32.mrf.mxu0
      %v3568 = vadd.f32 0.0, %v3567
      %3569 = vmatmul.bf16.gmra.mxu0 %v3499
      %v3570 = vpop.f32.mrf.mxu0
      %v3571 = vadd.f32 0.0, %v3570
      %v3572 = vpop.f32.mrf.mxu0
      %v3573 = vadd.f32 0.0, %v3572
      %3574 = vmatmul.bf16.gmra.mxu0 %v3502
      %v3575 = vpop.f32.mrf.mxu0
      %v3576 = vadd.f32 0.0, %v3575
      %v3577 = vpop.f32.mrf.mxu0
      %v3578 = vadd.f32 0.0, %v3577
      %3579 = vmatmul.bf16.gmra.mxu0 %v3505
      %v3580 = vpop.f32.mrf.mxu0
      %v3581 = vadd.f32 0.0, %v3580
      %v3582 = vpop.f32.mrf.mxu0
      %v3583 = vadd.f32 0.0, %v3582
      %3584 = vmatmul.bf16.gmra.mxu0 %v3508
      %v3585 = vpop.f32.mrf.mxu0
      %v3586 = vadd.f32 0.0, %v3585
      %v3587 = vpop.f32.mrf.mxu0
      %v3588 = vadd.f32 0.0, %v3587
      %3589 = vmatmul.bf16.gmra.mxu0 %v3511
      %v3590 = vpop.f32.mrf.mxu0
      %v3591 = vadd.f32 0.0, %v3590
      %v3592 = vpop.f32.mrf.mxu0
      %v3593 = vadd.f32 0.0, %v3592
      %3594 = vmatmul.bf16.gmra.mxu0 %v3514
      %v3595 = vpop.f32.mrf.mxu0
      %v3596 = vadd.f32 0.0, %v3595
      %v3597 = vpop.f32.mrf.mxu0
      %v3598 = vadd.f32 0.0, %v3597
      %3599 = vmatmul.bf16.gmra.mxu0 %v3517
      %v3600 = vpop.f32.mrf.mxu0
      %v3601 = vadd.f32 0.0, %v3600
      %v3602 = vpop.f32.mrf.mxu0
      %v3603 = vadd.f32 0.0, %v3602
      %3604 = vmatmul.bf16.gmra.mxu0 %v3520
      %v3605 = vpop.f32.mrf.mxu0
      %v3606 = vadd.f32 0.0, %v3605
      %v3607 = vpop.f32.mrf.mxu0
      %v3608 = vadd.f32 0.0, %v3607
      %3609 = vmatmul.bf16.gmra.mxu0 %v3523
      %v3610 = vpop.f32.mrf.mxu0
      %v3611 = vadd.f32 0.0, %v3610
      %v3612 = vpop.f32.mrf.mxu0
      %v3613 = vadd.f32 0.0, %v3612
      %3614 = vmatmul.bf16.gmra.mxu0 %v3526
      %v3615 = vpop.f32.mrf.mxu0
      %v3616 = vadd.f32 0.0, %v3615
      %v3617 = vpop.f32.mrf.mxu0
      %v3618 = vadd.f32 0.0, %v3617
      %3619 = vdwg.mxu0
      %v3620 = vld [vmem:[#allocation2] sm:$0xff]
      %v3621 = vld [vmem:[#allocation2 + $0x8] sm:$0xff]
      %v3622 = vld [vmem:[#allocation2 + $0x10] sm:$0xff]
      %v3623 = vld [vmem:[#allocation2 + $0x18] sm:$0xff]
      %v3624 = vld [vmem:[#allocation2 + $0x20] sm:$0xff]
      %v3625 = vld [vmem:[#allocation2 + $0x28] sm:$0xff]
      %v3626 = vld [vmem:[#allocation2 + $0x30] sm:$0xff]
      %v3627 = vld [vmem:[#allocation2 + $0x38] sm:$0xff]
      %v3628 = vld [vmem:[#allocation2 + $0x40] sm:$0xff]
      %v3629 = vld [vmem:[#allocation2 + $0x48] sm:$0xff]
      %v3630 = vld [vmem:[#allocation2 + $0x50] sm:$0xff]
      %v3631 = vld [vmem:[#allocation2 + $0x58] sm:$0xff]
      %v3632 = vld [vmem:[#allocation2 + $0x60] sm:$0xff]
      %v3633 = vld [vmem:[#allocation2 + $0x68] sm:$0xff]
      %v3634 = vld [vmem:[#allocation2 + $0x70] sm:$0xff]
      %v3635 = vld [vmem:[#allocation2 + $0x78] sm:$0xff]
      %v3636 = vld [vmem:[#allocation2 + $0x80] sm:$0xff]
      %v3637 = vld [vmem:[#allocation2 + $0x88] sm:$0xff]
      %v3638 = vld [vmem:[#allocation2 + $0x90] sm:$0xff]
      %v3639 = vld [vmem:[#allocation2 + $0x98] sm:$0xff]
      %v3640 = vld [vmem:[#allocation2 + $0xa0] sm:$0xff]
      %v3641 = vld [vmem:[#allocation2 + $0xa8] sm:$0xff]
      %v3642 = vld [vmem:[#allocation2 + $0xb0] sm:$0xff]
      %v3643 = vld [vmem:[#allocation2 + $0xb8] sm:$0xff]
      %v3644 = vld [vmem:[#allocation2 + $0xc0] sm:$0xff]
      %v3645 = vld [vmem:[#allocation2 + $0xc8] sm:$0xff]
      %v3646 = vld [vmem:[#allocation2 + $0xd0] sm:$0xff]
      %v3647 = vld [vmem:[#allocation2 + $0xd8] sm:$0xff]
      %v3648 = vld [vmem:[#allocation2 + $0xe0] sm:$0xff]
      %v3649 = vld [vmem:[#allocation2 + $0xe8] sm:$0xff]
      %v3650 = vld [vmem:[#allocation2 + $0xf0] sm:$0xff]
      %v3651 = vld [vmem:[#allocation2 + $0xf8] sm:$0xff]
      %v3652 = vadd.f32 %v3620, %v3541
      %v3653 = vadd.f32 %v3621, %v3543
      %v3654 = vadd.f32 %v3622, %v3546
      %v3655 = vadd.f32 %v3623, %v3548
      %v3656 = vadd.f32 %v3624, %v3551
      %v3657 = vadd.f32 %v3625, %v3553
      %v3658 = vadd.f32 %v3626, %v3556
      %v3659 = vadd.f32 %v3627, %v3558
      %v3660 = vadd.f32 %v3628, %v3561
      %v3661 = vadd.f32 %v3629, %v3563
      %v3662 = vadd.f32 %v3630, %v3566
      %v3663 = vadd.f32 %v3631, %v3568
      %v3664 = vadd.f32 %v3632, %v3571
      %v3665 = vadd.f32 %v3633, %v3573
      %v3666 = vadd.f32 %v3634, %v3576
      %v3667 = vadd.f32 %v3635, %v3578
      %v3668 = vadd.f32 %v3636, %v3581
      %v3669 = vadd.f32 %v3637, %v3583
      %v3670 = vadd.f32 %v3638, %v3586
      %v3671 = vadd.f32 %v3639, %v3588
      %v3672 = vadd.f32 %v3640, %v3591
      %v3673 = vadd.f32 %v3641, %v3593
      %v3674 = vadd.f32 %v3642, %v3596
      %v3675 = vadd.f32 %v3643, %v3598
      %v3676 = vadd.f32 %v3644, %v3601
      %v3677 = vadd.f32 %v3645, %v3603
      %v3678 = vadd.f32 %v3646, %v3606
      %v3679 = vadd.f32 %v3647, %v3608
      %v3680 = vadd.f32 %v3648, %v3611
      %v3681 = vadd.f32 %v3649, %v3613
      %v3682 = vadd.f32 %v3650, %v3616
      %v3683 = vadd.f32 %v3651, %v3618
      %3684 = vst.msk [vmem:[#allocation2] sm:$0xff] %vm551, %v3652
      %3685 = vst.msk [vmem:[#allocation2 + $0x8] sm:$0xff] %vm551, %v3653
      %3686 = vst.msk [vmem:[#allocation2 + $0x10] sm:$0xff] %vm551, %v3654
      %3687 = vst.msk [vmem:[#allocation2 + $0x18] sm:$0xff] %vm551, %v3655
      %3688 = vst.msk [vmem:[#allocation2 + $0x20] sm:$0xff] %vm551, %v3656
      %3689 = vst.msk [vmem:[#allocation2 + $0x28] sm:$0xff] %vm551, %v3657
      %3690 = vst.msk [vmem:[#allocation2 + $0x30] sm:$0xff] %vm551, %v3658
      %3691 = vst.msk [vmem:[#allocation2 + $0x38] sm:$0xff] %vm551, %v3659
      %3692 = vst.msk [vmem:[#allocation2 + $0x40] sm:$0xff] %vm551, %v3660
      %3693 = vst.msk [vmem:[#allocation2 + $0x48] sm:$0xff] %vm551, %v3661
      %3694 = vst.msk [vmem:[#allocation2 + $0x50] sm:$0xff] %vm551, %v3662
      %3695 = vst.msk [vmem:[#allocation2 + $0x58] sm:$0xff] %vm551, %v3663
      %3696 = vst.msk [vmem:[#allocation2 + $0x60] sm:$0xff] %vm551, %v3664
      %3697 = vst.msk [vmem:[#allocation2 + $0x68] sm:$0xff] %vm551, %v3665
      %3698 = vst.msk [vmem:[#allocation2 + $0x70] sm:$0xff] %vm551, %v3666
      %3699 = vst.msk [vmem:[#allocation2 + $0x78] sm:$0xff] %vm551, %v3667
      %3700 = vst.msk [vmem:[#allocation2 + $0x80] sm:$0xff] %vm551, %v3668
      %3701 = vst.msk [vmem:[#allocation2 + $0x88] sm:$0xff] %vm551, %v3669
      %3702 = vst.msk [vmem:[#allocation2 + $0x90] sm:$0xff] %vm551, %v3670
      %3703 = vst.msk [vmem:[#allocation2 + $0x98] sm:$0xff] %vm551, %v3671
      %3704 = vst.msk [vmem:[#allocation2 + $0xa0] sm:$0xff] %vm551, %v3672
      %3705 = vst.msk [vmem:[#allocation2 + $0xa8] sm:$0xff] %vm551, %v3673
      %3706 = vst.msk [vmem:[#allocation2 + $0xb0] sm:$0xff] %vm551, %v3674
      %3707 = vst.msk [vmem:[#allocation2 + $0xb8] sm:$0xff] %vm551, %v3675
      %3708 = vst.msk [vmem:[#allocation2 + $0xc0] sm:$0xff] %vm551, %v3676
      %3709 = vst.msk [vmem:[#allocation2 + $0xc8] sm:$0xff] %vm551, %v3677
      %3710 = vst.msk [vmem:[#allocation2 + $0xd0] sm:$0xff] %vm551, %v3678
      %3711 = vst.msk [vmem:[#allocation2 + $0xd8] sm:$0xff] %vm551, %v3679
      %3712 = vst.msk [vmem:[#allocation2 + $0xe0] sm:$0xff] %vm551, %v3680
      %3713 = vst.msk [vmem:[#allocation2 + $0xe8] sm:$0xff] %vm551, %v3681
      %3714 = vst.msk [vmem:[#allocation2 + $0xf0] sm:$0xff] %vm551, %v3682
      %3715 = vst.msk [vmem:[#allocation2 + $0xf8] sm:$0xff] %vm551, %v3683
      %v3716 = vld [vmem:[%s3365] sm:$0xf]
      %v3717 = vld [vmem:[%s3365 + $0x4] sm:$0xf]
      %v3718 = vld [vmem:[%s3365 + $0x8] sm:$0x1]
      %v3719 = vld [vmem:[%s3365 + $0xc] sm:$0xf]
      %v3720 = vld [vmem:[%s3365 + $0x10] sm:$0xf]
      %v3721 = vld [vmem:[%s3365 + $0x14] sm:$0x1]
      %v3722 = vld [vmem:[%s3365 + $0x18] sm:$0xf]
      %v3723 = vld [vmem:[%s3365 + $0x1c] sm:$0xf]
      %v3724 = vld [vmem:[%s3365 + $0x20] sm:$0x1]
      %v3725 = vld [vmem:[%s3365 + $0x24] sm:$0xf]
      %v3726 = vld [vmem:[%s3365 + $0x28] sm:$0xf]
      %v3727 = vld [vmem:[%s3365 + $0x2c] sm:$0x1]
      %v3728 = vld [vmem:[%s3365 + $0x30] sm:$0xf]
      %v3729 = vld [vmem:[%s3365 + $0x34] sm:$0xf]
      %v3730 = vld [vmem:[%s3365 + $0x38] sm:$0x1]
      %v3731 = vld [vmem:[%s3365 + $0x3c] sm:$0xf]
      %v3732 = vld [vmem:[%s3365 + $0x40] sm:$0xf]
      %v3733 = vld [vmem:[%s3365 + $0x44] sm:$0x1]
      %v3734 = vld [vmem:[%s3365 + $0x48] sm:$0xf]
      %v3735 = vld [vmem:[%s3365 + $0x4c] sm:$0xf]
      %v3736 = vld [vmem:[%s3365 + $0x50] sm:$0x1]
      %v3737 = vld [vmem:[%s3365 + $0x54] sm:$0xf]
      %v3738 = vld [vmem:[%s3365 + $0x58] sm:$0xf]
      %v3739 = vld [vmem:[%s3365 + $0x5c] sm:$0x1]
      %v3740 = vld [vmem:[%s3365 + $0x60] sm:$0xf]
      %v3741 = vld [vmem:[%s3365 + $0x64] sm:$0xf]
      %v3742 = vld [vmem:[%s3365 + $0x68] sm:$0x1]
      %v3743 = vld [vmem:[%s3365 + $0x6c] sm:$0xf]
      %v3744 = vld [vmem:[%s3365 + $0x70] sm:$0xf]
      %v3745 = vld [vmem:[%s3365 + $0x74] sm:$0x1]
      %v3746 = vld [vmem:[%s3365 + $0x78] sm:$0xf]
      %v3747 = vld [vmem:[%s3365 + $0x7c] sm:$0xf]
      %v3748 = vld [vmem:[%s3365 + $0x80] sm:$0x1]
      %v3749 = vld [vmem:[%s3365 + $0x84] sm:$0xf]
      %v3750 = vld [vmem:[%s3365 + $0x88] sm:$0xf]
      %v3751 = vld [vmem:[%s3365 + $0x8c] sm:$0x1]
      %v3752 = vld [vmem:[%s3365 + $0x90] sm:$0xf]
      %v3753 = vld [vmem:[%s3365 + $0x94] sm:$0xf]
      %v3754 = vld [vmem:[%s3365 + $0x98] sm:$0x1]
      %v3755 = vld [vmem:[%s3365 + $0x9c] sm:$0xf]
      %v3756 = vld [vmem:[%s3365 + $0xa0] sm:$0xf]
      %v3757 = vld [vmem:[%s3365 + $0xa4] sm:$0x1]
      %v3758 = vld [vmem:[%s3365 + $0xa8] sm:$0xf]
      %v3759 = vld [vmem:[%s3365 + $0xac] sm:$0xf]
      %v3760 = vld [vmem:[%s3365 + $0xb0] sm:$0x1]
      %v3761 = vld [vmem:[%s3365 + $0xb4] sm:$0xf]
      %v3762 = vld [vmem:[%s3365 + $0xb8] sm:$0xf]
      %v3763 = vld [vmem:[%s3365 + $0xbc] sm:$0x1]
      %v3765 = vshrl.u32 %v3716, 16
      %v3767 = vrot.slane %v3765, 4
      %v3768 = vshll.u32 %v3716, 16
      %v3770 = vrot.slane %v3768, 5
      %v3771 = vor.u32 %v3767, %v3770
      %v3772 = vrot.slane %v3771, 4
      %v3774 = vshll.u32 %v3717, 16
      %v3776 = vrot.slane %v3774, 5
      %v3777 = vsel %vm634, %v3772, %v3776
      %v3778 = vshrl.u32 %v3717, 16
      %v3780 = vrot.slane %v3778, 4
      %v3781 = vor.u32 %v3780, %v3776
      %v3782 = vrot.slane %v3781, 4
      %v3784 = vshll.u32 %v3718, 16
      %v3786 = vrot.slane %v3784, 5
      %v3787 = vsel %vm634, %v3782, %v3786
      %v3789 = vshrl.u32 %v3719, 16
      %v3791 = vrot.slane %v3789, 4
      %v3792 = vshll.u32 %v3719, 16
      %v3794 = vrot.slane %v3792, 5
      %v3795 = vor.u32 %v3791, %v3794
      %v3796 = vrot.slane %v3795, 4
      %v3798 = vshll.u32 %v3720, 16
      %v3800 = vrot.slane %v3798, 5
      %v3801 = vsel %vm634, %v3796, %v3800
      %v3802 = vshrl.u32 %v3720, 16
      %v3804 = vrot.slane %v3802, 4
      %v3805 = vor.u32 %v3804, %v3800
      %v3806 = vrot.slane %v3805, 4
      %v3808 = vshll.u32 %v3721, 16
      %v3810 = vrot.slane %v3808, 5
      %v3811 = vsel %vm634, %v3806, %v3810
      %v3813 = vshrl.u32 %v3722, 16
      %v3815 = vrot.slane %v3813, 4
      %v3816 = vshll.u32 %v3722, 16
      %v3818 = vrot.slane %v3816, 5
      %v3819 = vor.u32 %v3815, %v3818
      %v3820 = vrot.slane %v3819, 4
      %v3822 = vshll.u32 %v3723, 16
      %v3824 = vrot.slane %v3822, 5
      %v3825 = vsel %vm634, %v3820, %v3824
      %v3826 = vshrl.u32 %v3723, 16
      %v3828 = vrot.slane %v3826, 4
      %v3829 = vor.u32 %v3828, %v3824
      %v3830 = vrot.slane %v3829, 4
      %v3832 = vshll.u32 %v3724, 16
      %v3834 = vrot.slane %v3832, 5
      %v3835 = vsel %vm634, %v3830, %v3834
      %v3837 = vshrl.u32 %v3725, 16
      %v3839 = vrot.slane %v3837, 4
      %v3840 = vshll.u32 %v3725, 16
      %v3842 = vrot.slane %v3840, 5
      %v3843 = vor.u32 %v3839, %v3842
      %v3844 = vrot.slane %v3843, 4
      %v3846 = vshll.u32 %v3726, 16
      %v3848 = vrot.slane %v3846, 5
      %v3849 = vsel %vm634, %v3844, %v3848
      %v3850 = vshrl.u32 %v3726, 16
      %v3852 = vrot.slane %v3850, 4
      %v3853 = vor.u32 %v3852, %v3848
      %v3854 = vrot.slane %v3853, 4
      %v3856 = vshll.u32 %v3727, 16
      %v3858 = vrot.slane %v3856, 5
      %v3859 = vsel %vm634, %v3854, %v3858
      %v3861 = vshrl.u32 %v3728, 16
      %v3863 = vrot.slane %v3861, 4
      %v3864 = vshll.u32 %v3728, 16
      %v3866 = vrot.slane %v3864, 5
      %v3867 = vor.u32 %v3863, %v3866
      %v3868 = vrot.slane %v3867, 4
      %v3870 = vshll.u32 %v3729, 16
      %v3872 = vrot.slane %v3870, 5
      %v3873 = vsel %vm634, %v3868, %v3872
      %v3874 = vshrl.u32 %v3729, 16
      %v3876 = vrot.slane %v3874, 4
      %v3877 = vor.u32 %v3876, %v3872
      %v3878 = vrot.slane %v3877, 4
      %v3880 = vshll.u32 %v3730, 16
      %v3882 = vrot.slane %v3880, 5
      %v3883 = vsel %vm634, %v3878, %v3882
      %v3885 = vshrl.u32 %v3731, 16
      %v3887 = vrot.slane %v3885, 4
      %v3888 = vshll.u32 %v3731, 16
      %v3890 = vrot.slane %v3888, 5
      %v3891 = vor.u32 %v3887, %v3890
      %v3892 = vrot.slane %v3891, 4
      %v3894 = vshll.u32 %v3732, 16
      %v3896 = vrot.slane %v3894, 5
      %v3897 = vsel %vm634, %v3892, %v3896
      %v3898 = vshrl.u32 %v3732, 16
      %v3900 = vrot.slane %v3898, 4
      %v3901 = vor.u32 %v3900, %v3896
      %v3902 = vrot.slane %v3901, 4
      %v3904 = vshll.u32 %v3733, 16
      %v3906 = vrot.slane %v3904, 5
      %v3907 = vsel %vm634, %v3902, %v3906
      %v3909 = vshrl.u32 %v3734, 16
      %v3911 = vrot.slane %v3909, 4
      %v3912 = vshll.u32 %v3734, 16
      %v3914 = vrot.slane %v3912, 5
      %v3915 = vor.u32 %v3911, %v3914
      %v3916 = vrot.slane %v3915, 4
      %v3918 = vshll.u32 %v3735, 16
      %v3920 = vrot.slane %v3918, 5
      %v3921 = vsel %vm634, %v3916, %v3920
      %v3922 = vshrl.u32 %v3735, 16
      %v3924 = vrot.slane %v3922, 4
      %v3925 = vor.u32 %v3924, %v3920
      %v3926 = vrot.slane %v3925, 4
      %v3928 = vshll.u32 %v3736, 16
      %v3930 = vrot.slane %v3928, 5
      %v3931 = vsel %vm634, %v3926, %v3930
      %v3933 = vshrl.u32 %v3737, 16
      %v3935 = vrot.slane %v3933, 4
      %v3936 = vshll.u32 %v3737, 16
      %v3938 = vrot.slane %v3936, 5
      %v3939 = vor.u32 %v3935, %v3938
      %v3940 = vrot.slane %v3939, 4
      %v3942 = vshll.u32 %v3738, 16
      %v3944 = vrot.slane %v3942, 5
      %v3945 = vsel %vm634, %v3940, %v3944
      %v3946 = vshrl.u32 %v3738, 16
      %v3948 = vrot.slane %v3946, 4
      %v3949 = vor.u32 %v3948, %v3944
      %v3950 = vrot.slane %v3949, 4
      %v3952 = vshll.u32 %v3739, 16
      %v3954 = vrot.slane %v3952, 5
      %v3955 = vsel %vm634, %v3950, %v3954
      %v3957 = vshrl.u32 %v3740, 16
      %v3959 = vrot.slane %v3957, 4
      %v3960 = vshll.u32 %v3740, 16
      %v3962 = vrot.slane %v3960, 5
      %v3963 = vor.u32 %v3959, %v3962
      %v3964 = vrot.slane %v3963, 4
      %v3966 = vshll.u32 %v3741, 16
      %v3968 = vrot.slane %v3966, 5
      %v3969 = vsel %vm634, %v3964, %v3968
      %v3970 = vshrl.u32 %v3741, 16
      %v3972 = vrot.slane %v3970, 4
      %v3973 = vor.u32 %v3972, %v3968
      %v3974 = vrot.slane %v3973, 4
      %v3976 = vshll.u32 %v3742, 16
      %v3978 = vrot.slane %v3976, 5
      %v3979 = vsel %vm634, %v3974, %v3978
      %v3981 = vshrl.u32 %v3743, 16
      %v3983 = vrot.slane %v3981, 4
      %v3984 = vshll.u32 %v3743, 16
      %v3986 = vrot.slane %v3984, 5
      %v3987 = vor.u32 %v3983, %v3986
      %v3988 = vrot.slane %v3987, 4
      %v3990 = vshll.u32 %v3744, 16
      %v3992 = vrot.slane %v3990, 5
      %v3993 = vsel %vm634, %v3988, %v3992
      %v3994 = vshrl.u32 %v3744, 16
      %v3996 = vrot.slane %v3994, 4
      %v3997 = vor.u32 %v3996, %v3992
      %v3998 = vrot.slane %v3997, 4
      %v4000 = vshll.u32 %v3745, 16
      %v4002 = vrot.slane %v4000, 5
      %v4003 = vsel %vm634, %v3998, %v4002
      %v4005 = vshrl.u32 %v3746, 16
      %v4007 = vrot.slane %v4005, 4
      %v4008 = vshll.u32 %v3746, 16
      %v4010 = vrot.slane %v4008, 5
      %v4011 = vor.u32 %v4007, %v4010
      %v4012 = vrot.slane %v4011, 4
      %v4014 = vshll.u32 %v3747, 16
      %v4016 = vrot.slane %v4014, 5
      %v4017 = vsel %vm634, %v4012, %v4016
      %v4018 = vshrl.u32 %v3747, 16
      %v4020 = vrot.slane %v4018, 4
      %v4021 = vor.u32 %v4020, %v4016
      %v4022 = vrot.slane %v4021, 4
      %v4024 = vshll.u32 %v3748, 16
      %v4026 = vrot.slane %v4024, 5
      %v4027 = vsel %vm634, %v4022, %v4026
      %v4029 = vshrl.u32 %v3749, 16
      %v4031 = vrot.slane %v4029, 4
      %v4032 = vshll.u32 %v3749, 16
      %v4034 = vrot.slane %v4032, 5
      %v4035 = vor.u32 %v4031, %v4034
      %v4036 = vrot.slane %v4035, 4
      %v4038 = vshll.u32 %v3750, 16
      %v4040 = vrot.slane %v4038, 5
      %v4041 = vsel %vm634, %v4036, %v4040
      %v4042 = vshrl.u32 %v3750, 16
      %v4044 = vrot.slane %v4042, 4
      %v4045 = vor.u32 %v4044, %v4040
      %v4046 = vrot.slane %v4045, 4
      %v4048 = vshll.u32 %v3751, 16
      %v4050 = vrot.slane %v4048, 5
      %v4051 = vsel %vm634, %v4046, %v4050
      %v4053 = vshrl.u32 %v3752, 16
      %v4055 = vrot.slane %v4053, 4
      %v4056 = vshll.u32 %v3752, 16
      %v4058 = vrot.slane %v4056, 5
      %v4059 = vor.u32 %v4055, %v4058
      %v4060 = vrot.slane %v4059, 4
      %v4062 = vshll.u32 %v3753, 16
      %v4064 = vrot.slane %v4062, 5
      %v4065 = vsel %vm634, %v4060, %v4064
      %v4066 = vshrl.u32 %v3753, 16
      %v4068 = vrot.slane %v4066, 4
      %v4069 = vor.u32 %v4068, %v4064
      %v4070 = vrot.slane %v4069, 4
      %v4072 = vshll.u32 %v3754, 16
      %v4074 = vrot.slane %v4072, 5
      %v4075 = vsel %vm634, %v4070, %v4074
      %v4077 = vshrl.u32 %v3755, 16
      %v4079 = vrot.slane %v4077, 4
      %v4080 = vshll.u32 %v3755, 16
      %v4082 = vrot.slane %v4080, 5
      %v4083 = vor.u32 %v4079, %v4082
      %v4084 = vrot.slane %v4083, 4
      %v4086 = vshll.u32 %v3756, 16
      %v4088 = vrot.slane %v4086, 5
      %v4089 = vsel %vm634, %v4084, %v4088
      %v4090 = vshrl.u32 %v3756, 16
      %v4092 = vrot.slane %v4090, 4
      %v4093 = vor.u32 %v4092, %v4088
      %v4094 = vrot.slane %v4093, 4
      %v4096 = vshll.u32 %v3757, 16
      %v4098 = vrot.slane %v4096, 5
      %v4099 = vsel %vm634, %v4094, %v4098
      %v4101 = vshrl.u32 %v3758, 16
      %v4103 = vrot.slane %v4101, 4
      %v4104 = vshll.u32 %v3758, 16
      %v4106 = vrot.slane %v4104, 5
      %v4107 = vor.u32 %v4103, %v4106
      %v4108 = vrot.slane %v4107, 4
      %v4110 = vshll.u32 %v3759, 16
      %v4112 = vrot.slane %v4110, 5
      %v4113 = vsel %vm634, %v4108, %v4112
      %v4114 = vshrl.u32 %v3759, 16
      %v4116 = vrot.slane %v4114, 4
      %v4117 = vor.u32 %v4116, %v4112
      %v4118 = vrot.slane %v4117, 4
      %v4120 = vshll.u32 %v3760, 16
      %v4122 = vrot.slane %v4120, 5
      %v4123 = vsel %vm634, %v4118, %v4122
      %v4125 = vshrl.u32 %v3761, 16
      %v4127 = vrot.slane %v4125, 4
      %v4128 = vshll.u32 %v3761, 16
      %v4130 = vrot.slane %v4128, 5
      %v4131 = vor.u32 %v4127, %v4130
      %v4132 = vrot.slane %v4131, 4
      %v4134 = vshll.u32 %v3762, 16
      %v4136 = vrot.slane %v4134, 5
      %v4137 = vsel %vm634, %v4132, %v4136
      %v4138 = vshrl.u32 %v3762, 16
      %v4140 = vrot.slane %v4138, 4
      %v4141 = vor.u32 %v4140, %v4136
      %v4142 = vrot.slane %v4141, 4
      %v4144 = vshll.u32 %v3763, 16
      %v4146 = vrot.slane %v4144, 5
      %v4147 = vsel %vm634, %v4142, %v4146
      %s4148 = scalar_lea.vmem %s275, 28
      %v4149 = vld [vmem:[%s4148] sm:$0xf]
      %v4150 = vunpack.c.l.b16 %v3777
      %v4151 = vunpack.c.l.b16 %v3787
      %v4152 = vunpack.c.l.b16 %v3801
      %v4153 = vunpack.c.l.b16 %v3811
      %v4154 = vunpack.c.l.b16 %v3825
      %v4155 = vunpack.c.l.b16 %v3835
      %v4156 = vunpack.c.l.b16 %v3849
      %v4157 = vunpack.c.l.b16 %v3859
      %v4158 = vunpack.c.l.b16 %v3873
      %v4159 = vunpack.c.l.b16 %v3883
      %v4160 = vunpack.c.l.b16 %v3897
      %v4161 = vunpack.c.l.b16 %v3907
      %v4162 = vunpack.c.l.b16 %v3921
      %v4163 = vunpack.c.l.b16 %v3931
      %v4164 = vunpack.c.l.b16 %v3945
      %v4165 = vunpack.c.l.b16 %v3955
      %v4166 = vunpack.c.l.b16 %v3969
      %v4167 = vunpack.c.l.b16 %v3979
      %v4168 = vunpack.c.l.b16 %v3993
      %v4169 = vunpack.c.l.b16 %v4003
      %v4170 = vunpack.c.l.b16 %v4017
      %v4171 = vunpack.c.l.b16 %v4027
      %v4172 = vunpack.c.l.b16 %v4041
      %v4173 = vunpack.c.l.b16 %v4051
      %v4174 = vunpack.c.l.b16 %v4065
      %v4175 = vunpack.c.l.b16 %v4075
      %v4176 = vunpack.c.l.b16 %v4089
      %v4177 = vunpack.c.l.b16 %v4099
      %v4178 = vunpack.c.l.b16 %v4113
      %v4179 = vunpack.c.l.b16 %v4123
      %v4180 = vunpack.c.l.b16 %v4137
      %v4181 = vunpack.c.l.b16 %v4147
      %v4182 = vpack.c.b16 %v4151, %v4150
      %v4183 = vpack.c.b16 %v4153, %v4152
      %v4184 = vpack.c.b16 %v4155, %v4154
      %v4185 = vpack.c.b16 %v4157, %v4156
      %v4186 = vpack.c.b16 %v4159, %v4158
      %v4187 = vpack.c.b16 %v4161, %v4160
      %v4188 = vpack.c.b16 %v4163, %v4162
      %v4189 = vpack.c.b16 %v4165, %v4164
      %v4190 = vpack.c.b16 %v4167, %v4166
      %v4191 = vpack.c.b16 %v4169, %v4168
      %v4192 = vpack.c.b16 %v4171, %v4170
      %v4193 = vpack.c.b16 %v4173, %v4172
      %v4194 = vpack.c.b16 %v4175, %v4174
      %v4195 = vpack.c.b16 %v4177, %v4176
      %v4196 = vpack.c.b16 %v4179, %v4178
      %v4197 = vpack.c.b16 %v4181, %v4180
      %v4199 = vsel %vm409, %v4182, 0
      %v4202 = vsel %vm409, %v4183, 0
      %v4205 = vsel %vm409, %v4184, 0
      %v4208 = vsel %vm409, %v4185, 0
      %v4211 = vsel %vm409, %v4186, 0
      %v4214 = vsel %vm409, %v4187, 0
      %v4217 = vsel %vm409, %v4188, 0
      %v4220 = vsel %vm409, %v4189, 0
      %v4223 = vsel %vm409, %v4190, 0
      %v4226 = vsel %vm409, %v4191, 0
      %v4229 = vsel %vm409, %v4192, 0
      %v4232 = vsel %vm409, %v4193, 0
      %v4235 = vsel %vm409, %v4194, 0
      %v4238 = vsel %vm409, %v4195, 0
      %v4241 = vsel %vm409, %v4196, 0
      %v4244 = vsel %vm409, %v4197, 0
      %v4247 = vsel %vm458, %v4149, 0
      %4249 = vmatpush.bf16.msra.mxu0 0
      %4250 = vmatpush.bf16.msra.mxu0 0
      %4251 = vmatpush.bf16.msra.mxu0 0
      %4252 = vmatpush.bf16.msra.mxu0 0
      %4253 = vmatpush.bf16.msra.mxu0 0
      %4254 = vmatpush.bf16.msra.mxu0 0
      %4255 = vmatpush.bf16.msra.mxu0 0
      %4256 = vmatpush.bf16.msra.mxu0 %v4247
      %4257 = vmatmul.bf16.gmra.mxu0 %v4199
      %v4258 = vpop.f32.mrf.mxu0
      %v4259 = vadd.f32 0.0, %v4258
      %v4260 = vpop.f32.mrf.mxu0
      %v4261 = vadd.f32 0.0, %v4260
      %4262 = vmatmul.bf16.gmra.mxu0 %v4202
      %v4263 = vpop.f32.mrf.mxu0
      %v4264 = vadd.f32 0.0, %v4263
      %v4265 = vpop.f32.mrf.mxu0
      %v4266 = vadd.f32 0.0, %v4265
      %4267 = vmatmul.bf16.gmra.mxu0 %v4205
      %v4268 = vpop.f32.mrf.mxu0
      %v4269 = vadd.f32 0.0, %v4268
      %v4270 = vpop.f32.mrf.mxu0
      %v4271 = vadd.f32 0.0, %v4270
      %4272 = vmatmul.bf16.gmra.mxu0 %v4208
      %v4273 = vpop.f32.mrf.mxu0
      %v4274 = vadd.f32 0.0, %v4273
      %v4275 = vpop.f32.mrf.mxu0
      %v4276 = vadd.f32 0.0, %v4275
      %4277 = vmatmul.bf16.gmra.mxu0 %v4211
      %v4278 = vpop.f32.mrf.mxu0
      %v4279 = vadd.f32 0.0, %v4278
      %v4280 = vpop.f32.mrf.mxu0
      %v4281 = vadd.f32 0.0, %v4280
      %4282 = vmatmul.bf16.gmra.mxu0 %v4214
      %v4283 = vpop.f32.mrf.mxu0
      %v4284 = vadd.f32 0.0, %v4283
      %v4285 = vpop.f32.mrf.mxu0
      %v4286 = vadd.f32 0.0, %v4285
      %4287 = vmatmul.bf16.gmra.mxu0 %v4217
      %v4288 = vpop.f32.mrf.mxu0
      %v4289 = vadd.f32 0.0, %v4288
      %v4290 = vpop.f32.mrf.mxu0
      %v4291 = vadd.f32 0.0, %v4290
      %4292 = vmatmul.bf16.gmra.mxu0 %v4220
      %v4293 = vpop.f32.mrf.mxu0
      %v4294 = vadd.f32 0.0, %v4293
      %v4295 = vpop.f32.mrf.mxu0
      %v4296 = vadd.f32 0.0, %v4295
      %4297 = vmatmul.bf16.gmra.mxu0 %v4223
      %v4298 = vpop.f32.mrf.mxu0
      %v4299 = vadd.f32 0.0, %v4298
      %v4300 = vpop.f32.mrf.mxu0
      %v4301 = vadd.f32 0.0, %v4300
      %4302 = vmatmul.bf16.gmra.mxu0 %v4226
      %v4303 = vpop.f32.mrf.mxu0
      %v4304 = vadd.f32 0.0, %v4303
      %v4305 = vpop.f32.mrf.mxu0
      %v4306 = vadd.f32 0.0, %v4305
      %4307 = vmatmul.bf16.gmra.mxu0 %v4229
      %v4308 = vpop.f32.mrf.mxu0
      %v4309 = vadd.f32 0.0, %v4308
      %v4310 = vpop.f32.mrf.mxu0
      %v4311 = vadd.f32 0.0, %v4310
      %4312 = vmatmul.bf16.gmra.mxu0 %v4232
      %v4313 = vpop.f32.mrf.mxu0
      %v4314 = vadd.f32 0.0, %v4313
      %v4315 = vpop.f32.mrf.mxu0
      %v4316 = vadd.f32 0.0, %v4315
      %4317 = vmatmul.bf16.gmra.mxu0 %v4235
      %v4318 = vpop.f32.mrf.mxu0
      %v4319 = vadd.f32 0.0, %v4318
      %v4320 = vpop.f32.mrf.mxu0
      %v4321 = vadd.f32 0.0, %v4320
      %4322 = vmatmul.bf16.gmra.mxu0 %v4238
      %v4323 = vpop.f32.mrf.mxu0
      %v4324 = vadd.f32 0.0, %v4323
      %v4325 = vpop.f32.mrf.mxu0
      %v4326 = vadd.f32 0.0, %v4325
      %4327 = vmatmul.bf16.gmra.mxu0 %v4241
      %v4328 = vpop.f32.mrf.mxu0
      %v4329 = vadd.f32 0.0, %v4328
      %v4330 = vpop.f32.mrf.mxu0
      %v4331 = vadd.f32 0.0, %v4330
      %4332 = vmatmul.bf16.gmra.mxu0 %v4244
      %v4333 = vpop.f32.mrf.mxu0
      %v4334 = vadd.f32 0.0, %v4333
      %v4335 = vpop.f32.mrf.mxu0
      %v4336 = vadd.f32 0.0, %v4335
      %4337 = vdwg.mxu0
      %v4338 = vld [vmem:[#allocation2] sm:$0xff]
      %v4339 = vld [vmem:[#allocation2 + $0x8] sm:$0xff]
      %v4340 = vld [vmem:[#allocation2 + $0x10] sm:$0xff]
      %v4341 = vld [vmem:[#allocation2 + $0x18] sm:$0xff]
      %v4342 = vld [vmem:[#allocation2 + $0x20] sm:$0xff]
      %v4343 = vld [vmem:[#allocation2 + $0x28] sm:$0xff]
      %v4344 = vld [vmem:[#allocation2 + $0x30] sm:$0xff]
      %v4345 = vld [vmem:[#allocation2 + $0x38] sm:$0xff]
      %v4346 = vld [vmem:[#allocation2 + $0x40] sm:$0xff]
      %v4347 = vld [vmem:[#allocation2 + $0x48] sm:$0xff]
      %v4348 = vld [vmem:[#allocation2 + $0x50] sm:$0xff]
      %v4349 = vld [vmem:[#allocation2 + $0x58] sm:$0xff]
      %v4350 = vld [vmem:[#allocation2 + $0x60] sm:$0xff]
      %v4351 = vld [vmem:[#allocation2 + $0x68] sm:$0xff]
      %v4352 = vld [vmem:[#allocation2 + $0x70] sm:$0xff]
      %v4353 = vld [vmem:[#allocation2 + $0x78] sm:$0xff]
      %v4354 = vld [vmem:[#allocation2 + $0x80] sm:$0xff]
      %v4355 = vld [vmem:[#allocation2 + $0x88] sm:$0xff]
      %v4356 = vld [vmem:[#allocation2 + $0x90] sm:$0xff]
      %v4357 = vld [vmem:[#allocation2 + $0x98] sm:$0xff]
      %v4358 = vld [vmem:[#allocation2 + $0xa0] sm:$0xff]
      %v4359 = vld [vmem:[#allocation2 + $0xa8] sm:$0xff]
      %v4360 = vld [vmem:[#allocation2 + $0xb0] sm:$0xff]
      %v4361 = vld [vmem:[#allocation2 + $0xb8] sm:$0xff]
      %v4362 = vld [vmem:[#allocation2 + $0xc0] sm:$0xff]
      %v4363 = vld [vmem:[#allocation2 + $0xc8] sm:$0xff]
      %v4364 = vld [vmem:[#allocation2 + $0xd0] sm:$0xff]
      %v4365 = vld [vmem:[#allocation2 + $0xd8] sm:$0xff]
      %v4366 = vld [vmem:[#allocation2 + $0xe0] sm:$0xff]
      %v4367 = vld [vmem:[#allocation2 + $0xe8] sm:$0xff]
      %v4368 = vld [vmem:[#allocation2 + $0xf0] sm:$0xff]
      %v4369 = vld [vmem:[#allocation2 + $0xf8] sm:$0xff]
      %v4370 = vadd.f32 %v4338, %v4259
      %v4371 = vadd.f32 %v4339, %v4261
      %v4372 = vadd.f32 %v4340, %v4264
      %v4373 = vadd.f32 %v4341, %v4266
      %v4374 = vadd.f32 %v4342, %v4269
      %v4375 = vadd.f32 %v4343, %v4271
      %v4376 = vadd.f32 %v4344, %v4274
      %v4377 = vadd.f32 %v4345, %v4276
      %v4378 = vadd.f32 %v4346, %v4279
      %v4379 = vadd.f32 %v4347, %v4281
      %v4380 = vadd.f32 %v4348, %v4284
      %v4381 = vadd.f32 %v4349, %v4286
      %v4382 = vadd.f32 %v4350, %v4289
      %v4383 = vadd.f32 %v4351, %v4291
      %v4384 = vadd.f32 %v4352, %v4294
      %v4385 = vadd.f32 %v4353, %v4296
      %v4386 = vadd.f32 %v4354, %v4299
      %v4387 = vadd.f32 %v4355, %v4301
      %v4388 = vadd.f32 %v4356, %v4304
      %v4389 = vadd.f32 %v4357, %v4306
      %v4390 = vadd.f32 %v4358, %v4309
      %v4391 = vadd.f32 %v4359, %v4311
      %v4392 = vadd.f32 %v4360, %v4314
      %v4393 = vadd.f32 %v4361, %v4316
      %v4394 = vadd.f32 %v4362, %v4319
      %v4395 = vadd.f32 %v4363, %v4321
      %v4396 = vadd.f32 %v4364, %v4324
      %v4397 = vadd.f32 %v4365, %v4326
      %v4398 = vadd.f32 %v4366, %v4329
      %v4399 = vadd.f32 %v4367, %v4331
      %v4400 = vadd.f32 %v4368, %v4334
      %v4401 = vadd.f32 %v4369, %v4336
      %4402 = vst.msk [vmem:[#allocation2] sm:$0xff] %vm551, %v4370
      %4403 = vst.msk [vmem:[#allocation2 + $0x8] sm:$0xff] %vm551, %v4371
      %4404 = vst.msk [vmem:[#allocation2 + $0x10] sm:$0xff] %vm551, %v4372
      %4405 = vst.msk [vmem:[#allocation2 + $0x18] sm:$0xff] %vm551, %v4373
      %4406 = vst.msk [vmem:[#allocation2 + $0x20] sm:$0xff] %vm551, %v4374
      %4407 = vst.msk [vmem:[#allocation2 + $0x28] sm:$0xff] %vm551, %v4375
      %4408 = vst.msk [vmem:[#allocation2 + $0x30] sm:$0xff] %vm551, %v4376
      %4409 = vst.msk [vmem:[#allocation2 + $0x38] sm:$0xff] %vm551, %v4377
      %4410 = vst.msk [vmem:[#allocation2 + $0x40] sm:$0xff] %vm551, %v4378
      %4411 = vst.msk [vmem:[#allocation2 + $0x48] sm:$0xff] %vm551, %v4379
      %4412 = vst.msk [vmem:[#allocation2 + $0x50] sm:$0xff] %vm551, %v4380
      %4413 = vst.msk [vmem:[#allocation2 + $0x58] sm:$0xff] %vm551, %v4381
      %4414 = vst.msk [vmem:[#allocation2 + $0x60] sm:$0xff] %vm551, %v4382
      %4415 = vst.msk [vmem:[#allocation2 + $0x68] sm:$0xff] %vm551, %v4383
      %4416 = vst.msk [vmem:[#allocation2 + $0x70] sm:$0xff] %vm551, %v4384
      %4417 = vst.msk [vmem:[#allocation2 + $0x78] sm:$0xff] %vm551, %v4385
      %4418 = vst.msk [vmem:[#allocation2 + $0x80] sm:$0xff] %vm551, %v4386
      %4419 = vst.msk [vmem:[#allocation2 + $0x88] sm:$0xff] %vm551, %v4387
      %4420 = vst.msk [vmem:[#allocation2 + $0x90] sm:$0xff] %vm551, %v4388
      %4421 = vst.msk [vmem:[#allocation2 + $0x98] sm:$0xff] %vm551, %v4389
      %4422 = vst.msk [vmem:[#allocation2 + $0xa0] sm:$0xff] %vm551, %v4390
      %4423 = vst.msk [vmem:[#allocation2 + $0xa8] sm:$0xff] %vm551, %v4391
      %4424 = vst.msk [vmem:[#allocation2 + $0xb0] sm:$0xff] %vm551, %v4392
      %4425 = vst.msk [vmem:[#allocation2 + $0xb8] sm:$0xff] %vm551, %v4393
      %4426 = vst.msk [vmem:[#allocation2 + $0xc0] sm:$0xff] %vm551, %v4394
      %4427 = vst.msk [vmem:[#allocation2 + $0xc8] sm:$0xff] %vm551, %v4395
      %4428 = vst.msk [vmem:[#allocation2 + $0xd0] sm:$0xff] %vm551, %v4396
      %4429 = vst.msk [vmem:[#allocation2 + $0xd8] sm:$0xff] %vm551, %v4397
      %4430 = vst.msk [vmem:[#allocation2 + $0xe0] sm:$0xff] %vm551, %v4398
      %4431 = vst.msk [vmem:[#allocation2 + $0xe8] sm:$0xff] %vm551, %v4399
      %4432 = vst.msk [vmem:[#allocation2 + $0xf0] sm:$0xff] %vm551, %v4400
      %4433 = vst.msk [vmem:[#allocation2 + $0xf8] sm:$0xff] %vm551, %v4401
      %v4434 = vld [vmem:[%s3365] sm:$0xe]
      %v4435 = vld [vmem:[%s3365 + $0x4] sm:$0xf]
      %v4436 = vld [vmem:[%s3365 + $0x8] sm:$0x1]
      %v4437 = vld [vmem:[%s3365 + $0xc] sm:$0xe]
      %v4438 = vld [vmem:[%s3365 + $0x10] sm:$0xf]
      %v4439 = vld [vmem:[%s3365 + $0x14] sm:$0x1]
      %v4440 = vld [vmem:[%s3365 + $0x18] sm:$0xe]
      %v4441 = vld [vmem:[%s3365 + $0x1c] sm:$0xf]
      %v4442 = vld [vmem:[%s3365 + $0x20] sm:$0x1]
      %v4443 = vld [vmem:[%s3365 + $0x24] sm:$0xe]
      %v4444 = vld [vmem:[%s3365 + $0x28] sm:$0xf]
      %v4445 = vld [vmem:[%s3365 + $0x2c] sm:$0x1]
      %v4446 = vld [vmem:[%s3365 + $0x30] sm:$0xe]
      %v4447 = vld [vmem:[%s3365 + $0x34] sm:$0xf]
      %v4448 = vld [vmem:[%s3365 + $0x38] sm:$0x1]
      %v4449 = vld [vmem:[%s3365 + $0x3c] sm:$0xe]
      %v4450 = vld [vmem:[%s3365 + $0x40] sm:$0xf]
      %v4451 = vld [vmem:[%s3365 + $0x44] sm:$0x1]
      %v4452 = vld [vmem:[%s3365 + $0x48] sm:$0xe]
      %v4453 = vld [vmem:[%s3365 + $0x4c] sm:$0xf]
      %v4454 = vld [vmem:[%s3365 + $0x50] sm:$0x1]
      %v4455 = vld [vmem:[%s3365 + $0x54] sm:$0xe]
      %v4456 = vld [vmem:[%s3365 + $0x58] sm:$0xf]
      %v4457 = vld [vmem:[%s3365 + $0x5c] sm:$0x1]
      %v4458 = vld [vmem:[%s3365 + $0x60] sm:$0xe]
      %v4459 = vld [vmem:[%s3365 + $0x64] sm:$0xf]
      %v4460 = vld [vmem:[%s3365 + $0x68] sm:$0x1]
      %v4461 = vld [vmem:[%s3365 + $0x6c] sm:$0xe]
      %v4462 = vld [vmem:[%s3365 + $0x70] sm:$0xf]
      %v4463 = vld [vmem:[%s3365 + $0x74] sm:$0x1]
      %v4464 = vld [vmem:[%s3365 + $0x78] sm:$0xe]
      %v4465 = vld [vmem:[%s3365 + $0x7c] sm:$0xf]
      %v4466 = vld [vmem:[%s3365 + $0x80] sm:$0x1]
      %v4467 = vld [vmem:[%s3365 + $0x84] sm:$0xe]
      %v4468 = vld [vmem:[%s3365 + $0x88] sm:$0xf]
      %v4469 = vld [vmem:[%s3365 + $0x8c] sm:$0x1]
      %v4470 = vld [vmem:[%s3365 + $0x90] sm:$0xe]
      %v4471 = vld [vmem:[%s3365 + $0x94] sm:$0xf]
      %v4472 = vld [vmem:[%s3365 + $0x98] sm:$0x1]
      %v4473 = vld [vmem:[%s3365 + $0x9c] sm:$0xe]
      %v4474 = vld [vmem:[%s3365 + $0xa0] sm:$0xf]
      %v4475 = vld [vmem:[%s3365 + $0xa4] sm:$0x1]
      %v4476 = vld [vmem:[%s3365 + $0xa8] sm:$0xe]
      %v4477 = vld [vmem:[%s3365 + $0xac] sm:$0xf]
      %v4478 = vld [vmem:[%s3365 + $0xb0] sm:$0x1]
      %v4479 = vld [vmem:[%s3365 + $0xb4] sm:$0xe]
      %v4480 = vld [vmem:[%s3365 + $0xb8] sm:$0xf]
      %v4481 = vld [vmem:[%s3365 + $0xbc] sm:$0x1]
      %v4530 = vrot.slane %v4434, 5
      %v4531 = vrot.slane %v4530, 4
      %v4532 = vrot.slane %v4435, 5
      %v4533 = vsel %vm1403, %v4531, %v4532
      %v4534 = vrot.slane %v4532, 4
      %v4535 = vrot.slane %v4436, 5
      %v4536 = vsel %vm1403, %v4534, %v4535
      %v4537 = vrot.slane %v4437, 5
      %v4538 = vrot.slane %v4537, 4
      %v4539 = vrot.slane %v4438, 5
      %v4540 = vsel %vm1403, %v4538, %v4539
      %v4541 = vrot.slane %v4539, 4
      %v4542 = vrot.slane %v4439, 5
      %v4543 = vsel %vm1403, %v4541, %v4542
      %v4544 = vrot.slane %v4440, 5
      %v4545 = vrot.slane %v4544, 4
      %v4546 = vrot.slane %v4441, 5
      %v4547 = vsel %vm1403, %v4545, %v4546
      %v4548 = vrot.slane %v4546, 4
      %v4549 = vrot.slane %v4442, 5
      %v4550 = vsel %vm1403, %v4548, %v4549
      %v4551 = vrot.slane %v4443, 5
      %v4552 = vrot.slane %v4551, 4
      %v4553 = vrot.slane %v4444, 5
      %v4554 = vsel %vm1403, %v4552, %v4553
      %v4555 = vrot.slane %v4553, 4
      %v4556 = vrot.slane %v4445, 5
      %v4557 = vsel %vm1403, %v4555, %v4556
      %v4558 = vrot.slane %v4446, 5
      %v4559 = vrot.slane %v4558, 4
      %v4560 = vrot.slane %v4447, 5
      %v4561 = vsel %vm1403, %v4559, %v4560
      %v4562 = vrot.slane %v4560, 4
      %v4563 = vrot.slane %v4448, 5
      %v4564 = vsel %vm1403, %v4562, %v4563
      %v4565 = vrot.slane %v4449, 5
      %v4566 = vrot.slane %v4565, 4
      %v4567 = vrot.slane %v4450, 5
      %v4568 = vsel %vm1403, %v4566, %v4567
      %v4569 = vrot.slane %v4567, 4
      %v4570 = vrot.slane %v4451, 5
      %v4571 = vsel %vm1403, %v4569, %v4570
      %v4572 = vrot.slane %v4452, 5
      %v4573 = vrot.slane %v4572, 4
      %v4574 = vrot.slane %v4453, 5
      %v4575 = vsel %vm1403, %v4573, %v4574
      %v4576 = vrot.slane %v4574, 4
      %v4577 = vrot.slane %v4454, 5
      %v4578 = vsel %vm1403, %v4576, %v4577
      %v4579 = vrot.slane %v4455, 5
      %v4580 = vrot.slane %v4579, 4
      %v4581 = vrot.slane %v4456, 5
      %v4582 = vsel %vm1403, %v4580, %v4581
      %v4583 = vrot.slane %v4581, 4
      %v4584 = vrot.slane %v4457, 5
      %v4585 = vsel %vm1403, %v4583, %v4584
      %v4586 = vrot.slane %v4458, 5
      %v4587 = vrot.slane %v4586, 4
      %v4588 = vrot.slane %v4459, 5
      %v4589 = vsel %vm1403, %v4587, %v4588
      %v4590 = vrot.slane %v4588, 4
      %v4591 = vrot.slane %v4460, 5
      %v4592 = vsel %vm1403, %v4590, %v4591
      %v4593 = vrot.slane %v4461, 5
      %v4594 = vrot.slane %v4593, 4
      %v4595 = vrot.slane %v4462, 5
      %v4596 = vsel %vm1403, %v4594, %v4595
      %v4597 = vrot.slane %v4595, 4
      %v4598 = vrot.slane %v4463, 5
      %v4599 = vsel %vm1403, %v4597, %v4598
      %v4600 = vrot.slane %v4464, 5
      %v4601 = vrot.slane %v4600, 4
      %v4602 = vrot.slane %v4465, 5
      %v4603 = vsel %vm1403, %v4601, %v4602
      %v4604 = vrot.slane %v4602, 4
      %v4605 = vrot.slane %v4466, 5
      %v4606 = vsel %vm1403, %v4604, %v4605
      %v4607 = vrot.slane %v4467, 5
      %v4608 = vrot.slane %v4607, 4
      %v4609 = vrot.slane %v4468, 5
      %v4610 = vsel %vm1403, %v4608, %v4609
      %v4611 = vrot.slane %v4609, 4
      %v4612 = vrot.slane %v4469, 5
      %v4613 = vsel %vm1403, %v4611, %v4612
      %v4614 = vrot.slane %v4470, 5
      %v4615 = vrot.slane %v4614, 4
      %v4616 = vrot.slane %v4471, 5
      %v4617 = vsel %vm1403, %v4615, %v4616
      %v4618 = vrot.slane %v4616, 4
      %v4619 = vrot.slane %v4472, 5
      %v4620 = vsel %vm1403, %v4618, %v4619
      %v4621 = vrot.slane %v4473, 5
      %v4622 = vrot.slane %v4621, 4
      %v4623 = vrot.slane %v4474, 5
      %v4624 = vsel %vm1403, %v4622, %v4623
      %v4625 = vrot.slane %v4623, 4
      %v4626 = vrot.slane %v4475, 5
      %v4627 = vsel %vm1403, %v4625, %v4626
      %v4628 = vrot.slane %v4476, 5
      %v4629 = vrot.slane %v4628, 4
      %v4630 = vrot.slane %v4477, 5
      %v4631 = vsel %vm1403, %v4629, %v4630
      %v4632 = vrot.slane %v4630, 4
      %v4633 = vrot.slane %v4478, 5
      %v4634 = vsel %vm1403, %v4632, %v4633
      %v4635 = vrot.slane %v4479, 5
      %v4636 = vrot.slane %v4635, 4
      %v4637 = vrot.slane %v4480, 5
      %v4638 = vsel %vm1403, %v4636, %v4637
      %v4639 = vrot.slane %v4637, 4
      %v4640 = vrot.slane %v4481, 5
      %v4641 = vsel %vm1403, %v4639, %v4640
      %s4642 = scalar_lea.vmem %s275, 32
      %v4643 = vld [vmem:[%s4642] sm:$0xf]
      %v4644 = vunpack.c.l.b16 %v4533
      %v4645 = vunpack.c.l.b16 %v4536
      %v4646 = vunpack.c.l.b16 %v4540
      %v4647 = vunpack.c.l.b16 %v4543
      %v4648 = vunpack.c.l.b16 %v4547
      %v4649 = vunpack.c.l.b16 %v4550
      %v4650 = vunpack.c.l.b16 %v4554
      %v4651 = vunpack.c.l.b16 %v4557
      %v4652 = vunpack.c.l.b16 %v4561
      %v4653 = vunpack.c.l.b16 %v4564
      %v4654 = vunpack.c.l.b16 %v4568
      %v4655 = vunpack.c.l.b16 %v4571
      %v4656 = vunpack.c.l.b16 %v4575
      %v4657 = vunpack.c.l.b16 %v4578
      %v4658 = vunpack.c.l.b16 %v4582
      %v4659 = vunpack.c.l.b16 %v4585
      %v4660 = vunpack.c.l.b16 %v4589
      %v4661 = vunpack.c.l.b16 %v4592
      %v4662 = vunpack.c.l.b16 %v4596
      %v4663 = vunpack.c.l.b16 %v4599
      %v4664 = vunpack.c.l.b16 %v4603
      %v4665 = vunpack.c.l.b16 %v4606
      %v4666 = vunpack.c.l.b16 %v4610
      %v4667 = vunpack.c.l.b16 %v4613
      %v4668 = vunpack.c.l.b16 %v4617
      %v4669 = vunpack.c.l.b16 %v4620
      %v4670 = vunpack.c.l.b16 %v4624
      %v4671 = vunpack.c.l.b16 %v4627
      %v4672 = vunpack.c.l.b16 %v4631
      %v4673 = vunpack.c.l.b16 %v4634
      %v4674 = vunpack.c.l.b16 %v4638
      %v4675 = vunpack.c.l.b16 %v4641
      %v4676 = vpack.c.b16 %v4645, %v4644
      %v4677 = vpack.c.b16 %v4647, %v4646
      %v4678 = vpack.c.b16 %v4649, %v4648
      %v4679 = vpack.c.b16 %v4651, %v4650
      %v4680 = vpack.c.b16 %v4653, %v4652
      %v4681 = vpack.c.b16 %v4655, %v4654
      %v4682 = vpack.c.b16 %v4657, %v4656
      %v4683 = vpack.c.b16 %v4659, %v4658
      %v4684 = vpack.c.b16 %v4661, %v4660
      %v4685 = vpack.c.b16 %v4663, %v4662
      %v4686 = vpack.c.b16 %v4665, %v4664
      %v4687 = vpack.c.b16 %v4667, %v4666
      %v4688 = vpack.c.b16 %v4669, %v4668
      %v4689 = vpack.c.b16 %v4671, %v4670
      %v4690 = vpack.c.b16 %v4673, %v4672
      %v4691 = vpack.c.b16 %v4675, %v4674
      %v4693 = vsel %vm409, %v4676, 0
      %v4696 = vsel %vm409, %v4677, 0
      %v4699 = vsel %vm409, %v4678, 0
      %v4702 = vsel %vm409, %v4679, 0
      %v4705 = vsel %vm409, %v4680, 0
      %v4708 = vsel %vm409, %v4681, 0
      %v4711 = vsel %vm409, %v4682, 0
      %v4714 = vsel %vm409, %v4683, 0
      %v4717 = vsel %vm409, %v4684, 0
      %v4720 = vsel %vm409, %v4685, 0
      %v4723 = vsel %vm409, %v4686, 0
      %v4726 = vsel %vm409, %v4687, 0
      %v4729 = vsel %vm409, %v4688, 0
      %v4732 = vsel %vm409, %v4689, 0
      %v4735 = vsel %vm409, %v4690, 0
      %v4738 = vsel %vm409, %v4691, 0
      %v4741 = vsel %vm458, %v4643, 0
      %4743 = vmatpush.bf16.msra.mxu0 0
      %4744 = vmatpush.bf16.msra.mxu0 0
      %4745 = vmatpush.bf16.msra.mxu0 0
      %4746 = vmatpush.bf16.msra.mxu0 0
      %4747 = vmatpush.bf16.msra.mxu0 0
      %4748 = vmatpush.bf16.msra.mxu0 0
      %4749 = vmatpush.bf16.msra.mxu0 0
      %4750 = vmatpush.bf16.msra.mxu0 %v4741
      %4751 = vmatmul.bf16.gmra.mxu0 %v4693
      %v4752 = vpop.f32.mrf.mxu0
      %v4753 = vadd.f32 0.0, %v4752
      %v4754 = vpop.f32.mrf.mxu0
      %v4755 = vadd.f32 0.0, %v4754
      %4756 = vmatmul.bf16.gmra.mxu0 %v4696
      %v4757 = vpop.f32.mrf.mxu0
      %v4758 = vadd.f32 0.0, %v4757
      %v4759 = vpop.f32.mrf.mxu0
      %v4760 = vadd.f32 0.0, %v4759
      %4761 = vmatmul.bf16.gmra.mxu0 %v4699
      %v4762 = vpop.f32.mrf.mxu0
      %v4763 = vadd.f32 0.0, %v4762
      %v4764 = vpop.f32.mrf.mxu0
      %v4765 = vadd.f32 0.0, %v4764
      %4766 = vmatmul.bf16.gmra.mxu0 %v4702
      %v4767 = vpop.f32.mrf.mxu0
      %v4768 = vadd.f32 0.0, %v4767
      %v4769 = vpop.f32.mrf.mxu0
      %v4770 = vadd.f32 0.0, %v4769
      %4771 = vmatmul.bf16.gmra.mxu0 %v4705
      %v4772 = vpop.f32.mrf.mxu0
      %v4773 = vadd.f32 0.0, %v4772
      %v4774 = vpop.f32.mrf.mxu0
      %v4775 = vadd.f32 0.0, %v4774
      %4776 = vmatmul.bf16.gmra.mxu0 %v4708
      %v4777 = vpop.f32.mrf.mxu0
      %v4778 = vadd.f32 0.0, %v4777
      %v4779 = vpop.f32.mrf.mxu0
      %v4780 = vadd.f32 0.0, %v4779
      %4781 = vmatmul.bf16.gmra.mxu0 %v4711
      %v4782 = vpop.f32.mrf.mxu0
      %v4783 = vadd.f32 0.0, %v4782
      %v4784 = vpop.f32.mrf.mxu0
      %v4785 = vadd.f32 0.0, %v4784
      %4786 = vmatmul.bf16.gmra.mxu0 %v4714
      %v4787 = vpop.f32.mrf.mxu0
      %v4788 = vadd.f32 0.0, %v4787
      %v4789 = vpop.f32.mrf.mxu0
      %v4790 = vadd.f32 0.0, %v4789
      %4791 = vmatmul.bf16.gmra.mxu0 %v4717
      %v4792 = vpop.f32.mrf.mxu0
      %v4793 = vadd.f32 0.0, %v4792
      %v4794 = vpop.f32.mrf.mxu0
      %v4795 = vadd.f32 0.0, %v4794
      %4796 = vmatmul.bf16.gmra.mxu0 %v4720
      %v4797 = vpop.f32.mrf.mxu0
      %v4798 = vadd.f32 0.0, %v4797
      %v4799 = vpop.f32.mrf.mxu0
      %v4800 = vadd.f32 0.0, %v4799
      %4801 = vmatmul.bf16.gmra.mxu0 %v4723
      %v4802 = vpop.f32.mrf.mxu0
      %v4803 = vadd.f32 0.0, %v4802
      %v4804 = vpop.f32.mrf.mxu0
      %v4805 = vadd.f32 0.0, %v4804
      %4806 = vmatmul.bf16.gmra.mxu0 %v4726
      %v4807 = vpop.f32.mrf.mxu0
      %v4808 = vadd.f32 0.0, %v4807
      %v4809 = vpop.f32.mrf.mxu0
      %v4810 = vadd.f32 0.0, %v4809
      %4811 = vmatmul.bf16.gmra.mxu0 %v4729
      %v4812 = vpop.f32.mrf.mxu0
      %v4813 = vadd.f32 0.0, %v4812
      %v4814 = vpop.f32.mrf.mxu0
      %v4815 = vadd.f32 0.0, %v4814
      %4816 = vmatmul.bf16.gmra.mxu0 %v4732
      %v4817 = vpop.f32.mrf.mxu0
      %v4818 = vadd.f32 0.0, %v4817
      %v4819 = vpop.f32.mrf.mxu0
      %v4820 = vadd.f32 0.0, %v4819
      %4821 = vmatmul.bf16.gmra.mxu0 %v4735
      %v4822 = vpop.f32.mrf.mxu0
      %v4823 = vadd.f32 0.0, %v4822
      %v4824 = vpop.f32.mrf.mxu0
      %v4825 = vadd.f32 0.0, %v4824
      %4826 = vmatmul.bf16.gmra.mxu0 %v4738
      %v4827 = vpop.f32.mrf.mxu0
      %v4828 = vadd.f32 0.0, %v4827
      %v4829 = vpop.f32.mrf.mxu0
      %v4830 = vadd.f32 0.0, %v4829
      %4831 = vdwg.mxu0
      %v4832 = vld [vmem:[#allocation2] sm:$0xff]
      %v4833 = vld [vmem:[#allocation2 + $0x8] sm:$0xff]
      %v4834 = vld [vmem:[#allocation2 + $0x10] sm:$0xff]
      %v4835 = vld [vmem:[#allocation2 + $0x18] sm:$0xff]
      %v4836 = vld [vmem:[#allocation2 + $0x20] sm:$0xff]
      %v4837 = vld [vmem:[#allocation2 + $0x28] sm:$0xff]
      %v4838 = vld [vmem:[#allocation2 + $0x30] sm:$0xff]
      %v4839 = vld [vmem:[#allocation2 + $0x38] sm:$0xff]
      %v4840 = vld [vmem:[#allocation2 + $0x40] sm:$0xff]
      %v4841 = vld [vmem:[#allocation2 + $0x48] sm:$0xff]
      %v4842 = vld [vmem:[#allocation2 + $0x50] sm:$0xff]
      %v4843 = vld [vmem:[#allocation2 + $0x58] sm:$0xff]
      %v4844 = vld [vmem:[#allocation2 + $0x60] sm:$0xff]
      %v4845 = vld [vmem:[#allocation2 + $0x68] sm:$0xff]
      %v4846 = vld [vmem:[#allocation2 + $0x70] sm:$0xff]
      %v4847 = vld [vmem:[#allocation2 + $0x78] sm:$0xff]
      %v4848 = vld [vmem:[#allocation2 + $0x80] sm:$0xff]
      %v4849 = vld [vmem:[#allocation2 + $0x88] sm:$0xff]
      %v4850 = vld [vmem:[#allocation2 + $0x90] sm:$0xff]
      %v4851 = vld [vmem:[#allocation2 + $0x98] sm:$0xff]
      %v4852 = vld [vmem:[#allocation2 + $0xa0] sm:$0xff]
      %v4853 = vld [vmem:[#allocation2 + $0xa8] sm:$0xff]
      %v4854 = vld [vmem:[#allocation2 + $0xb0] sm:$0xff]
      %v4855 = vld [vmem:[#allocation2 + $0xb8] sm:$0xff]
      %v4856 = vld [vmem:[#allocation2 + $0xc0] sm:$0xff]
      %v4857 = vld [vmem:[#allocation2 + $0xc8] sm:$0xff]
      %v4858 = vld [vmem:[#allocation2 + $0xd0] sm:$0xff]
      %v4859 = vld [vmem:[#allocation2 + $0xd8] sm:$0xff]
      %v4860 = vld [vmem:[#allocation2 + $0xe0] sm:$0xff]
      %v4861 = vld [vmem:[#allocation2 + $0xe8] sm:$0xff]
      %v4862 = vld [vmem:[#allocation2 + $0xf0] sm:$0xff]
      %v4863 = vld [vmem:[#allocation2 + $0xf8] sm:$0xff]
      %v4864 = vadd.f32 %v4832, %v4753
      %v4865 = vadd.f32 %v4833, %v4755
      %v4866 = vadd.f32 %v4834, %v4758
      %v4867 = vadd.f32 %v4835, %v4760
      %v4868 = vadd.f32 %v4836, %v4763
      %v4869 = vadd.f32 %v4837, %v4765
      %v4870 = vadd.f32 %v4838, %v4768
      %v4871 = vadd.f32 %v4839, %v4770
      %v4872 = vadd.f32 %v4840, %v4773
      %v4873 = vadd.f32 %v4841, %v4775
      %v4874 = vadd.f32 %v4842, %v4778
      %v4875 = vadd.f32 %v4843, %v4780
      %v4876 = vadd.f32 %v4844, %v4783
      %v4877 = vadd.f32 %v4845, %v4785
      %v4878 = vadd.f32 %v4846, %v4788
      %v4879 = vadd.f32 %v4847, %v4790
      %v4880 = vadd.f32 %v4848, %v4793
      %v4881 = vadd.f32 %v4849, %v4795
      %v4882 = vadd.f32 %v4850, %v4798
      %v4883 = vadd.f32 %v4851, %v4800
      %v4884 = vadd.f32 %v4852, %v4803
      %v4885 = vadd.f32 %v4853, %v4805
      %v4886 = vadd.f32 %v4854, %v4808
      %v4887 = vadd.f32 %v4855, %v4810
      %v4888 = vadd.f32 %v4856, %v4813
      %v4889 = vadd.f32 %v4857, %v4815
      %v4890 = vadd.f32 %v4858, %v4818
      %v4891 = vadd.f32 %v4859, %v4820
      %v4892 = vadd.f32 %v4860, %v4823
      %v4893 = vadd.f32 %v4861, %v4825
      %v4894 = vadd.f32 %v4862, %v4828
      %v4895 = vadd.f32 %v4863, %v4830
      %4896 = vst.msk [vmem:[#allocation2] sm:$0xff] %vm551, %v4864
      %4897 = vst.msk [vmem:[#allocation2 + $0x8] sm:$0xff] %vm551, %v4865
      %4898 = vst.msk [vmem:[#allocation2 + $0x10] sm:$0xff] %vm551, %v4866
      %4899 = vst.msk [vmem:[#allocation2 + $0x18] sm:$0xff] %vm551, %v4867
      %4900 = vst.msk [vmem:[#allocation2 + $0x20] sm:$0xff] %vm551, %v4868
      %4901 = vst.msk [vmem:[#allocation2 + $0x28] sm:$0xff] %vm551, %v4869
      %4902 = vst.msk [vmem:[#allocation2 + $0x30] sm:$0xff] %vm551, %v4870
      %4903 = vst.msk [vmem:[#allocation2 + $0x38] sm:$0xff] %vm551, %v4871
      %4904 = vst.msk [vmem:[#allocation2 + $0x40] sm:$0xff] %vm551, %v4872
      %4905 = vst.msk [vmem:[#allocation2 + $0x48] sm:$0xff] %vm551, %v4873
      %4906 = vst.msk [vmem:[#allocation2 + $0x50] sm:$0xff] %vm551, %v4874
      %4907 = vst.msk [vmem:[#allocation2 + $0x58] sm:$0xff] %vm551, %v4875
      %4908 = vst.msk [vmem:[#allocation2 + $0x60] sm:$0xff] %vm551, %v4876
      %4909 = vst.msk [vmem:[#allocation2 + $0x68] sm:$0xff] %vm551, %v4877
      %4910 = vst.msk [vmem:[#allocation2 + $0x70] sm:$0xff] %vm551, %v4878
      %4911 = vst.msk [vmem:[#allocation2 + $0x78] sm:$0xff] %vm551, %v4879
      %4912 = vst.msk [vmem:[#allocation2 + $0x80] sm:$0xff] %vm551, %v4880
      %4913 = vst.msk [vmem:[#allocation2 + $0x88] sm:$0xff] %vm551, %v4881
      %4914 = vst.msk [vmem:[#allocation2 + $0x90] sm:$0xff] %vm551, %v4882
      %4915 = vst.msk [vmem:[#allocation2 + $0x98] sm:$0xff] %vm551, %v4883
      %4916 = vst.msk [vmem:[#allocation2 + $0xa0] sm:$0xff] %vm551, %v4884
      %4917 = vst.msk [vmem:[#allocation2 + $0xa8] sm:$0xff] %vm551, %v4885
      %4918 = vst.msk [vmem:[#allocation2 + $0xb0] sm:$0xff] %vm551, %v4886
      %4919 = vst.msk [vmem:[#allocation2 + $0xb8] sm:$0xff] %vm551, %v4887
      %4920 = vst.msk [vmem:[#allocation2 + $0xc0] sm:$0xff] %vm551, %v4888
      %4921 = vst.msk [vmem:[#allocation2 + $0xc8] sm:$0xff] %vm551, %v4889
      %4922 = vst.msk [vmem:[#allocation2 + $0xd0] sm:$0xff] %vm551, %v4890
      %4923 = vst.msk [vmem:[#allocation2 + $0xd8] sm:$0xff] %vm551, %v4891
      %4924 = vst.msk [vmem:[#allocation2 + $0xe0] sm:$0xff] %vm551, %v4892
      %4925 = vst.msk [vmem:[#allocation2 + $0xe8] sm:$0xff] %vm551, %v4893
      %4926 = vst.msk [vmem:[#allocation2 + $0xf0] sm:$0xff] %vm551, %v4894
      %4927 = vst.msk [vmem:[#allocation2 + $0xf8] sm:$0xff] %vm551, %v4895
      %v4928 = vld [vmem:[#allocation2] sm:$0xff]
      %v4929 = vld [vmem:[#allocation2 + $0x8] sm:$0xff]
      %v4930 = vld [vmem:[#allocation2 + $0x10] sm:$0xff]
      %v4931 = vld [vmem:[#allocation2 + $0x18] sm:$0xff]
      %v4932 = vld [vmem:[#allocation2 + $0x20] sm:$0xff]
      %v4933 = vld [vmem:[#allocation2 + $0x28] sm:$0xff]
      %v4934 = vld [vmem:[#allocation2 + $0x30] sm:$0xff]
      %v4935 = vld [vmem:[#allocation2 + $0x38] sm:$0xff]
      %v4936 = vld [vmem:[#allocation2 + $0x40] sm:$0xff]
      %v4937 = vld [vmem:[#allocation2 + $0x48] sm:$0xff]
      %v4938 = vld [vmem:[#allocation2 + $0x50] sm:$0xff]
      %v4939 = vld [vmem:[#allocation2 + $0x58] sm:$0xff]
      %v4940 = vld [vmem:[#allocation2 + $0x60] sm:$0xff]
      %v4941 = vld [vmem:[#allocation2 + $0x68] sm:$0xff]
      %v4942 = vld [vmem:[#allocation2 + $0x70] sm:$0xff]
      %v4943 = vld [vmem:[#allocation2 + $0x78] sm:$0xff]
      %v4944 = vld [vmem:[#allocation2 + $0x80] sm:$0xff]
      %v4945 = vld [vmem:[#allocation2 + $0x88] sm:$0xff]
      %v4946 = vld [vmem:[#allocation2 + $0x90] sm:$0xff]
      %v4947 = vld [vmem:[#allocation2 + $0x98] sm:$0xff]
      %v4948 = vld [vmem:[#allocation2 + $0xa0] sm:$0xff]
      %v4949 = vld [vmem:[#allocation2 + $0xa8] sm:$0xff]
      %v4950 = vld [vmem:[#allocation2 + $0xb0] sm:$0xff]
      %v4951 = vld [vmem:[#allocation2 + $0xb8] sm:$0xff]
      %v4952 = vld [vmem:[#allocation2 + $0xc0] sm:$0xff]
      %v4953 = vld [vmem:[#allocation2 + $0xc8] sm:$0xff]
      %v4954 = vld [vmem:[#allocation2 + $0xd0] sm:$0xff]
      %v4955 = vld [vmem:[#allocation2 + $0xd8] sm:$0xff]
      %v4956 = vld [vmem:[#allocation2 + $0xe0] sm:$0xff]
      %v4957 = vld [vmem:[#allocation2 + $0xe8] sm:$0xff]
      %v4958 = vld [vmem:[#allocation2 + $0xf0] sm:$0xff]
      %v4959 = vld [vmem:[#allocation2 + $0xf8] sm:$0xff]
      %v4960 = vld [vmem:[%s278] sm:$0x1]
      %v4962 = vperm.slane %v4960, 0
      %v4964 = vmul.f32 %v4928, %v4962
      %v4965 = vmul.f32 %v4929, %v4962
      %v4966 = vmul.f32 %v4930, %v4962
      %v4967 = vmul.f32 %v4931, %v4962
      %v4968 = vmul.f32 %v4932, %v4962
      %v4969 = vmul.f32 %v4933, %v4962
      %v4970 = vmul.f32 %v4934, %v4962
      %v4971 = vmul.f32 %v4935, %v4962
      %v4972 = vmul.f32 %v4936, %v4962
      %v4973 = vmul.f32 %v4937, %v4962
      %v4974 = vmul.f32 %v4938, %v4962
      %v4975 = vmul.f32 %v4939, %v4962
      %v4976 = vmul.f32 %v4940, %v4962
      %v4977 = vmul.f32 %v4941, %v4962
      %v4978 = vmul.f32 %v4942, %v4962
      %v4979 = vmul.f32 %v4943, %v4962
      %v4980 = vmul.f32 %v4944, %v4962
      %v4981 = vmul.f32 %v4945, %v4962
      %v4982 = vmul.f32 %v4946, %v4962
      %v4983 = vmul.f32 %v4947, %v4962
      %v4984 = vmul.f32 %v4948, %v4962
      %v4985 = vmul.f32 %v4949, %v4962
      %v4986 = vmul.f32 %v4950, %v4962
      %v4987 = vmul.f32 %v4951, %v4962
      %v4988 = vmul.f32 %v4952, %v4962
      %v4989 = vmul.f32 %v4953, %v4962
      %v4990 = vmul.f32 %v4954, %v4962
      %v4991 = vmul.f32 %v4955, %v4962
      %v4992 = vmul.f32 %v4956, %v4962
      %v4993 = vmul.f32 %v4957, %v4962
      %v4994 = vmul.f32 %v4958, %v4962
      %v4995 = vmul.f32 %v4959, %v4962
      %v4996 = vld [vmem:[%s281] sm:$0x1]
      %v4998 = vperm.slane %v4996, 0
      %v5000 = vadd.f32 %v4964, %v4998
      %v5001 = vadd.f32 %v4965, %v4998
      %v5002 = vadd.f32 %v4966, %v4998
      %v5003 = vadd.f32 %v4967, %v4998
      %v5004 = vadd.f32 %v4968, %v4998
      %v5005 = vadd.f32 %v4969, %v4998
      %v5006 = vadd.f32 %v4970, %v4998
      %v5007 = vadd.f32 %v4971, %v4998
      %v5008 = vadd.f32 %v4972, %v4998
      %v5009 = vadd.f32 %v4973, %v4998
      %v5010 = vadd.f32 %v4974, %v4998
      %v5011 = vadd.f32 %v4975, %v4998
      %v5012 = vadd.f32 %v4976, %v4998
      %v5013 = vadd.f32 %v4977, %v4998
      %v5014 = vadd.f32 %v4978, %v4998
      %v5015 = vadd.f32 %v4979, %v4998
      %v5016 = vadd.f32 %v4980, %v4998
      %v5017 = vadd.f32 %v4981, %v4998
      %v5018 = vadd.f32 %v4982, %v4998
      %v5019 = vadd.f32 %v4983, %v4998
      %v5020 = vadd.f32 %v4984, %v4998
      %v5021 = vadd.f32 %v4985, %v4998
      %v5022 = vadd.f32 %v4986, %v4998
      %v5023 = vadd.f32 %v4987, %v4998
      %v5024 = vadd.f32 %v4988, %v4998
      %v5025 = vadd.f32 %v4989, %v4998
      %v5026 = vadd.f32 %v4990, %v4998
      %v5027 = vadd.f32 %v4991, %v4998
      %v5028 = vadd.f32 %v4992, %v4998
      %v5029 = vadd.f32 %v4993, %v4998
      %v5030 = vadd.f32 %v4994, %v4998
      %v5031 = vadd.f32 %v4995, %v4998
      %vm5032 = vcmp.ge.f32.partialorder %v5000, 0.0
      %vm5033 = vcmp.ge.f32.partialorder %v5001, 0.0
      %vm5034 = vcmp.ge.f32.partialorder %v5002, 0.0
      %vm5035 = vcmp.ge.f32.partialorder %v5003, 0.0
      %vm5036 = vcmp.ge.f32.partialorder %v5004, 0.0
      %vm5037 = vcmp.ge.f32.partialorder %v5005, 0.0
      %vm5038 = vcmp.ge.f32.partialorder %v5006, 0.0
      %vm5039 = vcmp.ge.f32.partialorder %v5007, 0.0
      %vm5040 = vcmp.ge.f32.partialorder %v5008, 0.0
      %vm5041 = vcmp.ge.f32.partialorder %v5009, 0.0
      %vm5042 = vcmp.ge.f32.partialorder %v5010, 0.0
      %vm5043 = vcmp.ge.f32.partialorder %v5011, 0.0
      %vm5044 = vcmp.ge.f32.partialorder %v5012, 0.0
      %vm5045 = vcmp.ge.f32.partialorder %v5013, 0.0
      %vm5046 = vcmp.ge.f32.partialorder %v5014, 0.0
      %vm5047 = vcmp.ge.f32.partialorder %v5015, 0.0
      %vm5048 = vcmp.ge.f32.partialorder %v5016, 0.0
      %vm5049 = vcmp.ge.f32.partialorder %v5017, 0.0
      %vm5050 = vcmp.ge.f32.partialorder %v5018, 0.0
      %vm5051 = vcmp.ge.f32.partialorder %v5019, 0.0
      %vm5052 = vcmp.ge.f32.partialorder %v5020, 0.0
      %vm5053 = vcmp.ge.f32.partialorder %v5021, 0.0
      %vm5054 = vcmp.ge.f32.partialorder %v5022, 0.0
      %vm5055 = vcmp.ge.f32.partialorder %v5023, 0.0
      %vm5056 = vcmp.ge.f32.partialorder %v5024, 0.0
      %vm5057 = vcmp.ge.f32.partialorder %v5025, 0.0
      %vm5058 = vcmp.ge.f32.partialorder %v5026, 0.0
      %vm5059 = vcmp.ge.f32.partialorder %v5027, 0.0
      %vm5060 = vcmp.ge.f32.partialorder %v5028, 0.0
      %vm5061 = vcmp.ge.f32.partialorder %v5029, 0.0
      %vm5062 = vcmp.ge.f32.partialorder %v5030, 0.0
      %vm5063 = vcmp.ge.f32.partialorder %v5031, 0.0
      %v5064 = vmul.f32 %v5000, 0.1
      %v5065 = vmul.f32 %v5001, 0.1
      %v5066 = vmul.f32 %v5002, 0.1
      %v5067 = vmul.f32 %v5003, 0.1
      %v5068 = vmul.f32 %v5004, 0.1
      %v5069 = vmul.f32 %v5005, 0.1
      %v5070 = vmul.f32 %v5006, 0.1
      %v5071 = vmul.f32 %v5007, 0.1
      %v5072 = vmul.f32 %v5008, 0.1
      %v5073 = vmul.f32 %v5009, 0.1
      %v5074 = vmul.f32 %v5010, 0.1
      %v5075 = vmul.f32 %v5011, 0.1
      %v5076 = vmul.f32 %v5012, 0.1
      %v5077 = vmul.f32 %v5013, 0.1
      %v5078 = vmul.f32 %v5014, 0.1
      %v5079 = vmul.f32 %v5015, 0.1
      %v5080 = vmul.f32 %v5016, 0.1
      %v5081 = vmul.f32 %v5017, 0.1
      %v5082 = vmul.f32 %v5018, 0.1
      %v5083 = vmul.f32 %v5019, 0.1
      %v5084 = vmul.f32 %v5020, 0.1
      %v5085 = vmul.f32 %v5021, 0.1
      %v5086 = vmul.f32 %v5022, 0.1
      %v5087 = vmul.f32 %v5023, 0.1
      %v5088 = vmul.f32 %v5024, 0.1
      %v5089 = vmul.f32 %v5025, 0.1
      %v5090 = vmul.f32 %v5026, 0.1
      %v5091 = vmul.f32 %v5027, 0.1
      %v5092 = vmul.f32 %v5028, 0.1
      %v5093 = vmul.f32 %v5029, 0.1
      %v5094 = vmul.f32 %v5030, 0.1
      %v5095 = vmul.f32 %v5031, 0.1
      %v5096 = vsel %vm5032, %v5000, %v5064
      %v5097 = vsel %vm5033, %v5001, %v5065
      %v5098 = vsel %vm5034, %v5002, %v5066
      %v5099 = vsel %vm5035, %v5003, %v5067
      %v5100 = vsel %vm5036, %v5004, %v5068
      %v5101 = vsel %vm5037, %v5005, %v5069
      %v5102 = vsel %vm5038, %v5006, %v5070
      %v5103 = vsel %vm5039, %v5007, %v5071
      %v5104 = vsel %vm5040, %v5008, %v5072
      %v5105 = vsel %vm5041, %v5009, %v5073
      %v5106 = vsel %vm5042, %v5010, %v5074
      %v5107 = vsel %vm5043, %v5011, %v5075
      %v5108 = vsel %vm5044, %v5012, %v5076
      %v5109 = vsel %vm5045, %v5013, %v5077
      %v5110 = vsel %vm5046, %v5014, %v5078
      %v5111 = vsel %vm5047, %v5015, %v5079
      %v5112 = vsel %vm5048, %v5016, %v5080
      %v5113 = vsel %vm5049, %v5017, %v5081
      %v5114 = vsel %vm5050, %v5018, %v5082
      %v5115 = vsel %vm5051, %v5019, %v5083
      %v5116 = vsel %vm5052, %v5020, %v5084
      %v5117 = vsel %vm5053, %v5021, %v5085
      %v5118 = vsel %vm5054, %v5022, %v5086
      %v5119 = vsel %vm5055, %v5023, %v5087
      %v5120 = vsel %vm5056, %v5024, %v5088
      %v5121 = vsel %vm5057, %v5025, %v5089
      %v5122 = vsel %vm5058, %v5026, %v5090
      %v5123 = vsel %vm5059, %v5027, %v5091
      %v5124 = vsel %vm5060, %v5028, %v5092
      %v5125 = vsel %vm5061, %v5029, %v5093
      %v5126 = vsel %vm5062, %v5030, %v5094
      %v5127 = vsel %vm5063, %v5031, %v5095
      %v5128 = vpack.c.bf16 %v5096, %v5096
      %v5129 = vpack.c.bf16 %v5097, %v5097
      %v5130 = vpack.c.bf16 %v5098, %v5098
      %v5131 = vpack.c.bf16 %v5099, %v5099
      %v5132 = vpack.c.bf16 %v5100, %v5100
      %v5133 = vpack.c.bf16 %v5101, %v5101
      %v5134 = vpack.c.bf16 %v5102, %v5102
      %v5135 = vpack.c.bf16 %v5103, %v5103
      %v5136 = vpack.c.bf16 %v5104, %v5104
      %v5137 = vpack.c.bf16 %v5105, %v5105
      %v5138 = vpack.c.bf16 %v5106, %v5106
      %v5139 = vpack.c.bf16 %v5107, %v5107
      %v5140 = vpack.c.bf16 %v5108, %v5108
      %v5141 = vpack.c.bf16 %v5109, %v5109
      %v5142 = vpack.c.bf16 %v5110, %v5110
      %v5143 = vpack.c.bf16 %v5111, %v5111
      %v5144 = vpack.c.bf16 %v5112, %v5112
      %v5145 = vpack.c.bf16 %v5113, %v5113
      %v5146 = vpack.c.bf16 %v5114, %v5114
      %v5147 = vpack.c.bf16 %v5115, %v5115
      %v5148 = vpack.c.bf16 %v5116, %v5116
      %v5149 = vpack.c.bf16 %v5117, %v5117
      %v5150 = vpack.c.bf16 %v5118, %v5118
      %v5151 = vpack.c.bf16 %v5119, %v5119
      %v5152 = vpack.c.bf16 %v5120, %v5120
      %v5153 = vpack.c.bf16 %v5121, %v5121
      %v5154 = vpack.c.bf16 %v5122, %v5122
      %v5155 = vpack.c.bf16 %v5123, %v5123
      %v5156 = vpack.c.bf16 %v5124, %v5124
      %v5157 = vpack.c.bf16 %v5125, %v5125
      %v5158 = vpack.c.bf16 %v5126, %v5126
      %v5159 = vpack.c.bf16 %v5127, %v5127
      %vm5160 = vcmask 125952
      %5161 = vst.msk [vmem:[%s293] sm:$0xf] %vm5160, %v5128
      %5162 = vst.msk [vmem:[%s293 + $0x4] sm:$0xf] %vm5160, %v5129
      %5163 = vst.msk [vmem:[%s293 + $0x8] sm:$0xf] %vm5160, %v5130
      %5164 = vst.msk [vmem:[%s293 + $0xc] sm:$0xf] %vm5160, %v5131
      %5165 = vst.msk [vmem:[%s293 + $0x10] sm:$0xf] %vm5160, %v5132
      %5166 = vst.msk [vmem:[%s293 + $0x14] sm:$0xf] %vm5160, %v5133
      %5167 = vst.msk [vmem:[%s293 + $0x18] sm:$0xf] %vm5160, %v5134
      %5168 = vst.msk [vmem:[%s293 + $0x1c] sm:$0xf] %vm5160, %v5135
      %5169 = vst.msk [vmem:[%s293 + $0x20] sm:$0xf] %vm5160, %v5136
      %5170 = vst.msk [vmem:[%s293 + $0x24] sm:$0xf] %vm5160, %v5137
      %5171 = vst.msk [vmem:[%s293 + $0x28] sm:$0xf] %vm5160, %v5138
      %5172 = vst.msk [vmem:[%s293 + $0x2c] sm:$0xf] %vm5160, %v5139
      %5173 = vst.msk [vmem:[%s293 + $0x30] sm:$0xf] %vm5160, %v5140
      %5174 = vst.msk [vmem:[%s293 + $0x34] sm:$0xf] %vm5160, %v5141
      %5175 = vst.msk [vmem:[%s293 + $0x38] sm:$0xf] %vm5160, %v5142
      %5176 = vst.msk [vmem:[%s293 + $0x3c] sm:$0xf] %vm5160, %v5143
      %5177 = vst.msk [vmem:[%s293 + $0x40] sm:$0xf] %vm5160, %v5144
      %5178 = vst.msk [vmem:[%s293 + $0x44] sm:$0xf] %vm5160, %v5145
      %5179 = vst.msk [vmem:[%s293 + $0x48] sm:$0xf] %vm5160, %v5146
      %5180 = vst.msk [vmem:[%s293 + $0x4c] sm:$0xf] %vm5160, %v5147
      %5181 = vst.msk [vmem:[%s293 + $0x50] sm:$0xf] %vm5160, %v5148
      %5182 = vst.msk [vmem:[%s293 + $0x54] sm:$0xf] %vm5160, %v5149
      %5183 = vst.msk [vmem:[%s293 + $0x58] sm:$0xf] %vm5160, %v5150
      %5184 = vst.msk [vmem:[%s293 + $0x5c] sm:$0xf] %vm5160, %v5151
      %5185 = vst.msk [vmem:[%s293 + $0x60] sm:$0xf] %vm5160, %v5152
      %5186 = vst.msk [vmem:[%s293 + $0x64] sm:$0xf] %vm5160, %v5153
      %5187 = vst.msk [vmem:[%s293 + $0x68] sm:$0xf] %vm5160, %v5154
      %5188 = vst.msk [vmem:[%s293 + $0x6c] sm:$0xf] %vm5160, %v5155
      %5189 = vst.msk [vmem:[%s293 + $0x70] sm:$0xf] %vm5160, %v5156
      %5190 = vst.msk [vmem:[%s293 + $0x74] sm:$0xf] %vm5160, %v5157
      %5191 = vst.msk [vmem:[%s293 + $0x78] sm:$0xf] %vm5160, %v5158
      %5192 = vst.msk [vmem:[%s293 + $0x7c] sm:$0xf] %vm5160, %v5159
      %s5193 = smul.u32 32, %s22
      %p5194 = scmp.lt.s32.totalorder %s20, 1
      %s5195 = scalar_select %p5194, %s20, 1
      %p5196 = scmp.lt.s32.totalorder %s5193, 31
      %s5197 = scalar_select %p5196, %s5193, 31
      %p5198 = scmp.lt.s32.totalorder %s21, 0
      %s5199 = scalar_select %p5198, %s21, 0
      %s5200 = sadd.s32 %s5199, %s5197
      %s5201 = smul.addr %s5195, 32
      %s5202 = sadd.s32 %s5200, %s5201
      %s5203 = smul.addr %s5202, 4
      %s5204 = scalar_lea.vmem %s4, %s5203
      // Predicated region
      $region37: #{tpu_custom_call.1} parent=35 // pred_check
        %p5205 = pneg %p162
      $region38: #{tpu_custom_call.1} parent=35 // pred_check_branch
        %5207 = sbr.rel (%p5205) target = $region40
      $region39: #{tpu_custom_call.1} parent=35 // pred_region
        %s5208 = smul.u32 32, %s22
      $region40: #{tpu_custom_call.1} parent=35 // pred_fallthru
        _
    $region36: #{tpu_custom_call.1} parent=5 // pred_fallthru
      _
    %p5209 = scmp.le.s32.totalorder 2, %s10
    // Predicated region
    $region41: #{tpu_custom_call.1} parent=5 // pred_check
      %p5210 = pneg %p5209
    $region42: #{tpu_custom_call.1} parent=5 // pred_check_branch
      %5212 = sbr.rel (%p5210) target = $region44
    $region43: #{tpu_custom_call.1} parent=5 // pred_region
      %s5213 = ssub.s32 %s10, 2
      // Predicated region
      $region45: #{tpu_custom_call.1} parent=43 // pred_check
        %p5214 = pneg %p168
      $region46: #{tpu_custom_call.1} parent=43 // pred_check_branch
        %5216 = sbr.rel (%p5214) target = $region48
      $region47: #{tpu_custom_call.1} parent=43 // pred_region
        %s5217 = smul.u32 32, %s25
        %p5218 = scmp.lt.s32.totalorder %s23, 1
        %s5219 = scalar_select %p5218, %s23, 1
        %p5220 = scmp.lt.s32.totalorder %s5217, 31
        %s5221 = scalar_select %p5220, %s5217, 31
        %p5222 = scmp.lt.s32.totalorder %s24, 0
        %s5223 = scalar_select %p5222, %s24, 0
        %s5224 = sadd.s32 %s5223, %s5221
        %s5225 = smul.addr %s5219, 32
        %s5226 = sadd.s32 %s5224, %s5225
        %s5227 = smul.addr %s5226, 4
        %s5228 = scalar_lea.vmem %s4, %s5227
      $region48: #{tpu_custom_call.1} parent=43 // pred_fallthru
        _
    $region44: #{tpu_custom_call.1} parent=5 // pred_fallthru
      _
  $region6: #{tpu_custom_call.1} parent=0 // loop_footer
    %s14 = sadd.s32 1, %s10
  $region7: #{tpu_custom_call.1} parent=0 // loop_footer_branch
    %9 = sbr.rel target = $region3
  $region8: #{tpu_custom_call.1} parent=0 // loop_exit
    _

</llo_original>
